<compile_context>
chip_gen: v7x
topology: tpu7x:2x2x1
jax: 0.10.0
libtpu: 0.0.40
codegen_flags: <defaults>
</compile_context>

<pallas_src>
import functools

import jax
import jax.numpy as jnp
from jax.experimental import pallas as pl
from jax.experimental.pallas import tpu as pltpu

_EPS = 1e-5  # PyTorch InstanceNorm2d default (affine=False, eps=1e-5)


def _fused_residual_block_kernel(x_ref, w1_ref, w2_ref, o_ref, pad_ref,
                                 *, H, W, C, mxu_dtype):
    """One image per grid step: out = x + IN(conv2(pad(ReLU(IN(conv1(pad(x))))))).

    x_ref:   (1, H, W, C)   f32 input tile (re-read only for the residual add)
    w*_ref:  (3, 3C, C)     folded conv weights, index (dh, dw*C + cin, cout), bf16
    o_ref:   (1, H, W, C)   f32 output tile
    pad_ref: (H+2, W+2, C)  bf16 VMEM scratch, reused by both convs
    """
    HW = H * W

    def fill_reflect_pad(img):  # img: (H, W, C) already in mxu_dtype
        pad_ref[1:H + 1, 1:W + 1, :] = img
        pad_ref[0:1, 1:W + 1, :] = img[1:2]                   # top row    = row 1
        pad_ref[H + 1:H + 2, 1:W + 1, :] = img[H - 2:H - 1]   # bottom row = row H-2
        pad_ref[:, 0:1, :] = pad_ref[:, 2:3, :]               # left col   = col 1
        pad_ref[:, W + 1:W + 2, :] = pad_ref[:, W - 1:W, :]   # right col  = col W-2

    def conv3x3_instnorm(w_ref):
        # 3 MXU dots (K = 3C): per dh, lane-concatenate the three width taps
        # into one (HW, 3C) bf16 patch matching the (dw, cin) folded-K order.
        acc = None
        for dh in range(3):
            blk = pad_ref[dh:dh + H]                          # (H, W+2, C) bf16
            patch = jnp.concatenate(
                [blk[:, 0:W], blk[:, 1:W + 1], blk[:, 2:W + 2]],
                axis=-1).reshape(HW, 3 * C)                   # (HW, 3C) bf16
            d = jnp.dot(patch, w_ref[dh], preferred_element_type=jnp.float32)
            acc = d if acc is None else acc + d               # f32 accumulation
        # One-pass InstanceNorm stats (f32): var = E[x^2] - mean^2, clamped.
        inv_hw = 1.0 / float(HW)
        mean = jnp.sum(acc, axis=0, keepdims=True) * inv_hw
        ex2 = jnp.sum(acc * acc, axis=0, keepdims=True) * inv_hw
        var = jnp.maximum(ex2 - mean * mean, 0.0)
        return (acc - mean) * jax.lax.rsqrt(var + _EPS)       # (HW, C) f32

    # --- conv1 + IN + ReLU (scratch filled straight from x_ref; the f32
    # image is not kept live across the two convs) ---------------------------
    fill_reflect_pad(x_ref[0].astype(mxu_dtype))
    h = jnp.maximum(conv3x3_instnorm(w1_ref), 0.0)            # (HW, C) f32

    # --- conv2 + IN, then the residual add (x re-read from VMEM only here) --
    fill_reflect_pad(h.reshape(H, W, C).astype(mxu_dtype))
    y = conv3x3_instnorm(w2_ref) + x_ref[0].reshape(HW, C)
    o_ref[...] = y.reshape(1, H, W, C).astype(o_ref.dtype)


def _pick_vmem_limit_bytes(default_bytes=48 * 1024 * 1024):
    """~3/4 of physical VMEM per generation (v5e/v6e: 128 MiB -> 96 MiB,
    v7x: 64 MiB -> 48 MiB); conservative fallback if the query fails."""
    try:
        cap = int(pltpu.get_tpu_info().vmem_capacity_bytes)
    except Exception:
        return default_bytes
    if cap <= 0:
        return default_bytes
    return min(cap * 3 // 4, 100 * 1024 * 1024)


def residual_block_forward(x, w1, b1, w2, b2, *, mxu_dtype=jnp.bfloat16,
                           data_format="NCHW"):
    """ResidualBlock forward.

    x: (N, C, H, W) if data_format == "NCHW" (PyTorch parity), else (N, H, W, C)
       to skip the extra NCHW<->NHWC HBM round trips entirely.
    w1, w2: (3, 3, C, C) conv weights in HWIO layout; b1, b2: (C,).
    Returns the result in the same data_format as the input.

    b1/b2 are accepted for API parity with nn.Conv2d but unused: with
    InstanceNorm2d(affine=False) right after each conv, the bias is cancelled
    exactly by the per-channel spatial mean subtraction.
    """
    del b1, b2
    if data_format == "NCHW":
        x_nhwc = jnp.transpose(x, (0, 2, 3, 1))
    elif data_format == "NHWC":
        x_nhwc = x
    else:
        raise ValueError(f"unsupported data_format: {data_format}")
    x_nhwc = x_nhwc.astype(jnp.float32)
    N, H, W, C = x_nhwc.shape
    assert H >= 2 and W >= 2, "reflection pad of 1 needs H, W >= 2"

    # Fold the width taps into the MXU contraction dim: (3, 3, C, C) HWIO ->
    # (3, 3C, C) bf16, K index = dw*C + cin, matching the in-kernel patches.
    w1_f = w1.astype(mxu_dtype).reshape(3, 3 * C, C)
    w2_f = w2.astype(mxu_dtype).reshape(3, 3 * C, C)

    kernel = functools.partial(_fused_residual_block_kernel,
                               H=H, W=W, C=C, mxu_dtype=mxu_dtype)
    out = pl.pallas_call(
        kernel,
        out_shape=jax.ShapeDtypeStruct((N, H, W, C), jnp.float32),
        grid_spec=pltpu.PrefetchScalarGridSpec(
            num_scalar_prefetch=0,
            grid=(N,),
            in_specs=[
                pl.BlockSpec((1, H, W, C), lambda b: (b, 0, 0, 0)),   # x
                # Constant index maps -> folded weights stay VMEM-resident
                # (no re-DMA across grid steps).
                pl.BlockSpec((3, 3 * C, C), lambda b: (0, 0, 0)),     # w1 folded
                pl.BlockSpec((3, 3 * C, C), lambda b: (0, 0, 0)),     # w2 folded
            ],
            out_specs=pl.BlockSpec((1, H, W, C), lambda b: (b, 0, 0, 0)),
            scratch_shapes=[pltpu.VMEM((H + 2, W + 2, C), mxu_dtype)],
        ),
        compiler_params=pltpu.CompilerParams(
            # No-op on v5e/v6e (single TensorCore per chip); on v7x it shards
            # whole images across the two cores, which only helps for N >= 2.
            dimension_semantics=("parallel",),
            vmem_limit_bytes=_pick_vmem_limit_bytes(),
        ),
    )(x_nhwc, w1_f, w2_f)

    if data_format == "NCHW":
        return jnp.transpose(out, (0, 3, 1, 2))
    return out


def _reference_forward(x_nchw, w1, b1, w2, b2, *, conv_dtype=jnp.float32):
    """Pure-JAX/XLA reference (keeps the conv bias; it must cancel under IN)."""
    x = jnp.transpose(x_nchw, (0, 2, 3, 1)).astype(jnp.float32)

    def conv_in(t, w, b):
        tp = jnp.pad(t, ((0, 0), (1, 1), (1, 1), (0, 0)), mode="reflect")
        y = jax.lax.conv_general_dilated(
            tp.astype(conv_dtype), w.astype(conv_dtype), (1, 1), "VALID",
            dimension_numbers=("NHWC", "HWIO", "NHWC"),
            preferred_element_type=jnp.float32,
        ) + b.reshape(1, 1, 1, -1)
        mean = jnp.mean(y, axis=(1, 2), keepdims=True)
        var = jnp.mean(jnp.square(y - mean), axis=(1, 2), keepdims=True)
        return (y - mean) * jax.lax.rsqrt(var + _EPS)

    h = jax.nn.relu(conv_in(x, w1, b1))
    out = x + conv_in(h, w2, b2)
    return jnp.transpose(out, (0, 3, 1, 2))


if __name__ == "__main__":
    key = jax.random.PRNGKey(0)
    N, C, H, W = 2, 4, 16, 16  # in_features = C

    k_x, k_w1, k_b1, k_w2, k_b2 = jax.random.split(key, 5)
    x = jax.random.normal(k_x, (N, C, H, W), dtype=jnp.float32)
    # Conv2d(in_features, in_features, 3) init, weights stored directly in HWIO.
    fan_in = C * 3 * 3
    bound = 1.0 / (fan_in ** 0.5)
    w1 = jax.random.uniform(k_w1, (3, 3, C, C), jnp.float32, -bound, bound)
    b1 = jax.random.uniform(k_b1, (C,), jnp.float32, -bound, bound)
    w2 = jax.random.uniform(k_w2, (3, 3, C, C), jnp.float32, -bound, bound)
    b2 = jax.random.uniform(k_b2, (C,), jnp.float32, -bound, bound)

    out = jax.block_until_ready(residual_block_forward(x, w1, b1, w2, b2))
    assert out.shape == (N, C, H, W)

    # Structural correctness vs a precision-matched (bf16-fed conv) reference.
    ref_bf16 = jax.block_until_ready(
        _reference_forward(x, w1, b1, w2, b2, conv_dtype=jnp.bfloat16))
    assert jnp.allclose(out, ref_bf16, atol=1e-2, rtol=1e-2), \
        "mismatch vs precision-matched reference"

    # Deviation bound vs the full-f32 reference (bf16 is only used for MXU
    # operands; IN / ReLU / residual math stays f32 in the kernel).
    ref_f32 = jax.block_until_ready(_reference_forward(x, w1, b1, w2, b2))
    assert jnp.allclose(out, ref_f32, atol=5e-2, rtol=5e-2), \
        "mismatch vs f32 reference"

    print("KERNEL_OK")
</pallas_src>

<mosaic_0001>
module attributes {stable_mosaic.version = 11 : i64} {
  func.func @_fused_residual_block_kernel(%arg0: i32, %arg1: memref<1x16x16x4xf32, #tpu.memory_space<vmem>>, %arg2: memref<3x12x4xbf16, #tpu.memory_space<vmem>>, %arg3: memref<3x12x4xbf16, #tpu.memory_space<vmem>>, %arg4: memref<1x16x16x4xf32, #tpu.memory_space<vmem>>, %arg5: memref<18x18x4xbf16, #tpu.memory_space<vmem>>) attributes {dimension_semantics = [#tpu.dimension_semantics<parallel>], iteration_bounds = array<i64: 2>, scalar_prefetch = 0 : i64, scratch_operands = 1 : i64, tpu.core_type = #tpu.core_type<tc>, window_params = [{transform_indices = @transform_0, window_bounds = array<i64: 1, 16, 16, 4>}, {pipeline_mode = #tpu.pipeline_mode<synchronous>, transform_indices = @transform_1, window_bounds = array<i64: 3, 12, 4>}, {pipeline_mode = #tpu.pipeline_mode<synchronous>, transform_indices = @transform_2, window_bounds = array<i64: 3, 12, 4>}, {transform_indices = @transform_3, window_bounds = array<i64: 1, 16, 16, 4>}]} {
    %c0 = arith.constant 0 : index
    %c0_0 = arith.constant 0 : index
    %c0_1 = arith.constant 0 : index
    %c0_2 = arith.constant 0 : index
    %0 = vector.load %arg1[%c0, %c0_0, %c0_1, %c0_2] : memref<1x16x16x4xf32, #tpu.memory_space<vmem>>, vector<1x16x16x4xf32>
    %1 = vector.shape_cast %0 : vector<1x16x16x4xf32> to vector<16x16x4xf32>
    %2 = arith.truncf %1 : vector<16x16x4xf32> to vector<16x16x4xbf16>
    %c1 = arith.constant 1 : index
    %c1_3 = arith.constant 1 : index
    %c0_4 = arith.constant 0 : index
    %3 = vector.load %arg5[%c1, %c1_3, %c0_4] : memref<18x18x4xbf16, #tpu.memory_space<vmem>>, vector<16x16x4xbf16>
    tpu.vector_store %arg5[%c1, %c1_3, %c0_4], %2 {strides = array<i32>} : memref<18x18x4xbf16, #tpu.memory_space<vmem>>, vector<16x16x4xbf16>,
    %4 = vector.extract_strided_slice %2 {offsets = [1, 0, 0], sizes = [1, 16, 4], strides = [1, 1, 1]} : vector<16x16x4xbf16> to vector<1x16x4xbf16>
    %c0_5 = arith.constant 0 : index
    %c1_6 = arith.constant 1 : index
    %c0_7 = arith.constant 0 : index
    %5 = vector.load %arg5[%c0_5, %c1_6, %c0_7] : memref<18x18x4xbf16, #tpu.memory_space<vmem>>, vector<1x16x4xbf16>
    tpu.vector_store %arg5[%c0_5, %c1_6, %c0_7], %4 {strides = array<i32>} : memref<18x18x4xbf16, #tpu.memory_space<vmem>>, vector<1x16x4xbf16>,
    %6 = vector.extract_strided_slice %2 {offsets = [14, 0, 0], sizes = [1, 16, 4], strides = [1, 1, 1]} : vector<16x16x4xbf16> to vector<1x16x4xbf16>
    %c17 = arith.constant 17 : index
    %c1_8 = arith.constant 1 : index
    %c0_9 = arith.constant 0 : index
    %7 = vector.load %arg5[%c17, %c1_8, %c0_9] : memref<18x18x4xbf16, #tpu.memory_space<vmem>>, vector<1x16x4xbf16>
    tpu.vector_store %arg5[%c17, %c1_8, %c0_9], %6 {strides = array<i32>} : memref<18x18x4xbf16, #tpu.memory_space<vmem>>, vector<1x16x4xbf16>,
    %c0_10 = arith.constant 0 : index
    %c2 = arith.constant 2 : index
    %c0_11 = arith.constant 0 : index
    %8 = vector.load %arg5[%c0_10, %c2, %c0_11] : memref<18x18x4xbf16, #tpu.memory_space<vmem>>, vector<18x1x4xbf16>
    %c0_12 = arith.constant 0 : index
    %c0_13 = arith.constant 0 : index
    %c0_14 = arith.constant 0 : index
    %9 = vector.load %arg5[%c0_12, %c0_13, %c0_14] : memref<18x18x4xbf16, #tpu.memory_space<vmem>>, vector<18x1x4xbf16>
    tpu.vector_store %arg5[%c0_12, %c0_13, %c0_14], %8 {strides = array<i32>} : memref<18x18x4xbf16, #tpu.memory_space<vmem>>, vector<18x1x4xbf16>,
    %c0_15 = arith.constant 0 : index
    %c15 = arith.constant 15 : index
    %c0_16 = arith.constant 0 : index
    %10 = vector.load %arg5[%c0_15, %c15, %c0_16] : memref<18x18x4xbf16, #tpu.memory_space<vmem>>, vector<18x1x4xbf16>
    %c0_17 = arith.constant 0 : index
    %c17_18 = arith.constant 17 : index
    %c0_19 = arith.constant 0 : index
    %11 = vector.load %arg5[%c0_17, %c17_18, %c0_19] : memref<18x18x4xbf16, #tpu.memory_space<vmem>>, vector<18x1x4xbf16>
    tpu.vector_store %arg5[%c0_17, %c17_18, %c0_19], %10 {strides = array<i32>} : memref<18x18x4xbf16, #tpu.memory_space<vmem>>, vector<18x1x4xbf16>,
    %c0_20 = arith.constant 0 : index
    %c0_21 = arith.constant 0 : index
    %c0_22 = arith.constant 0 : index
    %12 = vector.load %arg5[%c0_20, %c0_21, %c0_22] : memref<18x18x4xbf16, #tpu.memory_space<vmem>>, vector<16x18x4xbf16>
    %13 = vector.extract_strided_slice %12 {offsets = [0, 0, 0], sizes = [16, 16, 4], strides = [1, 1, 1]} : vector<16x18x4xbf16> to vector<16x16x4xbf16>
    %14 = vector.extract_strided_slice %12 {offsets = [0, 1, 0], sizes = [16, 16, 4], strides = [1, 1, 1]} : vector<16x18x4xbf16> to vector<16x16x4xbf16>
    %15 = vector.extract_strided_slice %12 {offsets = [0, 2, 0], sizes = [16, 16, 4], strides = [1, 1, 1]} : vector<16x18x4xbf16> to vector<16x16x4xbf16>
    %16 = tpu.concatenate %13, %14, %15 in 2 : vector<16x16x4xbf16>, vector<16x16x4xbf16>, vector<16x16x4xbf16> -> vector<16x16x12xbf16>
    %17 = vector.shape_cast %16 : vector<16x16x12xbf16> to vector<256x12xbf16>
    %c0_23 = arith.constant 0 : index
    %c0_24 = arith.constant 0 : index
    %c0_25 = arith.constant 0 : index
    %18 = vector.load %arg2[%c0_23, %c0_24, %c0_25] : memref<3x12x4xbf16, #tpu.memory_space<vmem>>, vector<1x12x4xbf16>
    %19 = vector.shape_cast %18 : vector<1x12x4xbf16> to vector<12x4xbf16>
    %cst = arith.constant dense<0.000000e+00> : vector<256x4xf32>
    %20 = tpu.matmul %17, %19, %cst {dimension_numbers = #tpu.dot_dimension_numbers<[1], [0], [0], [1], [0, 0, 1, 1], [], []>} : vector<256x12xbf16>, vector<12x4xbf16>, vector<256x4xf32> -> vector<256x4xf32>
    %c1_26 = arith.constant 1 : index
    %c0_27 = arith.constant 0 : index
    %c0_28 = arith.constant 0 : index
    %21 = vector.load %arg5[%c1_26, %c0_27, %c0_28] : memref<18x18x4xbf16, #tpu.memory_space<vmem>>, vector<16x18x4xbf16>
    %22 = vector.extract_strided_slice %21 {offsets = [0, 0, 0], sizes = [16, 16, 4], strides = [1, 1, 1]} : vector<16x18x4xbf16> to vector<16x16x4xbf16>
    %23 = vector.extract_strided_slice %21 {offsets = [0, 1, 0], sizes = [16, 16, 4], strides = [1, 1, 1]} : vector<16x18x4xbf16> to vector<16x16x4xbf16>
    %24 = vector.extract_strided_slice %21 {offsets = [0, 2, 0], sizes = [16, 16, 4], strides = [1, 1, 1]} : vector<16x18x4xbf16> to vector<16x16x4xbf16>
    %25 = tpu.concatenate %22, %23, %24 in 2 : vector<16x16x4xbf16>, vector<16x16x4xbf16>, vector<16x16x4xbf16> -> vector<16x16x12xbf16>
    %26 = vector.shape_cast %25 : vector<16x16x12xbf16> to vector<256x12xbf16>
    %c1_29 = arith.constant 1 : index
    %c0_30 = arith.constant 0 : index
    %c0_31 = arith.constant 0 : index
    %27 = vector.load %arg2[%c1_29, %c0_30, %c0_31] : memref<3x12x4xbf16, #tpu.memory_space<vmem>>, vector<1x12x4xbf16>
    %28 = vector.shape_cast %27 : vector<1x12x4xbf16> to vector<12x4xbf16>
    %cst_32 = arith.constant dense<0.000000e+00> : vector<256x4xf32>
    %29 = tpu.matmul %26, %28, %cst_32 {dimension_numbers = #tpu.dot_dimension_numbers<[1], [0], [0], [1], [0, 0, 1, 1], [], []>} : vector<256x12xbf16>, vector<12x4xbf16>, vector<256x4xf32> -> vector<256x4xf32>
    %30 = arith.addf %20, %29 : vector<256x4xf32>
    %c2_33 = arith.constant 2 : index
    %c0_34 = arith.constant 0 : index
    %c0_35 = arith.constant 0 : index
    %31 = vector.load %arg5[%c2_33, %c0_34, %c0_35] : memref<18x18x4xbf16, #tpu.memory_space<vmem>>, vector<16x18x4xbf16>
    %32 = vector.extract_strided_slice %31 {offsets = [0, 0, 0], sizes = [16, 16, 4], strides = [1, 1, 1]} : vector<16x18x4xbf16> to vector<16x16x4xbf16>
    %33 = vector.extract_strided_slice %31 {offsets = [0, 1, 0], sizes = [16, 16, 4], strides = [1, 1, 1]} : vector<16x18x4xbf16> to vector<16x16x4xbf16>
    %34 = vector.extract_strided_slice %31 {offsets = [0, 2, 0], sizes = [16, 16, 4], strides = [1, 1, 1]} : vector<16x18x4xbf16> to vector<16x16x4xbf16>
    %35 = tpu.concatenate %32, %33, %34 in 2 : vector<16x16x4xbf16>, vector<16x16x4xbf16>, vector<16x16x4xbf16> -> vector<16x16x12xbf16>
    %36 = vector.shape_cast %35 : vector<16x16x12xbf16> to vector<256x12xbf16>
    %c2_36 = arith.constant 2 : index
    %c0_37 = arith.constant 0 : index
    %c0_38 = arith.constant 0 : index
    %37 = vector.load %arg2[%c2_36, %c0_37, %c0_38] : memref<3x12x4xbf16, #tpu.memory_space<vmem>>, vector<1x12x4xbf16>
    %38 = vector.shape_cast %37 : vector<1x12x4xbf16> to vector<12x4xbf16>
    %cst_39 = arith.constant dense<0.000000e+00> : vector<256x4xf32>
    %39 = tpu.matmul %36, %38, %cst_39 {dimension_numbers = #tpu.dot_dimension_numbers<[1], [0], [0], [1], [0, 0, 1, 1], [], []>} : vector<256x12xbf16>, vector<12x4xbf16>, vector<256x4xf32> -> vector<256x4xf32>
    %40 = arith.addf %30, %39 : vector<256x4xf32>
    %cst_40 = arith.constant dense<0.000000e+00> : vector<4xf32>
    %41 = vector.multi_reduction <add>, %40, %cst_40 [0] : vector<256x4xf32> to vector<4xf32>
    %42 = vector.shape_cast %41 : vector<4xf32> to vector<1x4xf32>
    %cst_41 = arith.constant 3.906250e-03 : f32
    %43 = vector.broadcast %cst_41 : f32 to vector<1x4xf32>
    %44 = arith.mulf %42, %43 : vector<1x4xf32>
    %45 = arith.mulf %40, %40 : vector<256x4xf32>
    %cst_42 = arith.constant dense<0.000000e+00> : vector<4xf32>
    %46 = vector.multi_reduction <add>, %45, %cst_42 [0] : vector<256x4xf32> to vector<4xf32>
    %47 = vector.shape_cast %46 : vector<4xf32> to vector<1x4xf32>
    %cst_43 = arith.constant 3.906250e-03 : f32
    %48 = vector.broadcast %cst_43 : f32 to vector<1x4xf32>
    %49 = arith.mulf %47, %48 : vector<1x4xf32>
    %50 = arith.mulf %44, %44 : vector<1x4xf32>
    %51 = arith.subf %49, %50 : vector<1x4xf32>
    %cst_44 = arith.constant 0.000000e+00 : f32
    %52 = vector.broadcast %cst_44 : f32 to vector<1x4xf32>
    %53 = arith.maximumf %51, %52 : vector<1x4xf32>
    %54 = vector.broadcast %44 : vector<1x4xf32> to vector<256x4xf32>
    %55 = arith.subf %40, %54 : vector<256x4xf32>
    %cst_45 = arith.constant 9.99999974E-6 : f32
    %56 = vector.broadcast %cst_45 : f32 to vector<1x4xf32>
    %57 = arith.addf %53, %56 : vector<1x4xf32>
    %58 = math.rsqrt %57 : vector<1x4xf32>
    %59 = vector.broadcast %58 : vector<1x4xf32> to vector<256x4xf32>
    %60 = arith.mulf %55, %59 : vector<256x4xf32>
    %cst_46 = arith.constant 0.000000e+00 : f32
    %61 = vector.broadcast %cst_46 : f32 to vector<256x4xf32>
    %62 = arith.maximumf %60, %61 : vector<256x4xf32>
    %63 = vector.shape_cast %62 : vector<256x4xf32> to vector<16x16x4xf32>
    %64 = arith.truncf %63 : vector<16x16x4xf32> to vector<16x16x4xbf16>
    %c1_47 = arith.constant 1 : index
    %c1_48 = arith.constant 1 : index
    %c0_49 = arith.constant 0 : index
    %65 = vector.load %arg5[%c1_47, %c1_48, %c0_49] : memref<18x18x4xbf16, #tpu.memory_space<vmem>>, vector<16x16x4xbf16>
    tpu.vector_store %arg5[%c1_47, %c1_48, %c0_49], %64 {strides = array<i32>} : memref<18x18x4xbf16, #tpu.memory_space<vmem>>, vector<16x16x4xbf16>,
    %66 = vector.extract_strided_slice %64 {offsets = [1, 0, 0], sizes = [1, 16, 4], strides = [1, 1, 1]} : vector<16x16x4xbf16> to vector<1x16x4xbf16>
    %c0_50 = arith.constant 0 : index
    %c1_51 = arith.constant 1 : index
    %c0_52 = arith.constant 0 : index
    %67 = vector.load %arg5[%c0_50, %c1_51, %c0_52] : memref<18x18x4xbf16, #tpu.memory_space<vmem>>, vector<1x16x4xbf16>
    tpu.vector_store %arg5[%c0_50, %c1_51, %c0_52], %66 {strides = array<i32>} : memref<18x18x4xbf16, #tpu.memory_space<vmem>>, vector<1x16x4xbf16>,
    %68 = vector.extract_strided_slice %64 {offsets = [14, 0, 0], sizes = [1, 16, 4], strides = [1, 1, 1]} : vector<16x16x4xbf16> to vector<1x16x4xbf16>
    %c17_53 = arith.constant 17 : index
    %c1_54 = arith.constant 1 : index
    %c0_55 = arith.constant 0 : index
    %69 = vector.load %arg5[%c17_53, %c1_54, %c0_55] : memref<18x18x4xbf16, #tpu.memory_space<vmem>>, vector<1x16x4xbf16>
    tpu.vector_store %arg5[%c17_53, %c1_54, %c0_55], %68 {strides = array<i32>} : memref<18x18x4xbf16, #tpu.memory_space<vmem>>, vector<1x16x4xbf16>,
    %c0_56 = arith.constant 0 : index
    %c2_57 = arith.constant 2 : index
    %c0_58 = arith.constant 0 : index
    %70 = vector.load %arg5[%c0_56, %c2_57, %c0_58] : memref<18x18x4xbf16, #tpu.memory_space<vmem>>, vector<18x1x4xbf16>
    %c0_59 = arith.constant 0 : index
    %c0_60 = arith.constant 0 : index
    %c0_61 = arith.constant 0 : index
    %71 = vector.load %arg5[%c0_59, %c0_60, %c0_61] : memref<18x18x4xbf16, #tpu.memory_space<vmem>>, vector<18x1x4xbf16>
    tpu.vector_store %arg5[%c0_59, %c0_60, %c0_61], %70 {strides = array<i32>} : memref<18x18x4xbf16, #tpu.memory_space<vmem>>, vector<18x1x4xbf16>,
    %c0_62 = arith.constant 0 : index
    %c15_63 = arith.constant 15 : index
    %c0_64 = arith.constant 0 : index
    %72 = vector.load %arg5[%c0_62, %c15_63, %c0_64] : memref<18x18x4xbf16, #tpu.memory_space<vmem>>, vector<18x1x4xbf16>
    %c0_65 = arith.constant 0 : index
    %c17_66 = arith.constant 17 : index
    %c0_67 = arith.constant 0 : index
    %73 = vector.load %arg5[%c0_65, %c17_66, %c0_67] : memref<18x18x4xbf16, #tpu.memory_space<vmem>>, vector<18x1x4xbf16>
    tpu.vector_store %arg5[%c0_65, %c17_66, %c0_67], %72 {strides = array<i32>} : memref<18x18x4xbf16, #tpu.memory_space<vmem>>, vector<18x1x4xbf16>,
    %c0_68 = arith.constant 0 : index
    %c0_69 = arith.constant 0 : index
    %c0_70 = arith.constant 0 : index
    %74 = vector.load %arg5[%c0_68, %c0_69, %c0_70] : memref<18x18x4xbf16, #tpu.memory_space<vmem>>, vector<16x18x4xbf16>
    %75 = vector.extract_strided_slice %74 {offsets = [0, 0, 0], sizes = [16, 16, 4], strides = [1, 1, 1]} : vector<16x18x4xbf16> to vector<16x16x4xbf16>
    %76 = vector.extract_strided_slice %74 {offsets = [0, 1, 0], sizes = [16, 16, 4], strides = [1, 1, 1]} : vector<16x18x4xbf16> to vector<16x16x4xbf16>
    %77 = vector.extract_strided_slice %74 {offsets = [0, 2, 0], sizes = [16, 16, 4], strides = [1, 1, 1]} : vector<16x18x4xbf16> to vector<16x16x4xbf16>
    %78 = tpu.concatenate %75, %76, %77 in 2 : vector<16x16x4xbf16>, vector<16x16x4xbf16>, vector<16x16x4xbf16> -> vector<16x16x12xbf16>
    %79 = vector.shape_cast %78 : vector<16x16x12xbf16> to vector<256x12xbf16>
    %c0_71 = arith.constant 0 : index
    %c0_72 = arith.constant 0 : index
    %c0_73 = arith.constant 0 : index
    %80 = vector.load %arg3[%c0_71, %c0_72, %c0_73] : memref<3x12x4xbf16, #tpu.memory_space<vmem>>, vector<1x12x4xbf16>
    %81 = vector.shape_cast %80 : vector<1x12x4xbf16> to vector<12x4xbf16>
    %cst_74 = arith.constant dense<0.000000e+00> : vector<256x4xf32>
    %82 = tpu.matmul %79, %81, %cst_74 {dimension_numbers = #tpu.dot_dimension_numbers<[1], [0], [0], [1], [0, 0, 1, 1], [], []>} : vector<256x12xbf16>, vector<12x4xbf16>, vector<256x4xf32> -> vector<256x4xf32>
    %c1_75 = arith.constant 1 : index
    %c0_76 = arith.constant 0 : index
    %c0_77 = arith.constant 0 : index
    %83 = vector.load %arg5[%c1_75, %c0_76, %c0_77] : memref<18x18x4xbf16, #tpu.memory_space<vmem>>, vector<16x18x4xbf16>
    %84 = vector.extract_strided_slice %83 {offsets = [0, 0, 0], sizes = [16, 16, 4], strides = [1, 1, 1]} : vector<16x18x4xbf16> to vector<16x16x4xbf16>
    %85 = vector.extract_strided_slice %83 {offsets = [0, 1, 0], sizes = [16, 16, 4], strides = [1, 1, 1]} : vector<16x18x4xbf16> to vector<16x16x4xbf16>
    %86 = vector.extract_strided_slice %83 {offsets = [0, 2, 0], sizes = [16, 16, 4], strides = [1, 1, 1]} : vector<16x18x4xbf16> to vector<16x16x4xbf16>
    %87 = tpu.concatenate %84, %85, %86 in 2 : vector<16x16x4xbf16>, vector<16x16x4xbf16>, vector<16x16x4xbf16> -> vector<16x16x12xbf16>
    %88 = vector.shape_cast %87 : vector<16x16x12xbf16> to vector<256x12xbf16>
    %c1_78 = arith.constant 1 : index
    %c0_79 = arith.constant 0 : index
    %c0_80 = arith.constant 0 : index
    %89 = vector.load %arg3[%c1_78, %c0_79, %c0_80] : memref<3x12x4xbf16, #tpu.memory_space<vmem>>, vector<1x12x4xbf16>
    %90 = vector.shape_cast %89 : vector<1x12x4xbf16> to vector<12x4xbf16>
    %cst_81 = arith.constant dense<0.000000e+00> : vector<256x4xf32>
    %91 = tpu.matmul %88, %90, %cst_81 {dimension_numbers = #tpu.dot_dimension_numbers<[1], [0], [0], [1], [0, 0, 1, 1], [], []>} : vector<256x12xbf16>, vector<12x4xbf16>, vector<256x4xf32> -> vector<256x4xf32>
    %92 = arith.addf %82, %91 : vector<256x4xf32>
    %c2_82 = arith.constant 2 : index
    %c0_83 = arith.constant 0 : index
    %c0_84 = arith.constant 0 : index
    %93 = vector.load %arg5[%c2_82, %c0_83, %c0_84] : memref<18x18x4xbf16, #tpu.memory_space<vmem>>, vector<16x18x4xbf16>
    %94 = vector.extract_strided_slice %93 {offsets = [0, 0, 0], sizes = [16, 16, 4], strides = [1, 1, 1]} : vector<16x18x4xbf16> to vector<16x16x4xbf16>
    %95 = vector.extract_strided_slice %93 {offsets = [0, 1, 0], sizes = [16, 16, 4], strides = [1, 1, 1]} : vector<16x18x4xbf16> to vector<16x16x4xbf16>
    %96 = vector.extract_strided_slice %93 {offsets = [0, 2, 0], sizes = [16, 16, 4], strides = [1, 1, 1]} : vector<16x18x4xbf16> to vector<16x16x4xbf16>
    %97 = tpu.concatenate %94, %95, %96 in 2 : vector<16x16x4xbf16>, vector<16x16x4xbf16>, vector<16x16x4xbf16> -> vector<16x16x12xbf16>
    %98 = vector.shape_cast %97 : vector<16x16x12xbf16> to vector<256x12xbf16>
    %c2_85 = arith.constant 2 : index
    %c0_86 = arith.constant 0 : index
    %c0_87 = arith.constant 0 : index
    %99 = vector.load %arg3[%c2_85, %c0_86, %c0_87] : memref<3x12x4xbf16, #tpu.memory_space<vmem>>, vector<1x12x4xbf16>
    %100 = vector.shape_cast %99 : vector<1x12x4xbf16> to vector<12x4xbf16>
    %cst_88 = arith.constant dense<0.000000e+00> : vector<256x4xf32>
    %101 = tpu.matmul %98, %100, %cst_88 {dimension_numbers = #tpu.dot_dimension_numbers<[1], [0], [0], [1], [0, 0, 1, 1], [], []>} : vector<256x12xbf16>, vector<12x4xbf16>, vector<256x4xf32> -> vector<256x4xf32>
    %102 = arith.addf %92, %101 : vector<256x4xf32>
    %cst_89 = arith.constant dense<0.000000e+00> : vector<4xf32>
    %103 = vector.multi_reduction <add>, %102, %cst_89 [0] : vector<256x4xf32> to vector<4xf32>
    %104 = vector.shape_cast %103 : vector<4xf32> to vector<1x4xf32>
    %cst_90 = arith.constant 3.906250e-03 : f32
    %105 = vector.broadcast %cst_90 : f32 to vector<1x4xf32>
    %106 = arith.mulf %104, %105 : vector<1x4xf32>
    %107 = arith.mulf %102, %102 : vector<256x4xf32>
    %cst_91 = arith.constant dense<0.000000e+00> : vector<4xf32>
    %108 = vector.multi_reduction <add>, %107, %cst_91 [0] : vector<256x4xf32> to vector<4xf32>
    %109 = vector.shape_cast %108 : vector<4xf32> to vector<1x4xf32>
    %cst_92 = arith.constant 3.906250e-03 : f32
    %110 = vector.broadcast %cst_92 : f32 to vector<1x4xf32>
    %111 = arith.mulf %109, %110 : vector<1x4xf32>
    %112 = arith.mulf %106, %106 : vector<1x4xf32>
    %113 = arith.subf %111, %112 : vector<1x4xf32>
    %cst_93 = arith.constant 0.000000e+00 : f32
    %114 = vector.broadcast %cst_93 : f32 to vector<1x4xf32>
    %115 = arith.maximumf %113, %114 : vector<1x4xf32>
    %116 = vector.broadcast %106 : vector<1x4xf32> to vector<256x4xf32>
    %117 = arith.subf %102, %116 : vector<256x4xf32>
    %cst_94 = arith.constant 9.99999974E-6 : f32
    %118 = vector.broadcast %cst_94 : f32 to vector<1x4xf32>
    %119 = arith.addf %115, %118 : vector<1x4xf32>
    %120 = math.rsqrt %119 : vector<1x4xf32>
    %121 = vector.broadcast %120 : vector<1x4xf32> to vector<256x4xf32>
    %122 = arith.mulf %117, %121 : vector<256x4xf32>
    %c0_95 = arith.constant 0 : index
    %c0_96 = arith.constant 0 : index
    %c0_97 = arith.constant 0 : index
    %c0_98 = arith.constant 0 : index
    %123 = vector.load %arg1[%c0_95, %c0_96, %c0_97, %c0_98] : memref<1x16x16x4xf32, #tpu.memory_space<vmem>>, vector<1x16x16x4xf32>
    %124 = vector.shape_cast %123 : vector<1x16x16x4xf32> to vector<16x16x4xf32>
    %125 = vector.shape_cast %124 : vector<16x16x4xf32> to vector<256x4xf32>
    %126 = arith.addf %122, %125 : vector<256x4xf32>
    %127 = vector.shape_cast %126 : vector<256x4xf32> to vector<1x16x16x4xf32>
    %c0_99 = arith.constant 0 : index
    %c0_100 = arith.constant 0 : index
    %c0_101 = arith.constant 0 : index
    %c0_102 = arith.constant 0 : index
    %128 = vector.load %arg4[%c0_99, %c0_100, %c0_101, %c0_102] : memref<1x16x16x4xf32, #tpu.memory_space<vmem>>, vector<1x16x16x4xf32>
    tpu.vector_store %arg4[%c0_99, %c0_100, %c0_101, %c0_102], %127 {strides = array<i32>} : memref<1x16x16x4xf32, #tpu.memory_space<vmem>>, vector<1x16x16x4xf32>,
    return
  }
  func.func @transform_0(%arg0: i32) -> (i32, i32, i32, i32) {
    %c0_i32 = arith.constant 0 : i32
    %c0_i32_0 = arith.constant 0 : i32
    %c0_i32_1 = arith.constant 0 : i32
    %c0_i32_2 = arith.constant 0 : i32
    return %arg0, %c0_i32, %c0_i32_0, %c0_i32_1 : i32, i32, i32, i32
  }
  func.func @transform_1(%arg0: i32) -> (i32, i32, i32) {
    %c0_i32 = arith.constant 0 : i32
    %c0_i32_0 = arith.constant 0 : i32
    %c0_i32_1 = arith.constant 0 : i32
    %c0_i32_2 = arith.constant 0 : i32
    return %c0_i32, %c0_i32_0, %c0_i32_1 : i32, i32, i32
  }
  func.func @transform_2(%arg0: i32) -> (i32, i32, i32) {
    %c0_i32 = arith.constant 0 : i32
    %c0_i32_0 = arith.constant 0 : i32
    %c0_i32_1 = arith.constant 0 : i32
    %c0_i32_2 = arith.constant 0 : i32
    return %c0_i32, %c0_i32_0, %c0_i32_1 : i32, i32, i32
  }
  func.func @transform_3(%arg0: i32) -> (i32, i32, i32, i32) {
    %c0_i32 = arith.constant 0 : i32
    %c0_i32_0 = arith.constant 0 : i32
    %c0_i32_1 = arith.constant 0 : i32
    %c0_i32_2 = arith.constant 0 : i32
    return %arg0, %c0_i32, %c0_i32_0, %c0_i32_1 : i32, i32, i32, i32
  }
}

</mosaic_0001>

<llo_original>
// kernel: tpu_custom_call.1
$region0: #{tpu_custom_call.1}
  #allocation0 [shape = 'u32[]', space=smem, size = 0x4, offset = 0x4, fixed_abs, tag = 'smem constant byte address 0x4 - core index']
  #allocation1 [shape = 'u32[144,128]{1,0:T(1,128)}', space=vmem, size = 0x12000, scoped, tag = 'internal scratch']
  #allocation2 [shape = 'bf16[18,18,4]{2,1,0:T(8,128)(2,1)}', space=vmem, size = 0x1b000, scoped, tag = 'scratch operand']
  %s0 = inlined_call_operand.vmem [shape: f32[2,16,16,4], index: 0, kind: input, shape index: {}]
  %s1 = inlined_call_operand.vmem [shape: bf16[3,12,4], index: 1, kind: input, shape index: {}]
  %s2 = inlined_call_operand.vmem [shape: bf16[3,12,4], index: 2, kind: input, shape index: {}]
  %s3 = inlined_call_operand.vmem [shape: f32[2,16,16,4], index: 3, kind: output, shape index: {}]
  %s4 = sld [smem:[#allocation0]]
  $region45: #{tpu_custom_call.1} parent=0
    _
  %s6 = ssub.s32 1, %s4
  %s7 = scalar_select 0, %s6, %s4
  loop: start=0, step=1, limit=4
  $region2: #{tpu_custom_call.1} parent=0 // loop_pre_header
    _
  $region3: #{tpu_custom_call.1} parent=0 // loop_header
    %s9 = sphi 0, %s13
    %p10 = scmp.ge.s32.totalorder %s9, 4
    %s19 = sphi 0, %s21
    %s22 = sphi 0, %s19
    %s23 = sphi 0, %s22
    %s39 = sphi 0, %s23
    %s43 = sphi 0, %s43
    %s45 = sphi 0, %s43
    %s46 = sphi 0, %s45
    %s60 = sphi 0, %s46
    %s64 = sphi 0, %s64
    %s66 = sphi 0, %s64
    %s67 = sphi 0, %s66
    %s81 = sphi 0, %s67
    %s87 = sphi 0, %s89
    %s90 = sphi 0, %s87
    %s91 = sphi 0, %s90
    %s107 = sphi 0, %s91
  $region4: #{tpu_custom_call.1} parent=0 // loop_header_branch
    %12 = sbr.rel (%p10) target = $region8
  $region5: #{tpu_custom_call.1} parent=0 // loop_body
    %s14 = ssub.s32 %s9, 1
    %s15 = ssub.s32 %s9, 2
    %s16 = sadd.s32 %s9, 1
    %s17 = ssub.s32 %s9, %s16
    %p18 = scmp.eq.s32.totalorder %s17, 0
    %s20 = sadd.s32 %s19, 1
    %s21 = scalar_select %p18, %s19, %s20
    %p24 = pneg %p18
    %p25 = scmp.eq.s32.totalorder %s9, 1
    %p26 = por %p24, %p25
    %p27 = scmp.ne.s32.totalorder %s19, %s22
    %p28 = scmp.eq.s32.totalorder %s9, 0
    %p29 = por %p27, %p28
    %p30 = scmp.ne.s32.totalorder %s19, %s22
    %p31 = scmp.eq.s32.totalorder %s14, 1
    %p32 = por %p30, %p31
    %p33 = scmp.ne.s32.totalorder %s22, %s23
    %p34 = scmp.eq.s32.totalorder %s14, 0
    %p35 = por %p33, %p34
    %p36 = scmp.ne.s32.totalorder %s22, %s23
    %p37 = scmp.eq.s32.totalorder %s15, 1
    %p38 = por %p36, %p37
    %p40 = scmp.ne.s32.totalorder %s23, %s39
    %p41 = scmp.eq.s32.totalorder %s15, 0
    %p42 = por %p40, %p41
    %s44 = sadd.s32 %s43, 1
    %p47 = scmp.eq.s32.totalorder %s9, 1
    %p48 = scmp.ne.s32.totalorder %s43, %s45
    %p49 = scmp.eq.s32.totalorder %s9, 0
    %p50 = por %p48, %p49
    %p51 = scmp.ne.s32.totalorder %s43, %s45
    %p52 = scmp.eq.s32.totalorder %s14, 1
    %p53 = por %p51, %p52
    %p54 = scmp.ne.s32.totalorder %s45, %s46
    %p55 = scmp.eq.s32.totalorder %s14, 0
    %p56 = por %p54, %p55
    %p57 = scmp.ne.s32.totalorder %s45, %s46
    %p58 = scmp.eq.s32.totalorder %s15, 1
    %p59 = por %p57, %p58
    %p61 = scmp.ne.s32.totalorder %s46, %s60
    %p62 = scmp.eq.s32.totalorder %s15, 0
    %p63 = por %p61, %p62
    %s65 = sadd.s32 %s64, 1
    %p68 = scmp.eq.s32.totalorder %s9, 1
    %p69 = scmp.ne.s32.totalorder %s64, %s66
    %p70 = scmp.eq.s32.totalorder %s9, 0
    %p71 = por %p69, %p70
    %p72 = scmp.ne.s32.totalorder %s64, %s66
    %p73 = scmp.eq.s32.totalorder %s14, 1
    %p74 = por %p72, %p73
    %p75 = scmp.ne.s32.totalorder %s66, %s67
    %p76 = scmp.eq.s32.totalorder %s14, 0
    %p77 = por %p75, %p76
    %p78 = scmp.ne.s32.totalorder %s66, %s67
    %p79 = scmp.eq.s32.totalorder %s15, 1
    %p80 = por %p78, %p79
    %p82 = scmp.ne.s32.totalorder %s67, %s81
    %p83 = scmp.eq.s32.totalorder %s15, 0
    %p84 = por %p82, %p83
    %s85 = ssub.s32 %s9, %s16
    %p86 = scmp.eq.s32.totalorder %s85, 0
    %s88 = sadd.s32 %s87, 1
    %s89 = scalar_select %p86, %s87, %s88
    %p92 = pneg %p86
    %p93 = scmp.eq.s32.totalorder %s9, 1
    %p94 = por %p92, %p93
    %p95 = scmp.ne.s32.totalorder %s87, %s90
    %p96 = scmp.eq.s32.totalorder %s9, 0
    %p97 = por %p95, %p96
    %p98 = scmp.ne.s32.totalorder %s87, %s90
    %p99 = scmp.eq.s32.totalorder %s14, 1
    %p100 = por %p98, %p99
    %p101 = scmp.ne.s32.totalorder %s90, %s91
    %p102 = scmp.eq.s32.totalorder %s14, 0
    %p103 = por %p101, %p102
    %p104 = scmp.ne.s32.totalorder %s90, %s91
    %p105 = scmp.eq.s32.totalorder %s15, 1
    %p106 = por %p104, %p105
    %p108 = scmp.ne.s32.totalorder %s91, %s107
    %p109 = scmp.eq.s32.totalorder %s15, 0
    %p110 = por %p108, %p109
    %p111 = scmp.le.s32.totalorder 1, %s9
    %p112 = scmp.lt.s32.totalorder %s9, 3
    %p113 = pnand %p111, %p112
    %p114 = pneg %p113
    // Predicated region
    $region9: #{tpu_custom_call.1} parent=5 // pred_check
      _
    $region10: #{tpu_custom_call.1} parent=5 // pred_check_branch
      %116 = sbr.rel (%p113) target = $region12
    $region11: #{tpu_custom_call.1} parent=5 // pred_region
      %s117 = ssub.s32 %s9, 1
      // Predicated region
      $region13: #{tpu_custom_call.1} parent=11 // pred_check
        %p118 = pneg %p56
      $region14: #{tpu_custom_call.1} parent=11 // pred_check_branch
        %120 = sbr.rel (%p118) target = $region16
      $region15: #{tpu_custom_call.1} parent=11 // pred_region
        _
      $region16: #{tpu_custom_call.1} parent=11 // pred_fallthru
        _
      // Predicated region
      $region17: #{tpu_custom_call.1} parent=11 // pred_check
        %p121 = pneg %p77
      $region18: #{tpu_custom_call.1} parent=11 // pred_check_branch
        %123 = sbr.rel (%p121) target = $region20
      $region19: #{tpu_custom_call.1} parent=11 // pred_region
        _
      $region20: #{tpu_custom_call.1} parent=11 // pred_fallthru
        _
    $region12: #{tpu_custom_call.1} parent=5 // pred_fallthru
      _
    %p124 = scmp.lt.s32.totalorder %s9, 2
    // Predicated region
    $region21: #{tpu_custom_call.1} parent=5 // pred_check
      %p125 = pneg %p124
    $region22: #{tpu_custom_call.1} parent=5 // pred_check_branch
      %127 = sbr.rel (%p125) target = $region24
    $region23: #{tpu_custom_call.1} parent=5 // pred_region
      // Predicated region
      $region25: #{tpu_custom_call.1} parent=23 // pred_check
        %p128 = pneg %p29
      $region26: #{tpu_custom_call.1} parent=23 // pred_check_branch
        %130 = sbr.rel (%p128) target = $region28
      $region27: #{tpu_custom_call.1} parent=23 // pred_region
        %p131 = scmp.lt.s32.totalorder %s9, 1
        %s132 = scalar_select %p131, %s9, 1
        %s133 = smul.addr %s132, 32
        %s134 = smul.addr %s133, 8
        %s135 = scalar_lea.vmem %s0, %s134
      $region28: #{tpu_custom_call.1} parent=23 // pred_fallthru
        _
    $region24: #{tpu_custom_call.1} parent=5 // pred_fallthru
      _
    %p136 = scmp.le.s32.totalorder 1, %s9
    %p137 = scmp.lt.s32.totalorder %s9, 3
    %p138 = pnand %p136, %p137
    %p139 = pneg %p138
    // Predicated region
    $region29: #{tpu_custom_call.1} parent=5 // pred_check
      _
    $region30: #{tpu_custom_call.1} parent=5 // pred_check_branch
      %141 = sbr.rel (%p138) target = $region32
    $region31: #{tpu_custom_call.1} parent=5 // pred_region
      %s142 = ssub.s32 %s9, 1
      %p143 = scmp.lt.s32.totalorder %s14, 1
      %s144 = scalar_select %p143, %s14, 1
      %s145 = smul.addr %s144, 32
      %s146 = smul.addr %s145, 8
      %s147 = scalar_lea.vmem %s0, %s146
      %p148 = pneg %p35
      %p149 = pneg %p32
      %p150 = pneg %p56
      %p151 = pneg %p53
      %p152 = pneg %p77
      %p153 = pneg %p74
      %p154 = pneg %p103
      %p155 = pneg %p100
      %p156 = scmp.lt.s32.totalorder %s14, 1
      %s157 = scalar_select %p156, %s14, 1
      %s158 = smul.addr %s157, 32
      %s159 = smul.addr %s158, 8
      %s160 = scalar_lea.vmem %s3, %s159
      %p161 = scmp.lt.s32.totalorder %s14, 1
      %s162 = scalar_select %p161, %s14, 1
      %s163 = smul.addr %s162, 32
      %s164 = smul.addr %s163, 8
      %s165 = scalar_lea.vmem %s0, %s164
      %p166 = scmp.lt.s32.totalorder %s14, 1
      %s167 = scalar_select %p166, %s14, 1
      %s168 = smul.addr %s167, 32
      %s169 = smul.addr %s168, 8
      %s170 = scalar_lea.vmem %s3, %s169
      %v172 = vld [vmem:[%s165] sm:$0xff]
      %v173 = vld [vmem:[%s165 + $0x8] sm:$0xff]
      %v174 = vld [vmem:[%s165 + $0x10] sm:$0xff]
      %v175 = vld [vmem:[%s165 + $0x18] sm:$0xff]
      %v176 = vld [vmem:[%s165 + $0x20] sm:$0xff]
      %v177 = vld [vmem:[%s165 + $0x28] sm:$0xff]
      %v178 = vld [vmem:[%s165 + $0x30] sm:$0xff]
      %v179 = vld [vmem:[%s165 + $0x38] sm:$0xff]
      %v180 = vld [vmem:[%s165 + $0x40] sm:$0xff]
      %v181 = vld [vmem:[%s165 + $0x48] sm:$0xff]
      %v182 = vld [vmem:[%s165 + $0x50] sm:$0xff]
      %v183 = vld [vmem:[%s165 + $0x58] sm:$0xff]
      %v184 = vld [vmem:[%s165 + $0x60] sm:$0xff]
      %v185 = vld [vmem:[%s165 + $0x68] sm:$0xff]
      %v186 = vld [vmem:[%s165 + $0x70] sm:$0xff]
      %v187 = vld [vmem:[%s165 + $0x78] sm:$0xff]
      %v188 = vld [vmem:[%s165 + $0x80] sm:$0xff]
      %v189 = vld [vmem:[%s165 + $0x88] sm:$0xff]
      %v190 = vld [vmem:[%s165 + $0x90] sm:$0xff]
      %v191 = vld [vmem:[%s165 + $0x98] sm:$0xff]
      %v192 = vld [vmem:[%s165 + $0xa0] sm:$0xff]
      %v193 = vld [vmem:[%s165 + $0xa8] sm:$0xff]
      %v194 = vld [vmem:[%s165 + $0xb0] sm:$0xff]
      %v195 = vld [vmem:[%s165 + $0xb8] sm:$0xff]
      %v196 = vld [vmem:[%s165 + $0xc0] sm:$0xff]
      %v197 = vld [vmem:[%s165 + $0xc8] sm:$0xff]
      %v198 = vld [vmem:[%s165 + $0xd0] sm:$0xff]
      %v199 = vld [vmem:[%s165 + $0xd8] sm:$0xff]
      %v200 = vld [vmem:[%s165 + $0xe0] sm:$0xff]
      %v201 = vld [vmem:[%s165 + $0xe8] sm:$0xff]
      %v202 = vld [vmem:[%s165 + $0xf0] sm:$0xff]
      %v203 = vld [vmem:[%s165 + $0xf8] sm:$0xff]
      %v204 = vpack.c.bf16 %v173, %v172
      %v205 = vpack.c.bf16 %v175, %v174
      %v206 = vpack.c.bf16 %v177, %v176
      %v207 = vpack.c.bf16 %v179, %v178
      %v208 = vpack.c.bf16 %v181, %v180
      %v209 = vpack.c.bf16 %v183, %v182
      %v210 = vpack.c.bf16 %v185, %v184
      %v211 = vpack.c.bf16 %v187, %v186
      %v212 = vpack.c.bf16 %v189, %v188
      %v213 = vpack.c.bf16 %v191, %v190
      %v214 = vpack.c.bf16 %v193, %v192
      %v215 = vpack.c.bf16 %v195, %v194
      %v216 = vpack.c.bf16 %v197, %v196
      %v217 = vpack.c.bf16 %v199, %v198
      %v218 = vpack.c.bf16 %v201, %v200
      %v219 = vpack.c.bf16 %v203, %v202
      %v236 = vunpack.c.l.b16 %v204
      %v237 = vunpack.c.h.b16 %v204
      %v238 = vunpack.c.l.b16 %v205
      %v239 = vunpack.c.h.b16 %v205
      %v240 = vunpack.c.l.b16 %v206
      %v241 = vunpack.c.h.b16 %v206
      %v242 = vunpack.c.l.b16 %v207
      %v243 = vunpack.c.h.b16 %v207
      %v244 = vunpack.c.l.b16 %v208
      %v245 = vunpack.c.h.b16 %v208
      %v246 = vunpack.c.l.b16 %v209
      %v247 = vunpack.c.h.b16 %v209
      %v248 = vunpack.c.l.b16 %v210
      %v249 = vunpack.c.h.b16 %v210
      %v250 = vunpack.c.l.b16 %v211
      %v251 = vunpack.c.h.b16 %v211
      %v252 = vunpack.c.l.b16 %v212
      %v253 = vunpack.c.h.b16 %v212
      %v254 = vunpack.c.l.b16 %v213
      %v255 = vunpack.c.h.b16 %v213
      %v256 = vunpack.c.l.b16 %v214
      %v257 = vunpack.c.h.b16 %v214
      %v258 = vunpack.c.l.b16 %v215
      %v259 = vunpack.c.h.b16 %v215
      %v260 = vunpack.c.l.b16 %v216
      %v261 = vunpack.c.h.b16 %v216
      %v262 = vunpack.c.l.b16 %v217
      %v263 = vunpack.c.h.b16 %v217
      %v264 = vunpack.c.l.b16 %v218
      %v265 = vunpack.c.h.b16 %v218
      %v266 = vunpack.c.l.b16 %v219
      %v267 = vunpack.c.h.b16 %v219
      %v268 = vpack.c.b16 %v236, %v236
      %v269 = vpack.c.b16 %v237, %v237
      %v270 = vpack.c.b16 %v238, %v238
      %v271 = vpack.c.b16 %v239, %v239
      %v272 = vpack.c.b16 %v240, %v240
      %v273 = vpack.c.b16 %v241, %v241
      %v274 = vpack.c.b16 %v242, %v242
      %v275 = vpack.c.b16 %v243, %v243
      %v276 = vpack.c.b16 %v244, %v244
      %v277 = vpack.c.b16 %v245, %v245
      %v278 = vpack.c.b16 %v246, %v246
      %v279 = vpack.c.b16 %v247, %v247
      %v280 = vpack.c.b16 %v248, %v248
      %v281 = vpack.c.b16 %v249, %v249
      %v282 = vpack.c.b16 %v250, %v250
      %v283 = vpack.c.b16 %v251, %v251
      %v284 = vpack.c.b16 %v252, %v252
      %v285 = vpack.c.b16 %v253, %v253
      %v286 = vpack.c.b16 %v254, %v254
      %v287 = vpack.c.b16 %v255, %v255
      %v288 = vpack.c.b16 %v256, %v256
      %v289 = vpack.c.b16 %v257, %v257
      %v290 = vpack.c.b16 %v258, %v258
      %v291 = vpack.c.b16 %v259, %v259
      %v292 = vpack.c.b16 %v260, %v260
      %v293 = vpack.c.b16 %v261, %v261
      %v294 = vpack.c.b16 %v262, %v262
      %v295 = vpack.c.b16 %v263, %v263
      %v296 = vpack.c.b16 %v264, %v264
      %v297 = vpack.c.b16 %v265, %v265
      %v298 = vpack.c.b16 %v266, %v266
      %v299 = vpack.c.b16 %v267, %v267
      %vm300 = vsmask.f32 256
      %vm301 = vsmask.f32 4368
      %vm302 = vmor %vm300, %vm301
      %v304 = vshrl.u32 %v268, 16
      %v306 = vrot.slane %v304, 7
      %v307 = vshll.u32 %v268, 16
      %v309 = vor.u32 %v306, %v307
      %v310 = vrot.slane %v306, 4
      %v312 = vshrl.u32 %v269, 16
      %v314 = vrot.slane %v312, 7
      %v315 = vshll.u32 %v269, 16
      %v317 = vor.u32 %v314, %v315
      %v318 = vsel %vm302, %v310, %v317
      %v319 = vrot.slane %v314, 4
      %v321 = vshrl.u32 %v270, 16
      %v323 = vrot.slane %v321, 7
      %v324 = vshll.u32 %v270, 16
      %v326 = vor.u32 %v323, %v324
      %v327 = vrot.slane %v323, 4
      %v329 = vshrl.u32 %v271, 16
      %v331 = vrot.slane %v329, 7
      %v332 = vshll.u32 %v271, 16
      %v334 = vor.u32 %v331, %v332
      %v335 = vsel %vm302, %v327, %v334
      %v336 = vrot.slane %v331, 4
      %v338 = vshrl.u32 %v272, 16
      %v340 = vrot.slane %v338, 7
      %v341 = vshll.u32 %v272, 16
      %v343 = vor.u32 %v340, %v341
      %v344 = vrot.slane %v340, 4
      %v346 = vshrl.u32 %v273, 16
      %v348 = vrot.slane %v346, 7
      %v349 = vshll.u32 %v273, 16
      %v351 = vor.u32 %v348, %v349
      %v352 = vsel %vm302, %v344, %v351
      %v353 = vrot.slane %v348, 4
      %v355 = vshrl.u32 %v274, 16
      %v357 = vrot.slane %v355, 7
      %v358 = vshll.u32 %v274, 16
      %v360 = vor.u32 %v357, %v358
      %v361 = vrot.slane %v357, 4
      %v363 = vshrl.u32 %v275, 16
      %v365 = vrot.slane %v363, 7
      %v366 = vshll.u32 %v275, 16
      %v368 = vor.u32 %v365, %v366
      %v369 = vsel %vm302, %v361, %v368
      %v370 = vrot.slane %v365, 4
      %v372 = vshrl.u32 %v276, 16
      %v374 = vrot.slane %v372, 7
      %v375 = vshll.u32 %v276, 16
      %v377 = vor.u32 %v374, %v375
      %v378 = vrot.slane %v374, 4
      %v380 = vshrl.u32 %v277, 16
      %v382 = vrot.slane %v380, 7
      %v383 = vshll.u32 %v277, 16
      %v385 = vor.u32 %v382, %v383
      %v386 = vsel %vm302, %v378, %v385
      %v387 = vrot.slane %v382, 4
      %v389 = vshrl.u32 %v278, 16
      %v391 = vrot.slane %v389, 7
      %v392 = vshll.u32 %v278, 16
      %v394 = vor.u32 %v391, %v392
      %v395 = vrot.slane %v391, 4
      %v397 = vshrl.u32 %v279, 16
      %v399 = vrot.slane %v397, 7
      %v400 = vshll.u32 %v279, 16
      %v402 = vor.u32 %v399, %v400
      %v403 = vsel %vm302, %v395, %v402
      %v404 = vrot.slane %v399, 4
      %v406 = vshrl.u32 %v280, 16
      %v408 = vrot.slane %v406, 7
      %v409 = vshll.u32 %v280, 16
      %v411 = vor.u32 %v408, %v409
      %v412 = vrot.slane %v408, 4
      %v414 = vshrl.u32 %v281, 16
      %v416 = vrot.slane %v414, 7
      %v417 = vshll.u32 %v281, 16
      %v419 = vor.u32 %v416, %v417
      %v420 = vsel %vm302, %v412, %v419
      %v421 = vrot.slane %v416, 4
      %v423 = vshrl.u32 %v282, 16
      %v425 = vrot.slane %v423, 7
      %v426 = vshll.u32 %v282, 16
      %v428 = vor.u32 %v425, %v426
      %v429 = vrot.slane %v425, 4
      %v431 = vshrl.u32 %v283, 16
      %v433 = vrot.slane %v431, 7
      %v434 = vshll.u32 %v283, 16
      %v436 = vor.u32 %v433, %v434
      %v437 = vsel %vm302, %v429, %v436
      %v438 = vrot.slane %v433, 4
      %v440 = vshrl.u32 %v284, 16
      %v442 = vrot.slane %v440, 7
      %v443 = vshll.u32 %v284, 16
      %v445 = vor.u32 %v442, %v443
      %v446 = vrot.slane %v442, 4
      %v448 = vshrl.u32 %v285, 16
      %v450 = vrot.slane %v448, 7
      %v451 = vshll.u32 %v285, 16
      %v453 = vor.u32 %v450, %v451
      %v454 = vsel %vm302, %v446, %v453
      %v455 = vrot.slane %v450, 4
      %v457 = vshrl.u32 %v286, 16
      %v459 = vrot.slane %v457, 7
      %v460 = vshll.u32 %v286, 16
      %v462 = vor.u32 %v459, %v460
      %v463 = vrot.slane %v459, 4
      %v465 = vshrl.u32 %v287, 16
      %v467 = vrot.slane %v465, 7
      %v468 = vshll.u32 %v287, 16
      %v470 = vor.u32 %v467, %v468
      %v471 = vsel %vm302, %v463, %v470
      %v472 = vrot.slane %v467, 4
      %v474 = vshrl.u32 %v288, 16
      %v476 = vrot.slane %v474, 7
      %v477 = vshll.u32 %v288, 16
      %v479 = vor.u32 %v476, %v477
      %v480 = vrot.slane %v476, 4
      %v482 = vshrl.u32 %v289, 16
      %v484 = vrot.slane %v482, 7
      %v485 = vshll.u32 %v289, 16
      %v487 = vor.u32 %v484, %v485
      %v488 = vsel %vm302, %v480, %v487
      %v489 = vrot.slane %v484, 4
      %v491 = vshrl.u32 %v290, 16
      %v493 = vrot.slane %v491, 7
      %v494 = vshll.u32 %v290, 16
      %v496 = vor.u32 %v493, %v494
      %v497 = vrot.slane %v493, 4
      %v499 = vshrl.u32 %v291, 16
      %v501 = vrot.slane %v499, 7
      %v502 = vshll.u32 %v291, 16
      %v504 = vor.u32 %v501, %v502
      %v505 = vsel %vm302, %v497, %v504
      %v506 = vrot.slane %v501, 4
      %v508 = vshrl.u32 %v292, 16
      %v510 = vrot.slane %v508, 7
      %v511 = vshll.u32 %v292, 16
      %v513 = vor.u32 %v510, %v511
      %v514 = vrot.slane %v510, 4
      %v516 = vshrl.u32 %v293, 16
      %v518 = vrot.slane %v516, 7
      %v519 = vshll.u32 %v293, 16
      %v521 = vor.u32 %v518, %v519
      %v522 = vsel %vm302, %v514, %v521
      %v523 = vrot.slane %v518, 4
      %v525 = vshrl.u32 %v294, 16
      %v527 = vrot.slane %v525, 7
      %v528 = vshll.u32 %v294, 16
      %v530 = vor.u32 %v527, %v528
      %v531 = vrot.slane %v527, 4
      %v533 = vshrl.u32 %v295, 16
      %v535 = vrot.slane %v533, 7
      %v536 = vshll.u32 %v295, 16
      %v538 = vor.u32 %v535, %v536
      %v539 = vsel %vm302, %v531, %v538
      %v540 = vrot.slane %v535, 4
      %v542 = vshrl.u32 %v296, 16
      %v544 = vrot.slane %v542, 7
      %v545 = vshll.u32 %v296, 16
      %v547 = vor.u32 %v544, %v545
      %v548 = vrot.slane %v544, 4
      %v550 = vshrl.u32 %v297, 16
      %v552 = vrot.slane %v550, 7
      %v553 = vshll.u32 %v297, 16
      %v555 = vor.u32 %v552, %v553
      %v556 = vsel %vm302, %v548, %v555
      %v557 = vrot.slane %v552, 4
      %v559 = vshrl.u32 %v298, 16
      %v561 = vrot.slane %v559, 7
      %v562 = vshll.u32 %v298, 16
      %v564 = vor.u32 %v561, %v562
      %v565 = vrot.slane %v561, 4
      %v567 = vshrl.u32 %v299, 16
      %v569 = vrot.slane %v567, 7
      %v570 = vshll.u32 %v299, 16
      %v572 = vor.u32 %v569, %v570
      %v573 = vsel %vm302, %v565, %v572
      %v574 = vrot.slane %v569, 4
      %s623 = scalar_lea.vmem [#allocation2], 12
      %vm624 = vcmask 27648
      %vm625 = vsmask.f32 7938
      %vm626 = vmand %vm624, %vm625
      %v627 = vld [vmem:[%s623] sm:$0xf]
      %v628 = vsel %vm626, %v309, %v627
      %629 = vst [vmem:[%s623] sm:$0xf] %v628
      %vm630 = vcmask 27648
      %631 = vst.msk [vmem:[%s623 + $0x4] sm:$0xf] %vm630, %v318
      %vm632 = vcmask 24576
      %vm633 = vmand %vm632, %vm300
      %v634 = vld [vmem:[%s623 + $0x8] sm:$0x1]
      %v635 = vsel %vm633, %v319, %v634
      %636 = vst [vmem:[%s623 + $0x8] sm:$0x1] %v635
      %v637 = vld [vmem:[%s623 + $0xc] sm:$0xf]
      %v638 = vsel %vm626, %v326, %v637
      %639 = vst [vmem:[%s623 + $0xc] sm:$0xf] %v638
      %640 = vst.msk [vmem:[%s623 + $0x10] sm:$0xf] %vm630, %v335
      %v641 = vld [vmem:[%s623 + $0x14] sm:$0x1]
      %v642 = vsel %vm633, %v336, %v641
      %643 = vst [vmem:[%s623 + $0x14] sm:$0x1] %v642
      %v644 = vld [vmem:[%s623 + $0x18] sm:$0xf]
      %v645 = vsel %vm626, %v343, %v644
      %646 = vst [vmem:[%s623 + $0x18] sm:$0xf] %v645
      %647 = vst.msk [vmem:[%s623 + $0x1c] sm:$0xf] %vm630, %v352
      %v648 = vld [vmem:[%s623 + $0x20] sm:$0x1]
      %v649 = vsel %vm633, %v353, %v648
      %650 = vst [vmem:[%s623 + $0x20] sm:$0x1] %v649
      %v651 = vld [vmem:[%s623 + $0x24] sm:$0xf]
      %v652 = vsel %vm626, %v360, %v651
      %653 = vst [vmem:[%s623 + $0x24] sm:$0xf] %v652
      %654 = vst.msk [vmem:[%s623 + $0x28] sm:$0xf] %vm630, %v369
      %v655 = vld [vmem:[%s623 + $0x2c] sm:$0x1]
      %v656 = vsel %vm633, %v370, %v655
      %657 = vst [vmem:[%s623 + $0x2c] sm:$0x1] %v656
      %v658 = vld [vmem:[%s623 + $0x30] sm:$0xf]
      %v659 = vsel %vm626, %v377, %v658
      %660 = vst [vmem:[%s623 + $0x30] sm:$0xf] %v659
      %661 = vst.msk [vmem:[%s623 + $0x34] sm:$0xf] %vm630, %v386
      %v662 = vld [vmem:[%s623 + $0x38] sm:$0x1]
      %v663 = vsel %vm633, %v387, %v662
      %664 = vst [vmem:[%s623 + $0x38] sm:$0x1] %v663
      %v665 = vld [vmem:[%s623 + $0x3c] sm:$0xf]
      %v666 = vsel %vm626, %v394, %v665
      %667 = vst [vmem:[%s623 + $0x3c] sm:$0xf] %v666
      %668 = vst.msk [vmem:[%s623 + $0x40] sm:$0xf] %vm630, %v403
      %v669 = vld [vmem:[%s623 + $0x44] sm:$0x1]
      %v670 = vsel %vm633, %v404, %v669
      %671 = vst [vmem:[%s623 + $0x44] sm:$0x1] %v670
      %v672 = vld [vmem:[%s623 + $0x48] sm:$0xf]
      %v673 = vsel %vm626, %v411, %v672
      %674 = vst [vmem:[%s623 + $0x48] sm:$0xf] %v673
      %675 = vst.msk [vmem:[%s623 + $0x4c] sm:$0xf] %vm630, %v420
      %v676 = vld [vmem:[%s623 + $0x50] sm:$0x1]
      %v677 = vsel %vm633, %v421, %v676
      %678 = vst [vmem:[%s623 + $0x50] sm:$0x1] %v677
      %v679 = vld [vmem:[%s623 + $0x54] sm:$0xf]
      %v680 = vsel %vm626, %v428, %v679
      %681 = vst [vmem:[%s623 + $0x54] sm:$0xf] %v680
      %682 = vst.msk [vmem:[%s623 + $0x58] sm:$0xf] %vm630, %v437
      %v683 = vld [vmem:[%s623 + $0x5c] sm:$0x1]
      %v684 = vsel %vm633, %v438, %v683
      %685 = vst [vmem:[%s623 + $0x5c] sm:$0x1] %v684
      %v686 = vld [vmem:[%s623 + $0x60] sm:$0xf]
      %v687 = vsel %vm626, %v445, %v686
      %688 = vst [vmem:[%s623 + $0x60] sm:$0xf] %v687
      %689 = vst.msk [vmem:[%s623 + $0x64] sm:$0xf] %vm630, %v454
      %v690 = vld [vmem:[%s623 + $0x68] sm:$0x1]
      %v691 = vsel %vm633, %v455, %v690
      %692 = vst [vmem:[%s623 + $0x68] sm:$0x1] %v691
      %v693 = vld [vmem:[%s623 + $0x6c] sm:$0xf]
      %v694 = vsel %vm626, %v462, %v693
      %695 = vst [vmem:[%s623 + $0x6c] sm:$0xf] %v694
      %696 = vst.msk [vmem:[%s623 + $0x70] sm:$0xf] %vm630, %v471
      %v697 = vld [vmem:[%s623 + $0x74] sm:$0x1]
      %v698 = vsel %vm633, %v472, %v697
      %699 = vst [vmem:[%s623 + $0x74] sm:$0x1] %v698
      %v700 = vld [vmem:[%s623 + $0x78] sm:$0xf]
      %v701 = vsel %vm626, %v479, %v700
      %702 = vst [vmem:[%s623 + $0x78] sm:$0xf] %v701
      %703 = vst.msk [vmem:[%s623 + $0x7c] sm:$0xf] %vm630, %v488
      %v704 = vld [vmem:[%s623 + $0x80] sm:$0x1]
      %v705 = vsel %vm633, %v489, %v704
      %706 = vst [vmem:[%s623 + $0x80] sm:$0x1] %v705
      %v707 = vld [vmem:[%s623 + $0x84] sm:$0xf]
      %v708 = vsel %vm626, %v496, %v707
      %709 = vst [vmem:[%s623 + $0x84] sm:$0xf] %v708
      %710 = vst.msk [vmem:[%s623 + $0x88] sm:$0xf] %vm630, %v505
      %v711 = vld [vmem:[%s623 + $0x8c] sm:$0x1]
      %v712 = vsel %vm633, %v506, %v711
      %713 = vst [vmem:[%s623 + $0x8c] sm:$0x1] %v712
      %v714 = vld [vmem:[%s623 + $0x90] sm:$0xf]
      %v715 = vsel %vm626, %v513, %v714
      %716 = vst [vmem:[%s623 + $0x90] sm:$0xf] %v715
      %717 = vst.msk [vmem:[%s623 + $0x94] sm:$0xf] %vm630, %v522
      %v718 = vld [vmem:[%s623 + $0x98] sm:$0x1]
      %v719 = vsel %vm633, %v523, %v718
      %720 = vst [vmem:[%s623 + $0x98] sm:$0x1] %v719
      %v721 = vld [vmem:[%s623 + $0x9c] sm:$0xf]
      %v722 = vsel %vm626, %v530, %v721
      %723 = vst [vmem:[%s623 + $0x9c] sm:$0xf] %v722
      %724 = vst.msk [vmem:[%s623 + $0xa0] sm:$0xf] %vm630, %v539
      %v725 = vld [vmem:[%s623 + $0xa4] sm:$0x1]
      %v726 = vsel %vm633, %v540, %v725
      %727 = vst [vmem:[%s623 + $0xa4] sm:$0x1] %v726
      %v728 = vld [vmem:[%s623 + $0xa8] sm:$0xf]
      %v729 = vsel %vm626, %v547, %v728
      %730 = vst [vmem:[%s623 + $0xa8] sm:$0xf] %v729
      %731 = vst.msk [vmem:[%s623 + $0xac] sm:$0xf] %vm630, %v556
      %v732 = vld [vmem:[%s623 + $0xb0] sm:$0x1]
      %v733 = vsel %vm633, %v557, %v732
      %734 = vst [vmem:[%s623 + $0xb0] sm:$0x1] %v733
      %v735 = vld [vmem:[%s623 + $0xb4] sm:$0xf]
      %v736 = vsel %vm626, %v564, %v735
      %737 = vst [vmem:[%s623 + $0xb4] sm:$0xf] %v736
      %738 = vst.msk [vmem:[%s623 + $0xb8] sm:$0xf] %vm630, %v573
      %v739 = vld [vmem:[%s623 + $0xbc] sm:$0x1]
      %v740 = vsel %vm633, %v574, %v739
      %741 = vst [vmem:[%s623 + $0xbc] sm:$0x1] %v740
      %v742 = vld [vmem:[#allocation2] sm:$0xf]
      %v743 = vsel %vm626, %v326, %v742
      %744 = vst [vmem:[#allocation2] sm:$0xf] %v743
      %745 = vst.msk [vmem:[#allocation2 + $0x4] sm:$0xf] %vm630, %v335
      %v746 = vld [vmem:[#allocation2 + $0x8] sm:$0x1]
      %v747 = vsel %vm633, %v336, %v746
      %748 = vst [vmem:[#allocation2 + $0x8] sm:$0x1] %v747
      %s749 = scalar_lea.vmem [#allocation2], 204
      %v750 = vld [vmem:[%s749] sm:$0xf]
      %v751 = vsel %vm626, %v547, %v750
      %752 = vst [vmem:[%s749] sm:$0xf] %v751
      %753 = vst.msk [vmem:[%s749 + $0x4] sm:$0xf] %vm630, %v556
      %v754 = vld [vmem:[%s749 + $0x8] sm:$0x1]
      %v755 = vsel %vm633, %v557, %v754
      %756 = vst [vmem:[%s749 + $0x8] sm:$0x1] %v755
      %v757 = vld [vmem:[#allocation2] sm:$0x2]
      %v758 = vld [vmem:[#allocation2 + $0xc] sm:$0x2]
      %v759 = vld [vmem:[#allocation2 + $0x18] sm:$0x2]
      %v760 = vld [vmem:[#allocation2 + $0x24] sm:$0x2]
      %v761 = vld [vmem:[#allocation2 + $0x30] sm:$0x2]
      %v762 = vld [vmem:[#allocation2 + $0x3c] sm:$0x2]
      %v763 = vld [vmem:[#allocation2 + $0x48] sm:$0x2]
      %v764 = vld [vmem:[#allocation2 + $0x54] sm:$0x2]
      %v765 = vld [vmem:[#allocation2 + $0x60] sm:$0x2]
      %v766 = vld [vmem:[#allocation2 + $0x6c] sm:$0x2]
      %v767 = vld [vmem:[#allocation2 + $0x78] sm:$0x2]
      %v768 = vld [vmem:[#allocation2 + $0x84] sm:$0x2]
      %v769 = vld [vmem:[#allocation2 + $0x90] sm:$0x2]
      %v770 = vld [vmem:[#allocation2 + $0x9c] sm:$0x2]
      %v771 = vld [vmem:[#allocation2 + $0xa8] sm:$0x2]
      %v772 = vld [vmem:[#allocation2 + $0xb4] sm:$0x2]
      %v773 = vld [vmem:[#allocation2 + $0xc0] sm:$0x2]
      %v774 = vld [vmem:[#allocation2 + $0xcc] sm:$0x2]
      %v793 = vrot.slane %v757, 5
      %v794 = vrot.slane %v793, 4
      %v795 = vrot.slane %v758, 5
      %v796 = vrot.slane %v795, 4
      %v797 = vrot.slane %v759, 5
      %v798 = vrot.slane %v797, 4
      %v799 = vrot.slane %v760, 5
      %v800 = vrot.slane %v799, 4
      %v801 = vrot.slane %v761, 5
      %v802 = vrot.slane %v801, 4
      %v803 = vrot.slane %v762, 5
      %v804 = vrot.slane %v803, 4
      %v805 = vrot.slane %v763, 5
      %v806 = vrot.slane %v805, 4
      %v807 = vrot.slane %v764, 5
      %v808 = vrot.slane %v807, 4
      %v809 = vrot.slane %v765, 5
      %v810 = vrot.slane %v809, 4
      %v811 = vrot.slane %v766, 5
      %v812 = vrot.slane %v811, 4
      %v813 = vrot.slane %v767, 5
      %v814 = vrot.slane %v813, 4
      %v815 = vrot.slane %v768, 5
      %v816 = vrot.slane %v815, 4
      %v817 = vrot.slane %v769, 5
      %v818 = vrot.slane %v817, 4
      %v819 = vrot.slane %v770, 5
      %v820 = vrot.slane %v819, 4
      %v821 = vrot.slane %v771, 5
      %v822 = vrot.slane %v821, 4
      %v823 = vrot.slane %v772, 5
      %v824 = vrot.slane %v823, 4
      %v825 = vrot.slane %v773, 5
      %v826 = vrot.slane %v825, 4
      %v827 = vrot.slane %v774, 5
      %v828 = vrot.slane %v827, 4
      %v847 = vld [vmem:[#allocation2] sm:$0x1]
      %v848 = vsel %vm633, %v794, %v847
      %849 = vst [vmem:[#allocation2] sm:$0x1] %v848
      %v850 = vld [vmem:[#allocation2 + $0xc] sm:$0x1]
      %v851 = vsel %vm633, %v796, %v850
      %852 = vst [vmem:[#allocation2 + $0xc] sm:$0x1] %v851
      %v853 = vld [vmem:[#allocation2 + $0x18] sm:$0x1]
      %v854 = vsel %vm633, %v798, %v853
      %855 = vst [vmem:[#allocation2 + $0x18] sm:$0x1] %v854
      %v856 = vld [vmem:[#allocation2 + $0x24] sm:$0x1]
      %v857 = vsel %vm633, %v800, %v856
      %858 = vst [vmem:[#allocation2 + $0x24] sm:$0x1] %v857
      %v859 = vld [vmem:[#allocation2 + $0x30] sm:$0x1]
      %v860 = vsel %vm633, %v802, %v859
      %861 = vst [vmem:[#allocation2 + $0x30] sm:$0x1] %v860
      %v862 = vld [vmem:[#allocation2 + $0x3c] sm:$0x1]
      %v863 = vsel %vm633, %v804, %v862
      %864 = vst [vmem:[#allocation2 + $0x3c] sm:$0x1] %v863
      %v865 = vld [vmem:[#allocation2 + $0x48] sm:$0x1]
      %v866 = vsel %vm633, %v806, %v865
      %867 = vst [vmem:[#allocation2 + $0x48] sm:$0x1] %v866
      %v868 = vld [vmem:[#allocation2 + $0x54] sm:$0x1]
      %v869 = vsel %vm633, %v808, %v868
      %870 = vst [vmem:[#allocation2 + $0x54] sm:$0x1] %v869
      %v871 = vld [vmem:[#allocation2 + $0x60] sm:$0x1]
      %v872 = vsel %vm633, %v810, %v871
      %873 = vst [vmem:[#allocation2 + $0x60] sm:$0x1] %v872
      %v874 = vld [vmem:[#allocation2 + $0x6c] sm:$0x1]
      %v875 = vsel %vm633, %v812, %v874
      %876 = vst [vmem:[#allocation2 + $0x6c] sm:$0x1] %v875
      %v877 = vld [vmem:[#allocation2 + $0x78] sm:$0x1]
      %v878 = vsel %vm633, %v814, %v877
      %879 = vst [vmem:[#allocation2 + $0x78] sm:$0x1] %v878
      %v880 = vld [vmem:[#allocation2 + $0x84] sm:$0x1]
      %v881 = vsel %vm633, %v816, %v880
      %882 = vst [vmem:[#allocation2 + $0x84] sm:$0x1] %v881
      %v883 = vld [vmem:[#allocation2 + $0x90] sm:$0x1]
      %v884 = vsel %vm633, %v818, %v883
      %885 = vst [vmem:[#allocation2 + $0x90] sm:$0x1] %v884
      %v886 = vld [vmem:[#allocation2 + $0x9c] sm:$0x1]
      %v887 = vsel %vm633, %v820, %v886
      %888 = vst [vmem:[#allocation2 + $0x9c] sm:$0x1] %v887
      %v889 = vld [vmem:[#allocation2 + $0xa8] sm:$0x1]
      %v890 = vsel %vm633, %v822, %v889
      %891 = vst [vmem:[#allocation2 + $0xa8] sm:$0x1] %v890
      %v892 = vld [vmem:[#allocation2 + $0xb4] sm:$0x1]
      %v893 = vsel %vm633, %v824, %v892
      %894 = vst [vmem:[#allocation2 + $0xb4] sm:$0x1] %v893
      %v895 = vld [vmem:[#allocation2 + $0xc0] sm:$0x1]
      %v896 = vsel %vm633, %v826, %v895
      %897 = vst [vmem:[#allocation2 + $0xc0] sm:$0x1] %v896
      %v898 = vld [vmem:[#allocation2 + $0xcc] sm:$0x1]
      %v899 = vsel %vm633, %v828, %v898
      %900 = vst [vmem:[#allocation2 + $0xcc] sm:$0x1] %v899
      %v901 = vld [vmem:[#allocation2 + $0x4] sm:$0x8]
      %v902 = vld [vmem:[#allocation2 + $0x10] sm:$0x8]
      %v903 = vld [vmem:[#allocation2 + $0x1c] sm:$0x8]
      %v904 = vld [vmem:[#allocation2 + $0x28] sm:$0x8]
      %v905 = vld [vmem:[#allocation2 + $0x34] sm:$0x8]
      %v906 = vld [vmem:[#allocation2 + $0x40] sm:$0x8]
      %v907 = vld [vmem:[#allocation2 + $0x4c] sm:$0x8]
      %v908 = vld [vmem:[#allocation2 + $0x58] sm:$0x8]
      %v909 = vld [vmem:[#allocation2 + $0x64] sm:$0x8]
      %v910 = vld [vmem:[#allocation2 + $0x70] sm:$0x8]
      %v911 = vld [vmem:[#allocation2 + $0x7c] sm:$0x8]
      %v912 = vld [vmem:[#allocation2 + $0x88] sm:$0x8]
      %v913 = vld [vmem:[#allocation2 + $0x94] sm:$0x8]
      %v914 = vld [vmem:[#allocation2 + $0xa0] sm:$0x8]
      %v915 = vld [vmem:[#allocation2 + $0xac] sm:$0x8]
      %v916 = vld [vmem:[#allocation2 + $0xb8] sm:$0x8]
      %v917 = vld [vmem:[#allocation2 + $0xc4] sm:$0x8]
      %v918 = vld [vmem:[#allocation2 + $0xd0] sm:$0x8]
      %v937 = vrot.slane %v901, 7
      %v938 = vrot.slane %v937, 4
      %v939 = vrot.slane %v902, 7
      %v940 = vrot.slane %v939, 4
      %v941 = vrot.slane %v903, 7
      %v942 = vrot.slane %v941, 4
      %v943 = vrot.slane %v904, 7
      %v944 = vrot.slane %v943, 4
      %v945 = vrot.slane %v905, 7
      %v946 = vrot.slane %v945, 4
      %v947 = vrot.slane %v906, 7
      %v948 = vrot.slane %v947, 4
      %v949 = vrot.slane %v907, 7
      %v950 = vrot.slane %v949, 4
      %v951 = vrot.slane %v908, 7
      %v952 = vrot.slane %v951, 4
      %v953 = vrot.slane %v909, 7
      %v954 = vrot.slane %v953, 4
      %v955 = vrot.slane %v910, 7
      %v956 = vrot.slane %v955, 4
      %v957 = vrot.slane %v911, 7
      %v958 = vrot.slane %v957, 4
      %v959 = vrot.slane %v912, 7
      %v960 = vrot.slane %v959, 4
      %v961 = vrot.slane %v913, 7
      %v962 = vrot.slane %v961, 4
      %v963 = vrot.slane %v914, 7
      %v964 = vrot.slane %v963, 4
      %v965 = vrot.slane %v915, 7
      %v966 = vrot.slane %v965, 4
      %v967 = vrot.slane %v916, 7
      %v968 = vrot.slane %v967, 4
      %v969 = vrot.slane %v917, 7
      %v970 = vrot.slane %v969, 4
      %v971 = vrot.slane %v918, 7
      %v972 = vrot.slane %v971, 4
      %vm991 = vmand %vm632, %vm625
      %v992 = vld [vmem:[#allocation2 + $0x8] sm:$0x1]
      %v993 = vsel %vm991, %v938, %v992
      %994 = vst [vmem:[#allocation2 + $0x8] sm:$0x1] %v993
      %v995 = vld [vmem:[#allocation2 + $0x14] sm:$0x1]
      %v996 = vsel %vm991, %v940, %v995
      %997 = vst [vmem:[#allocation2 + $0x14] sm:$0x1] %v996
      %v998 = vld [vmem:[#allocation2 + $0x20] sm:$0x1]
      %v999 = vsel %vm991, %v942, %v998
      %1000 = vst [vmem:[#allocation2 + $0x20] sm:$0x1] %v999
      %v1001 = vld [vmem:[#allocation2 + $0x2c] sm:$0x1]
      %v1002 = vsel %vm991, %v944, %v1001
      %1003 = vst [vmem:[#allocation2 + $0x2c] sm:$0x1] %v1002
      %v1004 = vld [vmem:[#allocation2 + $0x38] sm:$0x1]
      %v1005 = vsel %vm991, %v946, %v1004
      %1006 = vst [vmem:[#allocation2 + $0x38] sm:$0x1] %v1005
      %v1007 = vld [vmem:[#allocation2 + $0x44] sm:$0x1]
      %v1008 = vsel %vm991, %v948, %v1007
      %1009 = vst [vmem:[#allocation2 + $0x44] sm:$0x1] %v1008
      %v1010 = vld [vmem:[#allocation2 + $0x50] sm:$0x1]
      %v1011 = vsel %vm991, %v950, %v1010
      %1012 = vst [vmem:[#allocation2 + $0x50] sm:$0x1] %v1011
      %v1013 = vld [vmem:[#allocation2 + $0x5c] sm:$0x1]
      %v1014 = vsel %vm991, %v952, %v1013
      %1015 = vst [vmem:[#allocation2 + $0x5c] sm:$0x1] %v1014
      %v1016 = vld [vmem:[#allocation2 + $0x68] sm:$0x1]
      %v1017 = vsel %vm991, %v954, %v1016
      %1018 = vst [vmem:[#allocation2 + $0x68] sm:$0x1] %v1017
      %v1019 = vld [vmem:[#allocation2 + $0x74] sm:$0x1]
      %v1020 = vsel %vm991, %v956, %v1019
      %1021 = vst [vmem:[#allocation2 + $0x74] sm:$0x1] %v1020
      %v1022 = vld [vmem:[#allocation2 + $0x80] sm:$0x1]
      %v1023 = vsel %vm991, %v958, %v1022
      %1024 = vst [vmem:[#allocation2 + $0x80] sm:$0x1] %v1023
      %v1025 = vld [vmem:[#allocation2 + $0x8c] sm:$0x1]
      %v1026 = vsel %vm991, %v960, %v1025
      %1027 = vst [vmem:[#allocation2 + $0x8c] sm:$0x1] %v1026
      %v1028 = vld [vmem:[#allocation2 + $0x98] sm:$0x1]
      %v1029 = vsel %vm991, %v962, %v1028
      %1030 = vst [vmem:[#allocation2 + $0x98] sm:$0x1] %v1029
      %v1031 = vld [vmem:[#allocation2 + $0xa4] sm:$0x1]
      %v1032 = vsel %vm991, %v964, %v1031
      %1033 = vst [vmem:[#allocation2 + $0xa4] sm:$0x1] %v1032
      %v1034 = vld [vmem:[#allocation2 + $0xb0] sm:$0x1]
      %v1035 = vsel %vm991, %v966, %v1034
      %1036 = vst [vmem:[#allocation2 + $0xb0] sm:$0x1] %v1035
      %v1037 = vld [vmem:[#allocation2 + $0xbc] sm:$0x1]
      %v1038 = vsel %vm991, %v968, %v1037
      %1039 = vst [vmem:[#allocation2 + $0xbc] sm:$0x1] %v1038
      %v1040 = vld [vmem:[#allocation2 + $0xc8] sm:$0x1]
      %v1041 = vsel %vm991, %v970, %v1040
      %1042 = vst [vmem:[#allocation2 + $0xc8] sm:$0x1] %v1041
      %v1043 = vld [vmem:[#allocation2 + $0xd4] sm:$0x1]
      %v1044 = vsel %vm991, %v972, %v1043
      %1045 = vst [vmem:[#allocation2 + $0xd4] sm:$0x1] %v1044
      %v1046 = vld [vmem:[#allocation2] sm:$0xf]
      %v1047 = vld [vmem:[#allocation2 + $0x4] sm:$0xf]
      %v1048 = vld [vmem:[#allocation2 + $0x8] sm:$0x1]
      %v1049 = vld [vmem:[#allocation2 + $0xc] sm:$0xf]
      %v1050 = vld [vmem:[#allocation2 + $0x10] sm:$0xf]
      %v1051 = vld [vmem:[#allocation2 + $0x14] sm:$0x1]
      %v1052 = vld [vmem:[#allocation2 + $0x18] sm:$0xf]
      %v1053 = vld [vmem:[#allocation2 + $0x1c] sm:$0xf]
      %v1054 = vld [vmem:[#allocation2 + $0x20] sm:$0x1]
      %v1055 = vld [vmem:[#allocation2 + $0x24] sm:$0xf]
      %v1056 = vld [vmem:[#allocation2 + $0x28] sm:$0xf]
      %v1057 = vld [vmem:[#allocation2 + $0x2c] sm:$0x1]
      %v1058 = vld [vmem:[#allocation2 + $0x30] sm:$0xf]
      %v1059 = vld [vmem:[#allocation2 + $0x34] sm:$0xf]
      %v1060 = vld [vmem:[#allocation2 + $0x38] sm:$0x1]
      %v1061 = vld [vmem:[#allocation2 + $0x3c] sm:$0xf]
      %v1062 = vld [vmem:[#allocation2 + $0x40] sm:$0xf]
      %v1063 = vld [vmem:[#allocation2 + $0x44] sm:$0x1]
      %v1064 = vld [vmem:[#allocation2 + $0x48] sm:$0xf]
      %v1065 = vld [vmem:[#allocation2 + $0x4c] sm:$0xf]
      %v1066 = vld [vmem:[#allocation2 + $0x50] sm:$0x1]
      %v1067 = vld [vmem:[#allocation2 + $0x54] sm:$0xf]
      %v1068 = vld [vmem:[#allocation2 + $0x58] sm:$0xf]
      %v1069 = vld [vmem:[#allocation2 + $0x5c] sm:$0x1]
      %v1070 = vld [vmem:[#allocation2 + $0x60] sm:$0xf]
      %v1071 = vld [vmem:[#allocation2 + $0x64] sm:$0xf]
      %v1072 = vld [vmem:[#allocation2 + $0x68] sm:$0x1]
      %v1073 = vld [vmem:[#allocation2 + $0x6c] sm:$0xf]
      %v1074 = vld [vmem:[#allocation2 + $0x70] sm:$0xf]
      %v1075 = vld [vmem:[#allocation2 + $0x74] sm:$0x1]
      %v1076 = vld [vmem:[#allocation2 + $0x78] sm:$0xf]
      %v1077 = vld [vmem:[#allocation2 + $0x7c] sm:$0xf]
      %v1078 = vld [vmem:[#allocation2 + $0x80] sm:$0x1]
      %v1079 = vld [vmem:[#allocation2 + $0x84] sm:$0xf]
      %v1080 = vld [vmem:[#allocation2 + $0x88] sm:$0xf]
      %v1081 = vld [vmem:[#allocation2 + $0x8c] sm:$0x1]
      %v1082 = vld [vmem:[#allocation2 + $0x90] sm:$0xf]
      %v1083 = vld [vmem:[#allocation2 + $0x94] sm:$0xf]
      %v1084 = vld [vmem:[#allocation2 + $0x98] sm:$0x1]
      %v1085 = vld [vmem:[#allocation2 + $0x9c] sm:$0xf]
      %v1086 = vld [vmem:[#allocation2 + $0xa0] sm:$0xf]
      %v1087 = vld [vmem:[#allocation2 + $0xa4] sm:$0x1]
      %v1088 = vld [vmem:[#allocation2 + $0xa8] sm:$0xf]
      %v1089 = vld [vmem:[#allocation2 + $0xac] sm:$0xf]
      %v1090 = vld [vmem:[#allocation2 + $0xb0] sm:$0x1]
      %v1091 = vld [vmem:[#allocation2 + $0xb4] sm:$0xf]
      %v1092 = vld [vmem:[#allocation2 + $0xb8] sm:$0xf]
      %v1093 = vld [vmem:[#allocation2 + $0xbc] sm:$0x1]
      %v1126 = vunpack.c.l.b16 %v1046
      %v1127 = vunpack.c.l.b16 %v1047
      %v1128 = vunpack.c.l.b16 %v1049
      %v1129 = vunpack.c.l.b16 %v1050
      %v1130 = vunpack.c.l.b16 %v1052
      %v1131 = vunpack.c.l.b16 %v1053
      %v1132 = vunpack.c.l.b16 %v1055
      %v1133 = vunpack.c.l.b16 %v1056
      %v1134 = vunpack.c.l.b16 %v1058
      %v1135 = vunpack.c.l.b16 %v1059
      %v1136 = vunpack.c.l.b16 %v1061
      %v1137 = vunpack.c.l.b16 %v1062
      %v1138 = vunpack.c.l.b16 %v1064
      %v1139 = vunpack.c.l.b16 %v1065
      %v1140 = vunpack.c.l.b16 %v1067
      %v1141 = vunpack.c.l.b16 %v1068
      %v1142 = vunpack.c.l.b16 %v1070
      %v1143 = vunpack.c.l.b16 %v1071
      %v1144 = vunpack.c.l.b16 %v1073
      %v1145 = vunpack.c.l.b16 %v1074
      %v1146 = vunpack.c.l.b16 %v1076
      %v1147 = vunpack.c.l.b16 %v1077
      %v1148 = vunpack.c.l.b16 %v1079
      %v1149 = vunpack.c.l.b16 %v1080
      %v1150 = vunpack.c.l.b16 %v1082
      %v1151 = vunpack.c.l.b16 %v1083
      %v1152 = vunpack.c.l.b16 %v1085
      %v1153 = vunpack.c.l.b16 %v1086
      %v1154 = vunpack.c.l.b16 %v1088
      %v1155 = vunpack.c.l.b16 %v1089
      %v1156 = vunpack.c.l.b16 %v1091
      %v1157 = vunpack.c.l.b16 %v1092
      %v1158 = vpack.c.b16 %v1127, %v1126
      %v1159 = vpack.c.b16 %v1129, %v1128
      %v1160 = vpack.c.b16 %v1131, %v1130
      %v1161 = vpack.c.b16 %v1133, %v1132
      %v1162 = vpack.c.b16 %v1135, %v1134
      %v1163 = vpack.c.b16 %v1137, %v1136
      %v1164 = vpack.c.b16 %v1139, %v1138
      %v1165 = vpack.c.b16 %v1141, %v1140
      %v1166 = vpack.c.b16 %v1143, %v1142
      %v1167 = vpack.c.b16 %v1145, %v1144
      %v1168 = vpack.c.b16 %v1147, %v1146
      %v1169 = vpack.c.b16 %v1149, %v1148
      %v1170 = vpack.c.b16 %v1151, %v1150
      %v1171 = vpack.c.b16 %v1153, %v1152
      %v1172 = vpack.c.b16 %v1155, %v1154
      %v1173 = vpack.c.b16 %v1157, %v1156
      %v1190 = vunpack.c.l.b16 %v1048
      %v1191 = vunpack.c.l.b16 %v1051
      %v1192 = vunpack.c.l.b16 %v1054
      %v1193 = vunpack.c.l.b16 %v1057
      %v1194 = vunpack.c.l.b16 %v1060
      %v1195 = vunpack.c.l.b16 %v1063
      %v1196 = vunpack.c.l.b16 %v1066
      %v1197 = vunpack.c.l.b16 %v1069
      %v1198 = vunpack.c.l.b16 %v1072
      %v1199 = vunpack.c.l.b16 %v1075
      %v1200 = vunpack.c.l.b16 %v1078
      %v1201 = vunpack.c.l.b16 %v1081
      %v1202 = vunpack.c.l.b16 %v1084
      %v1203 = vunpack.c.l.b16 %v1087
      %v1204 = vunpack.c.l.b16 %v1090
      %v1205 = vunpack.c.l.b16 %v1093
      %v1206 = vpack.c.b16 %v1190, %v1190
      %v1207 = vpack.c.b16 %v1191, %v1191
      %v1208 = vpack.c.b16 %v1192, %v1192
      %v1209 = vpack.c.b16 %v1193, %v1193
      %v1210 = vpack.c.b16 %v1194, %v1194
      %v1211 = vpack.c.b16 %v1195, %v1195
      %v1212 = vpack.c.b16 %v1196, %v1196
      %v1213 = vpack.c.b16 %v1197, %v1197
      %v1214 = vpack.c.b16 %v1198, %v1198
      %v1215 = vpack.c.b16 %v1199, %v1199
      %v1216 = vpack.c.b16 %v1200, %v1200
      %v1217 = vpack.c.b16 %v1201, %v1201
      %v1218 = vpack.c.b16 %v1202, %v1202
      %v1219 = vpack.c.b16 %v1203, %v1203
      %v1220 = vpack.c.b16 %v1204, %v1204
      %v1221 = vpack.c.b16 %v1205, %v1205
      %vm1222 = vsmask.f32 7424
      %v1224 = vshrl.u32 %v1158, 16
      %v1226 = vshll.u32 %v1158, 16
      %v1228 = vrot.slane %v1226, 1
      %v1229 = vor.u32 %v1224, %v1228
      %v1231 = vshll.u32 %v1206, 16
      %v1233 = vrot.slane %v1231, 1
      %v1234 = vsel %vm1222, %v1229, %v1233
      %v1236 = vshrl.u32 %v1159, 16
      %v1238 = vshll.u32 %v1159, 16
      %v1240 = vrot.slane %v1238, 1
      %v1241 = vor.u32 %v1236, %v1240
      %v1243 = vshll.u32 %v1207, 16
      %v1245 = vrot.slane %v1243, 1
      %v1246 = vsel %vm1222, %v1241, %v1245
      %v1248 = vshrl.u32 %v1160, 16
      %v1250 = vshll.u32 %v1160, 16
      %v1252 = vrot.slane %v1250, 1
      %v1253 = vor.u32 %v1248, %v1252
      %v1255 = vshll.u32 %v1208, 16
      %v1257 = vrot.slane %v1255, 1
      %v1258 = vsel %vm1222, %v1253, %v1257
      %v1260 = vshrl.u32 %v1161, 16
      %v1262 = vshll.u32 %v1161, 16
      %v1264 = vrot.slane %v1262, 1
      %v1265 = vor.u32 %v1260, %v1264
      %v1267 = vshll.u32 %v1209, 16
      %v1269 = vrot.slane %v1267, 1
      %v1270 = vsel %vm1222, %v1265, %v1269
      %v1272 = vshrl.u32 %v1162, 16
      %v1274 = vshll.u32 %v1162, 16
      %v1276 = vrot.slane %v1274, 1
      %v1277 = vor.u32 %v1272, %v1276
      %v1279 = vshll.u32 %v1210, 16
      %v1281 = vrot.slane %v1279, 1
      %v1282 = vsel %vm1222, %v1277, %v1281
      %v1284 = vshrl.u32 %v1163, 16
      %v1286 = vshll.u32 %v1163, 16
      %v1288 = vrot.slane %v1286, 1
      %v1289 = vor.u32 %v1284, %v1288
      %v1291 = vshll.u32 %v1211, 16
      %v1293 = vrot.slane %v1291, 1
      %v1294 = vsel %vm1222, %v1289, %v1293
      %v1296 = vshrl.u32 %v1164, 16
      %v1298 = vshll.u32 %v1164, 16
      %v1300 = vrot.slane %v1298, 1
      %v1301 = vor.u32 %v1296, %v1300
      %v1303 = vshll.u32 %v1212, 16
      %v1305 = vrot.slane %v1303, 1
      %v1306 = vsel %vm1222, %v1301, %v1305
      %v1308 = vshrl.u32 %v1165, 16
      %v1310 = vshll.u32 %v1165, 16
      %v1312 = vrot.slane %v1310, 1
      %v1313 = vor.u32 %v1308, %v1312
      %v1315 = vshll.u32 %v1213, 16
      %v1317 = vrot.slane %v1315, 1
      %v1318 = vsel %vm1222, %v1313, %v1317
      %v1320 = vshrl.u32 %v1166, 16
      %v1322 = vshll.u32 %v1166, 16
      %v1324 = vrot.slane %v1322, 1
      %v1325 = vor.u32 %v1320, %v1324
      %v1327 = vshll.u32 %v1214, 16
      %v1329 = vrot.slane %v1327, 1
      %v1330 = vsel %vm1222, %v1325, %v1329
      %v1332 = vshrl.u32 %v1167, 16
      %v1334 = vshll.u32 %v1167, 16
      %v1336 = vrot.slane %v1334, 1
      %v1337 = vor.u32 %v1332, %v1336
      %v1339 = vshll.u32 %v1215, 16
      %v1341 = vrot.slane %v1339, 1
      %v1342 = vsel %vm1222, %v1337, %v1341
      %v1344 = vshrl.u32 %v1168, 16
      %v1346 = vshll.u32 %v1168, 16
      %v1348 = vrot.slane %v1346, 1
      %v1349 = vor.u32 %v1344, %v1348
      %v1351 = vshll.u32 %v1216, 16
      %v1353 = vrot.slane %v1351, 1
      %v1354 = vsel %vm1222, %v1349, %v1353
      %v1356 = vshrl.u32 %v1169, 16
      %v1358 = vshll.u32 %v1169, 16
      %v1360 = vrot.slane %v1358, 1
      %v1361 = vor.u32 %v1356, %v1360
      %v1363 = vshll.u32 %v1217, 16
      %v1365 = vrot.slane %v1363, 1
      %v1366 = vsel %vm1222, %v1361, %v1365
      %v1368 = vshrl.u32 %v1170, 16
      %v1370 = vshll.u32 %v1170, 16
      %v1372 = vrot.slane %v1370, 1
      %v1373 = vor.u32 %v1368, %v1372
      %v1375 = vshll.u32 %v1218, 16
      %v1377 = vrot.slane %v1375, 1
      %v1378 = vsel %vm1222, %v1373, %v1377
      %v1380 = vshrl.u32 %v1171, 16
      %v1382 = vshll.u32 %v1171, 16
      %v1384 = vrot.slane %v1382, 1
      %v1385 = vor.u32 %v1380, %v1384
      %v1387 = vshll.u32 %v1219, 16
      %v1389 = vrot.slane %v1387, 1
      %v1390 = vsel %vm1222, %v1385, %v1389
      %v1392 = vshrl.u32 %v1172, 16
      %v1394 = vshll.u32 %v1172, 16
      %v1396 = vrot.slane %v1394, 1
      %v1397 = vor.u32 %v1392, %v1396
      %v1399 = vshll.u32 %v1220, 16
      %v1401 = vrot.slane %v1399, 1
      %v1402 = vsel %vm1222, %v1397, %v1401
      %v1404 = vshrl.u32 %v1173, 16
      %v1406 = vshll.u32 %v1173, 16
      %v1408 = vrot.slane %v1406, 1
      %v1409 = vor.u32 %v1404, %v1408
      %v1411 = vshll.u32 %v1221, 16
      %v1413 = vrot.slane %v1411, 1
      %v1414 = vsel %vm1222, %v1409, %v1413
      %1415 = vrot.lane.b32.xlu0 %v1234, 4
      %v1416 = vpop.permute.xlu0 %1415
      %1417 = vrot.lane.b32.xlu0 %v1246, 4
      %v1418 = vpop.permute.xlu0 %1417
      %1419 = vrot.lane.b32.xlu0 %v1258, 4
      %v1420 = vpop.permute.xlu0 %1419
      %1421 = vrot.lane.b32.xlu0 %v1270, 4
      %v1422 = vpop.permute.xlu0 %1421
      %1423 = vrot.lane.b32.xlu0 %v1282, 4
      %v1424 = vpop.permute.xlu0 %1423
      %1425 = vrot.lane.b32.xlu0 %v1294, 4
      %v1426 = vpop.permute.xlu0 %1425
      %1427 = vrot.lane.b32.xlu0 %v1306, 4
      %v1428 = vpop.permute.xlu0 %1427
      %1429 = vrot.lane.b32.xlu0 %v1318, 4
      %v1430 = vpop.permute.xlu0 %1429
      %1431 = vrot.lane.b32.xlu0 %v1330, 4
      %v1432 = vpop.permute.xlu0 %1431
      %1433 = vrot.lane.b32.xlu0 %v1342, 4
      %v1434 = vpop.permute.xlu0 %1433
      %1435 = vrot.lane.b32.xlu0 %v1354, 4
      %v1436 = vpop.permute.xlu0 %1435
      %1437 = vrot.lane.b32.xlu0 %v1366, 4
      %v1438 = vpop.permute.xlu0 %1437
      %1439 = vrot.lane.b32.xlu0 %v1378, 4
      %v1440 = vpop.permute.xlu0 %1439
      %1441 = vrot.lane.b32.xlu0 %v1390, 4
      %v1442 = vpop.permute.xlu0 %1441
      %1443 = vrot.lane.b32.xlu0 %v1402, 4
      %v1444 = vpop.permute.xlu0 %1443
      %1445 = vrot.lane.b32.xlu0 %v1414, 4
      %v1446 = vpop.permute.xlu0 %1445
      %vm1447 = vcmask 1046528
      %v1448 = vrot.slane %v1158, 1
      %v1449 = vrot.slane %v1206, 1
      %v1450 = vsel %vm1447, %v1448, %v1449
      %v1451 = vrot.slane %v1159, 1
      %v1452 = vrot.slane %v1207, 1
      %v1453 = vsel %vm1447, %v1451, %v1452
      %v1454 = vrot.slane %v1160, 1
      %v1455 = vrot.slane %v1208, 1
      %v1456 = vsel %vm1447, %v1454, %v1455
      %v1457 = vrot.slane %v1161, 1
      %v1458 = vrot.slane %v1209, 1
      %v1459 = vsel %vm1447, %v1457, %v1458
      %v1460 = vrot.slane %v1162, 1
      %v1461 = vrot.slane %v1210, 1
      %v1462 = vsel %vm1447, %v1460, %v1461
      %v1463 = vrot.slane %v1163, 1
      %v1464 = vrot.slane %v1211, 1
      %v1465 = vsel %vm1447, %v1463, %v1464
      %v1466 = vrot.slane %v1164, 1
      %v1467 = vrot.slane %v1212, 1
      %v1468 = vsel %vm1447, %v1466, %v1467
      %v1469 = vrot.slane %v1165, 1
      %v1470 = vrot.slane %v1213, 1
      %v1471 = vsel %vm1447, %v1469, %v1470
      %v1472 = vrot.slane %v1166, 1
      %v1473 = vrot.slane %v1214, 1
      %v1474 = vsel %vm1447, %v1472, %v1473
      %v1475 = vrot.slane %v1167, 1
      %v1476 = vrot.slane %v1215, 1
      %v1477 = vsel %vm1447, %v1475, %v1476
      %v1478 = vrot.slane %v1168, 1
      %v1479 = vrot.slane %v1216, 1
      %v1480 = vsel %vm1447, %v1478, %v1479
      %v1481 = vrot.slane %v1169, 1
      %v1482 = vrot.slane %v1217, 1
      %v1483 = vsel %vm1447, %v1481, %v1482
      %v1484 = vrot.slane %v1170, 1
      %v1485 = vrot.slane %v1218, 1
      %v1486 = vsel %vm1447, %v1484, %v1485
      %v1487 = vrot.slane %v1171, 1
      %v1488 = vrot.slane %v1219, 1
      %v1489 = vsel %vm1447, %v1487, %v1488
      %v1490 = vrot.slane %v1172, 1
      %v1491 = vrot.slane %v1220, 1
      %v1492 = vsel %vm1447, %v1490, %v1491
      %v1493 = vrot.slane %v1173, 1
      %v1494 = vrot.slane %v1221, 1
      %v1495 = vsel %vm1447, %v1493, %v1494
      %1496 = vrot.lane.b32.xlu0 %v1450, 8
      %v1497 = vpop.permute.xlu0 %1496
      %1498 = vrot.lane.b32.xlu0 %v1453, 8
      %v1499 = vpop.permute.xlu0 %1498
      %1500 = vrot.lane.b32.xlu0 %v1456, 8
      %v1501 = vpop.permute.xlu0 %1500
      %1502 = vrot.lane.b32.xlu0 %v1459, 8
      %v1503 = vpop.permute.xlu0 %1502
      %1504 = vrot.lane.b32.xlu0 %v1462, 8
      %v1505 = vpop.permute.xlu0 %1504
      %1506 = vrot.lane.b32.xlu0 %v1465, 8
      %v1507 = vpop.permute.xlu0 %1506
      %1508 = vrot.lane.b32.xlu0 %v1468, 8
      %v1509 = vpop.permute.xlu0 %1508
      %1510 = vrot.lane.b32.xlu0 %v1471, 8
      %v1511 = vpop.permute.xlu0 %1510
      %1512 = vrot.lane.b32.xlu0 %v1474, 8
      %v1513 = vpop.permute.xlu0 %1512
      %1514 = vrot.lane.b32.xlu0 %v1477, 8
      %v1515 = vpop.permute.xlu0 %1514
      %1516 = vrot.lane.b32.xlu0 %v1480, 8
      %v1517 = vpop.permute.xlu0 %1516
      %1518 = vrot.lane.b32.xlu0 %v1483, 8
      %v1519 = vpop.permute.xlu0 %1518
      %1520 = vrot.lane.b32.xlu0 %v1486, 8
      %v1521 = vpop.permute.xlu0 %1520
      %1522 = vrot.lane.b32.xlu0 %v1489, 8
      %v1523 = vpop.permute.xlu0 %1522
      %1524 = vrot.lane.b32.xlu0 %v1492, 8
      %v1525 = vpop.permute.xlu0 %1524
      %1526 = vrot.lane.b32.xlu0 %v1495, 8
      %v1527 = vpop.permute.xlu0 %1526
      %vm1528 = vcmask 31744
      %v1530 = vsel %vm1528, %v1158, %v1416
      %v1532 = vsel %vm1528, %v1159, %v1418
      %v1534 = vsel %vm1528, %v1160, %v1420
      %v1536 = vsel %vm1528, %v1161, %v1422
      %v1538 = vsel %vm1528, %v1162, %v1424
      %v1540 = vsel %vm1528, %v1163, %v1426
      %v1542 = vsel %vm1528, %v1164, %v1428
      %v1544 = vsel %vm1528, %v1165, %v1430
      %v1546 = vsel %vm1528, %v1166, %v1432
      %v1548 = vsel %vm1528, %v1167, %v1434
      %v1550 = vsel %vm1528, %v1168, %v1436
      %v1552 = vsel %vm1528, %v1169, %v1438
      %v1554 = vsel %vm1528, %v1170, %v1440
      %v1556 = vsel %vm1528, %v1171, %v1442
      %v1558 = vsel %vm1528, %v1172, %v1444
      %v1560 = vsel %vm1528, %v1173, %v1446
      %vm1561 = vcmask 64512
      %v1563 = vsel %vm1561, %v1530, %v1497
      %v1565 = vsel %vm1561, %v1532, %v1499
      %v1567 = vsel %vm1561, %v1534, %v1501
      %v1569 = vsel %vm1561, %v1536, %v1503
      %v1571 = vsel %vm1561, %v1538, %v1505
      %v1573 = vsel %vm1561, %v1540, %v1507
      %v1575 = vsel %vm1561, %v1542, %v1509
      %v1577 = vsel %vm1561, %v1544, %v1511
      %v1579 = vsel %vm1561, %v1546, %v1513
      %v1581 = vsel %vm1561, %v1548, %v1515
      %v1583 = vsel %vm1561, %v1550, %v1517
      %v1585 = vsel %vm1561, %v1552, %v1519
      %v1587 = vsel %vm1561, %v1554, %v1521
      %v1589 = vsel %vm1561, %v1556, %v1523
      %v1591 = vsel %vm1561, %v1558, %v1525
      %v1593 = vsel %vm1561, %v1560, %v1527
      %v1594 = vld [vmem:[%s1] sm:$0xf]
      %v1595 = vld [vmem:[%s1 + $0x4] sm:$0x3]
      %v1596 = vld [vmem:[%s623] sm:$0xf]
      %v1597 = vld [vmem:[%s623 + $0x4] sm:$0xf]
      %v1598 = vld [vmem:[%s623 + $0x8] sm:$0x1]
      %v1599 = vld [vmem:[%s623 + $0xc] sm:$0xf]
      %v1600 = vld [vmem:[%s623 + $0x10] sm:$0xf]
      %v1601 = vld [vmem:[%s623 + $0x14] sm:$0x1]
      %v1602 = vld [vmem:[%s623 + $0x18] sm:$0xf]
      %v1603 = vld [vmem:[%s623 + $0x1c] sm:$0xf]
      %v1604 = vld [vmem:[%s623 + $0x20] sm:$0x1]
      %v1605 = vld [vmem:[%s623 + $0x24] sm:$0xf]
      %v1606 = vld [vmem:[%s623 + $0x28] sm:$0xf]
      %v1607 = vld [vmem:[%s623 + $0x2c] sm:$0x1]
      %v1608 = vld [vmem:[%s623 + $0x30] sm:$0xf]
      %v1609 = vld [vmem:[%s623 + $0x34] sm:$0xf]
      %v1610 = vld [vmem:[%s623 + $0x38] sm:$0x1]
      %v1611 = vld [vmem:[%s623 + $0x3c] sm:$0xf]
      %v1612 = vld [vmem:[%s623 + $0x40] sm:$0xf]
      %v1613 = vld [vmem:[%s623 + $0x44] sm:$0x1]
      %v1614 = vld [vmem:[%s623 + $0x48] sm:$0xf]
      %v1615 = vld [vmem:[%s623 + $0x4c] sm:$0xf]
      %v1616 = vld [vmem:[%s623 + $0x50] sm:$0x1]
      %v1617 = vld [vmem:[%s623 + $0x54] sm:$0xf]
      %v1618 = vld [vmem:[%s623 + $0x58] sm:$0xf]
      %v1619 = vld [vmem:[%s623 + $0x5c] sm:$0x1]
      %v1620 = vld [vmem:[%s623 + $0x60] sm:$0xf]
      %v1621 = vld [vmem:[%s623 + $0x64] sm:$0xf]
      %v1622 = vld [vmem:[%s623 + $0x68] sm:$0x1]
      %v1623 = vld [vmem:[%s623 + $0x6c] sm:$0xf]
      %v1624 = vld [vmem:[%s623 + $0x70] sm:$0xf]
      %v1625 = vld [vmem:[%s623 + $0x74] sm:$0x1]
      %v1626 = vld [vmem:[%s623 + $0x78] sm:$0xf]
      %v1627 = vld [vmem:[%s623 + $0x7c] sm:$0xf]
      %v1628 = vld [vmem:[%s623 + $0x80] sm:$0x1]
      %v1629 = vld [vmem:[%s623 + $0x84] sm:$0xf]
      %v1630 = vld [vmem:[%s623 + $0x88] sm:$0xf]
      %v1631 = vld [vmem:[%s623 + $0x8c] sm:$0x1]
      %v1632 = vld [vmem:[%s623 + $0x90] sm:$0xf]
      %v1633 = vld [vmem:[%s623 + $0x94] sm:$0xf]
      %v1634 = vld [vmem:[%s623 + $0x98] sm:$0x1]
      %v1635 = vld [vmem:[%s623 + $0x9c] sm:$0xf]
      %v1636 = vld [vmem:[%s623 + $0xa0] sm:$0xf]
      %v1637 = vld [vmem:[%s623 + $0xa4] sm:$0x1]
      %v1638 = vld [vmem:[%s623 + $0xa8] sm:$0xf]
      %v1639 = vld [vmem:[%s623 + $0xac] sm:$0xf]
      %v1640 = vld [vmem:[%s623 + $0xb0] sm:$0x1]
      %v1641 = vld [vmem:[%s623 + $0xb4] sm:$0xf]
      %v1642 = vld [vmem:[%s623 + $0xb8] sm:$0xf]
      %v1643 = vld [vmem:[%s623 + $0xbc] sm:$0x1]
      %v1676 = vunpack.c.l.b16 %v1596
      %v1677 = vunpack.c.l.b16 %v1597
      %v1678 = vunpack.c.l.b16 %v1599
      %v1679 = vunpack.c.l.b16 %v1600
      %v1680 = vunpack.c.l.b16 %v1602
      %v1681 = vunpack.c.l.b16 %v1603
      %v1682 = vunpack.c.l.b16 %v1605
      %v1683 = vunpack.c.l.b16 %v1606
      %v1684 = vunpack.c.l.b16 %v1608
      %v1685 = vunpack.c.l.b16 %v1609
      %v1686 = vunpack.c.l.b16 %v1611
      %v1687 = vunpack.c.l.b16 %v1612
      %v1688 = vunpack.c.l.b16 %v1614
      %v1689 = vunpack.c.l.b16 %v1615
      %v1690 = vunpack.c.l.b16 %v1617
      %v1691 = vunpack.c.l.b16 %v1618
      %v1692 = vunpack.c.l.b16 %v1620
      %v1693 = vunpack.c.l.b16 %v1621
      %v1694 = vunpack.c.l.b16 %v1623
      %v1695 = vunpack.c.l.b16 %v1624
      %v1696 = vunpack.c.l.b16 %v1626
      %v1697 = vunpack.c.l.b16 %v1627
      %v1698 = vunpack.c.l.b16 %v1629
      %v1699 = vunpack.c.l.b16 %v1630
      %v1700 = vunpack.c.l.b16 %v1632
      %v1701 = vunpack.c.l.b16 %v1633
      %v1702 = vunpack.c.l.b16 %v1635
      %v1703 = vunpack.c.l.b16 %v1636
      %v1704 = vunpack.c.l.b16 %v1638
      %v1705 = vunpack.c.l.b16 %v1639
      %v1706 = vunpack.c.l.b16 %v1641
      %v1707 = vunpack.c.l.b16 %v1642
      %v1708 = vpack.c.b16 %v1677, %v1676
      %v1709 = vpack.c.b16 %v1679, %v1678
      %v1710 = vpack.c.b16 %v1681, %v1680
      %v1711 = vpack.c.b16 %v1683, %v1682
      %v1712 = vpack.c.b16 %v1685, %v1684
      %v1713 = vpack.c.b16 %v1687, %v1686
      %v1714 = vpack.c.b16 %v1689, %v1688
      %v1715 = vpack.c.b16 %v1691, %v1690
      %v1716 = vpack.c.b16 %v1693, %v1692
      %v1717 = vpack.c.b16 %v1695, %v1694
      %v1718 = vpack.c.b16 %v1697, %v1696
      %v1719 = vpack.c.b16 %v1699, %v1698
      %v1720 = vpack.c.b16 %v1701, %v1700
      %v1721 = vpack.c.b16 %v1703, %v1702
      %v1722 = vpack.c.b16 %v1705, %v1704
      %v1723 = vpack.c.b16 %v1707, %v1706
      %v1740 = vunpack.c.l.b16 %v1598
      %v1741 = vunpack.c.l.b16 %v1601
      %v1742 = vunpack.c.l.b16 %v1604
      %v1743 = vunpack.c.l.b16 %v1607
      %v1744 = vunpack.c.l.b16 %v1610
      %v1745 = vunpack.c.l.b16 %v1613
      %v1746 = vunpack.c.l.b16 %v1616
      %v1747 = vunpack.c.l.b16 %v1619
      %v1748 = vunpack.c.l.b16 %v1622
      %v1749 = vunpack.c.l.b16 %v1625
      %v1750 = vunpack.c.l.b16 %v1628
      %v1751 = vunpack.c.l.b16 %v1631
      %v1752 = vunpack.c.l.b16 %v1634
      %v1753 = vunpack.c.l.b16 %v1637
      %v1754 = vunpack.c.l.b16 %v1640
      %v1755 = vunpack.c.l.b16 %v1643
      %v1756 = vpack.c.b16 %v1740, %v1740
      %v1757 = vpack.c.b16 %v1741, %v1741
      %v1758 = vpack.c.b16 %v1742, %v1742
      %v1759 = vpack.c.b16 %v1743, %v1743
      %v1760 = vpack.c.b16 %v1744, %v1744
      %v1761 = vpack.c.b16 %v1745, %v1745
      %v1762 = vpack.c.b16 %v1746, %v1746
      %v1763 = vpack.c.b16 %v1747, %v1747
      %v1764 = vpack.c.b16 %v1748, %v1748
      %v1765 = vpack.c.b16 %v1749, %v1749
      %v1766 = vpack.c.b16 %v1750, %v1750
      %v1767 = vpack.c.b16 %v1751, %v1751
      %v1768 = vpack.c.b16 %v1752, %v1752
      %v1769 = vpack.c.b16 %v1753, %v1753
      %v1770 = vpack.c.b16 %v1754, %v1754
      %v1771 = vpack.c.b16 %v1755, %v1755
      %v1773 = vshrl.u32 %v1708, 16
      %v1775 = vshll.u32 %v1708, 16
      %v1777 = vrot.slane %v1775, 1
      %v1778 = vor.u32 %v1773, %v1777
      %v1780 = vshll.u32 %v1756, 16
      %v1782 = vrot.slane %v1780, 1
      %v1783 = vsel %vm1222, %v1778, %v1782
      %v1785 = vshrl.u32 %v1709, 16
      %v1787 = vshll.u32 %v1709, 16
      %v1789 = vrot.slane %v1787, 1
      %v1790 = vor.u32 %v1785, %v1789
      %v1792 = vshll.u32 %v1757, 16
      %v1794 = vrot.slane %v1792, 1
      %v1795 = vsel %vm1222, %v1790, %v1794
      %v1797 = vshrl.u32 %v1710, 16
      %v1799 = vshll.u32 %v1710, 16
      %v1801 = vrot.slane %v1799, 1
      %v1802 = vor.u32 %v1797, %v1801
      %v1804 = vshll.u32 %v1758, 16
      %v1806 = vrot.slane %v1804, 1
      %v1807 = vsel %vm1222, %v1802, %v1806
      %v1809 = vshrl.u32 %v1711, 16
      %v1811 = vshll.u32 %v1711, 16
      %v1813 = vrot.slane %v1811, 1
      %v1814 = vor.u32 %v1809, %v1813
      %v1816 = vshll.u32 %v1759, 16
      %v1818 = vrot.slane %v1816, 1
      %v1819 = vsel %vm1222, %v1814, %v1818
      %v1821 = vshrl.u32 %v1712, 16
      %v1823 = vshll.u32 %v1712, 16
      %v1825 = vrot.slane %v1823, 1
      %v1826 = vor.u32 %v1821, %v1825
      %v1828 = vshll.u32 %v1760, 16
      %v1830 = vrot.slane %v1828, 1
      %v1831 = vsel %vm1222, %v1826, %v1830
      %v1833 = vshrl.u32 %v1713, 16
      %v1835 = vshll.u32 %v1713, 16
      %v1837 = vrot.slane %v1835, 1
      %v1838 = vor.u32 %v1833, %v1837
      %v1840 = vshll.u32 %v1761, 16
      %v1842 = vrot.slane %v1840, 1
      %v1843 = vsel %vm1222, %v1838, %v1842
      %v1845 = vshrl.u32 %v1714, 16
      %v1847 = vshll.u32 %v1714, 16
      %v1849 = vrot.slane %v1847, 1
      %v1850 = vor.u32 %v1845, %v1849
      %v1852 = vshll.u32 %v1762, 16
      %v1854 = vrot.slane %v1852, 1
      %v1855 = vsel %vm1222, %v1850, %v1854
      %v1857 = vshrl.u32 %v1715, 16
      %v1859 = vshll.u32 %v1715, 16
      %v1861 = vrot.slane %v1859, 1
      %v1862 = vor.u32 %v1857, %v1861
      %v1864 = vshll.u32 %v1763, 16
      %v1866 = vrot.slane %v1864, 1
      %v1867 = vsel %vm1222, %v1862, %v1866
      %v1869 = vshrl.u32 %v1716, 16
      %v1871 = vshll.u32 %v1716, 16
      %v1873 = vrot.slane %v1871, 1
      %v1874 = vor.u32 %v1869, %v1873
      %v1876 = vshll.u32 %v1764, 16
      %v1878 = vrot.slane %v1876, 1
      %v1879 = vsel %vm1222, %v1874, %v1878
      %v1881 = vshrl.u32 %v1717, 16
      %v1883 = vshll.u32 %v1717, 16
      %v1885 = vrot.slane %v1883, 1
      %v1886 = vor.u32 %v1881, %v1885
      %v1888 = vshll.u32 %v1765, 16
      %v1890 = vrot.slane %v1888, 1
      %v1891 = vsel %vm1222, %v1886, %v1890
      %v1893 = vshrl.u32 %v1718, 16
      %v1895 = vshll.u32 %v1718, 16
      %v1897 = vrot.slane %v1895, 1
      %v1898 = vor.u32 %v1893, %v1897
      %v1900 = vshll.u32 %v1766, 16
      %v1902 = vrot.slane %v1900, 1
      %v1903 = vsel %vm1222, %v1898, %v1902
      %v1905 = vshrl.u32 %v1719, 16
      %v1907 = vshll.u32 %v1719, 16
      %v1909 = vrot.slane %v1907, 1
      %v1910 = vor.u32 %v1905, %v1909
      %v1912 = vshll.u32 %v1767, 16
      %v1914 = vrot.slane %v1912, 1
      %v1915 = vsel %vm1222, %v1910, %v1914
      %v1917 = vshrl.u32 %v1720, 16
      %v1919 = vshll.u32 %v1720, 16
      %v1921 = vrot.slane %v1919, 1
      %v1922 = vor.u32 %v1917, %v1921
      %v1924 = vshll.u32 %v1768, 16
      %v1926 = vrot.slane %v1924, 1
      %v1927 = vsel %vm1222, %v1922, %v1926
      %v1929 = vshrl.u32 %v1721, 16
      %v1931 = vshll.u32 %v1721, 16
      %v1933 = vrot.slane %v1931, 1
      %v1934 = vor.u32 %v1929, %v1933
      %v1936 = vshll.u32 %v1769, 16
      %v1938 = vrot.slane %v1936, 1
      %v1939 = vsel %vm1222, %v1934, %v1938
      %v1941 = vshrl.u32 %v1722, 16
      %v1943 = vshll.u32 %v1722, 16
      %v1945 = vrot.slane %v1943, 1
      %v1946 = vor.u32 %v1941, %v1945
      %v1948 = vshll.u32 %v1770, 16
      %v1950 = vrot.slane %v1948, 1
      %v1951 = vsel %vm1222, %v1946, %v1950
      %v1953 = vshrl.u32 %v1723, 16
      %v1955 = vshll.u32 %v1723, 16
      %v1957 = vrot.slane %v1955, 1
      %v1958 = vor.u32 %v1953, %v1957
      %v1960 = vshll.u32 %v1771, 16
      %v1962 = vrot.slane %v1960, 1
      %v1963 = vsel %vm1222, %v1958, %v1962
      %1964 = vrot.lane.b32.xlu0 %v1783, 4
      %v1965 = vpop.permute.xlu0 %1964
      %1966 = vrot.lane.b32.xlu0 %v1795, 4
      %v1967 = vpop.permute.xlu0 %1966
      %1968 = vrot.lane.b32.xlu0 %v1807, 4
      %v1969 = vpop.permute.xlu0 %1968
      %1970 = vrot.lane.b32.xlu0 %v1819, 4
      %v1971 = vpop.permute.xlu0 %1970
      %1972 = vrot.lane.b32.xlu0 %v1831, 4
      %v1973 = vpop.permute.xlu0 %1972
      %1974 = vrot.lane.b32.xlu0 %v1843, 4
      %v1975 = vpop.permute.xlu0 %1974
      %1976 = vrot.lane.b32.xlu0 %v1855, 4
      %v1977 = vpop.permute.xlu0 %1976
      %1978 = vrot.lane.b32.xlu0 %v1867, 4
      %v1979 = vpop.permute.xlu0 %1978
      %1980 = vrot.lane.b32.xlu0 %v1879, 4
      %v1981 = vpop.permute.xlu0 %1980
      %1982 = vrot.lane.b32.xlu0 %v1891, 4
      %v1983 = vpop.permute.xlu0 %1982
      %1984 = vrot.lane.b32.xlu0 %v1903, 4
      %v1985 = vpop.permute.xlu0 %1984
      %1986 = vrot.lane.b32.xlu0 %v1915, 4
      %v1987 = vpop.permute.xlu0 %1986
      %1988 = vrot.lane.b32.xlu0 %v1927, 4
      %v1989 = vpop.permute.xlu0 %1988
      %1990 = vrot.lane.b32.xlu0 %v1939, 4
      %v1991 = vpop.permute.xlu0 %1990
      %1992 = vrot.lane.b32.xlu0 %v1951, 4
      %v1993 = vpop.permute.xlu0 %1992
      %1994 = vrot.lane.b32.xlu0 %v1963, 4
      %v1995 = vpop.permute.xlu0 %1994
      %v1996 = vrot.slane %v1708, 1
      %v1997 = vrot.slane %v1756, 1
      %v1998 = vsel %vm1447, %v1996, %v1997
      %v1999 = vrot.slane %v1709, 1
      %v2000 = vrot.slane %v1757, 1
      %v2001 = vsel %vm1447, %v1999, %v2000
      %v2002 = vrot.slane %v1710, 1
      %v2003 = vrot.slane %v1758, 1
      %v2004 = vsel %vm1447, %v2002, %v2003
      %v2005 = vrot.slane %v1711, 1
      %v2006 = vrot.slane %v1759, 1
      %v2007 = vsel %vm1447, %v2005, %v2006
      %v2008 = vrot.slane %v1712, 1
      %v2009 = vrot.slane %v1760, 1
      %v2010 = vsel %vm1447, %v2008, %v2009
      %v2011 = vrot.slane %v1713, 1
      %v2012 = vrot.slane %v1761, 1
      %v2013 = vsel %vm1447, %v2011, %v2012
      %v2014 = vrot.slane %v1714, 1
      %v2015 = vrot.slane %v1762, 1
      %v2016 = vsel %vm1447, %v2014, %v2015
      %v2017 = vrot.slane %v1715, 1
      %v2018 = vrot.slane %v1763, 1
      %v2019 = vsel %vm1447, %v2017, %v2018
      %v2020 = vrot.slane %v1716, 1
      %v2021 = vrot.slane %v1764, 1
      %v2022 = vsel %vm1447, %v2020, %v2021
      %v2023 = vrot.slane %v1717, 1
      %v2024 = vrot.slane %v1765, 1
      %v2025 = vsel %vm1447, %v2023, %v2024
      %v2026 = vrot.slane %v1718, 1
      %v2027 = vrot.slane %v1766, 1
      %v2028 = vsel %vm1447, %v2026, %v2027
      %v2029 = vrot.slane %v1719, 1
      %v2030 = vrot.slane %v1767, 1
      %v2031 = vsel %vm1447, %v2029, %v2030
      %v2032 = vrot.slane %v1720, 1
      %v2033 = vrot.slane %v1768, 1
      %v2034 = vsel %vm1447, %v2032, %v2033
      %v2035 = vrot.slane %v1721, 1
      %v2036 = vrot.slane %v1769, 1
      %v2037 = vsel %vm1447, %v2035, %v2036
      %v2038 = vrot.slane %v1722, 1
      %v2039 = vrot.slane %v1770, 1
      %v2040 = vsel %vm1447, %v2038, %v2039
      %v2041 = vrot.slane %v1723, 1
      %v2042 = vrot.slane %v1771, 1
      %v2043 = vsel %vm1447, %v2041, %v2042
      %2044 = vrot.lane.b32.xlu0 %v1998, 8
      %v2045 = vpop.permute.xlu0 %2044
      %2046 = vrot.lane.b32.xlu0 %v2001, 8
      %v2047 = vpop.permute.xlu0 %2046
      %2048 = vrot.lane.b32.xlu0 %v2004, 8
      %v2049 = vpop.permute.xlu0 %2048
      %2050 = vrot.lane.b32.xlu0 %v2007, 8
      %v2051 = vpop.permute.xlu0 %2050
      %2052 = vrot.lane.b32.xlu0 %v2010, 8
      %v2053 = vpop.permute.xlu0 %2052
      %2054 = vrot.lane.b32.xlu0 %v2013, 8
      %v2055 = vpop.permute.xlu0 %2054
      %2056 = vrot.lane.b32.xlu0 %v2016, 8
      %v2057 = vpop.permute.xlu0 %2056
      %2058 = vrot.lane.b32.xlu0 %v2019, 8
      %v2059 = vpop.permute.xlu0 %2058
      %2060 = vrot.lane.b32.xlu0 %v2022, 8
      %v2061 = vpop.permute.xlu0 %2060
      %2062 = vrot.lane.b32.xlu0 %v2025, 8
      %v2063 = vpop.permute.xlu0 %2062
      %2064 = vrot.lane.b32.xlu0 %v2028, 8
      %v2065 = vpop.permute.xlu0 %2064
      %2066 = vrot.lane.b32.xlu0 %v2031, 8
      %v2067 = vpop.permute.xlu0 %2066
      %2068 = vrot.lane.b32.xlu0 %v2034, 8
      %v2069 = vpop.permute.xlu0 %2068
      %2070 = vrot.lane.b32.xlu0 %v2037, 8
      %v2071 = vpop.permute.xlu0 %2070
      %2072 = vrot.lane.b32.xlu0 %v2040, 8
      %v2073 = vpop.permute.xlu0 %2072
      %2074 = vrot.lane.b32.xlu0 %v2043, 8
      %v2075 = vpop.permute.xlu0 %2074
      %v2077 = vsel %vm1528, %v1708, %v1965
      %v2079 = vsel %vm1528, %v1709, %v1967
      %v2081 = vsel %vm1528, %v1710, %v1969
      %v2083 = vsel %vm1528, %v1711, %v1971
      %v2085 = vsel %vm1528, %v1712, %v1973
      %v2087 = vsel %vm1528, %v1713, %v1975
      %v2089 = vsel %vm1528, %v1714, %v1977
      %v2091 = vsel %vm1528, %v1715, %v1979
      %v2093 = vsel %vm1528, %v1716, %v1981
      %v2095 = vsel %vm1528, %v1717, %v1983
      %v2097 = vsel %vm1528, %v1718, %v1985
      %v2099 = vsel %vm1528, %v1719, %v1987
      %v2101 = vsel %vm1528, %v1720, %v1989
      %v2103 = vsel %vm1528, %v1721, %v1991
      %v2105 = vsel %vm1528, %v1722, %v1993
      %v2107 = vsel %vm1528, %v1723, %v1995
      %v2109 = vsel %vm1561, %v2077, %v2045
      %v2111 = vsel %vm1561, %v2079, %v2047
      %v2113 = vsel %vm1561, %v2081, %v2049
      %v2115 = vsel %vm1561, %v2083, %v2051
      %v2117 = vsel %vm1561, %v2085, %v2053
      %v2119 = vsel %vm1561, %v2087, %v2055
      %v2121 = vsel %vm1561, %v2089, %v2057
      %v2123 = vsel %vm1561, %v2091, %v2059
      %v2125 = vsel %vm1561, %v2093, %v2061
      %v2127 = vsel %vm1561, %v2095, %v2063
      %v2129 = vsel %vm1561, %v2097, %v2065
      %v2131 = vsel %vm1561, %v2099, %v2067
      %v2133 = vsel %vm1561, %v2101, %v2069
      %v2135 = vsel %vm1561, %v2103, %v2071
      %v2137 = vsel %vm1561, %v2105, %v2073
      %v2139 = vsel %vm1561, %v2107, %v2075
      %s2140 = scalar_lea.vmem %s1, 8
      %v2141 = vld [vmem:[%s2140] sm:$0xf]
      %v2142 = vld [vmem:[%s2140 + $0x4] sm:$0x3]
      %v2145 = vunpack.c.l.b16 %v2141
      %v2146 = vunpack.c.l.b16 %v2142
      %v2147 = vpack.c.b16 %v2146, %v2145
      %vm2148 = vcmask 97280
      %v2149 = vsel %vm2148, %v2109, 0
      %v2151 = vsel %vm2148, %v2111, 0
      %v2153 = vsel %vm2148, %v2113, 0
      %v2155 = vsel %vm2148, %v2115, 0
      %v2157 = vsel %vm2148, %v2117, 0
      %v2159 = vsel %vm2148, %v2119, 0
      %v2161 = vsel %vm2148, %v2121, 0
      %v2163 = vsel %vm2148, %v2123, 0
      %v2165 = vsel %vm2148, %v2125, 0
      %v2167 = vsel %vm2148, %v2127, 0
      %v2169 = vsel %vm2148, %v2129, 0
      %v2171 = vsel %vm2148, %v2131, 0
      %v2173 = vsel %vm2148, %v2133, 0
      %v2175 = vsel %vm2148, %v2135, 0
      %v2177 = vsel %vm2148, %v2137, 0
      %v2179 = vsel %vm2148, %v2139, 0
      %vm2181 = vcmask 1045504
      %v2183 = vsel %vm2181, %v2147, 0
      %2185 = vmatprep.subr.bf16.mxu0 0
      %2186 = vmatpush1.bf16.msra.mxu0 %v2183
      %2187 = vmatprep.subr.bf16.mxu0 0
      %2188 = vmatpush1.bf16.msra.mxu0 0
      %2189 = vmatprep.subr.bf16.mxu0 0
      %2190 = vmatpush1.bf16.msra.mxu0 0
      %2191 = vmatprep.subr.bf16.mxu0 0
      %2192 = vmatpush1.bf16.msra.mxu0 0
      %2193 = vmatprep.subr.bf16.mxu0 0
      %2194 = vmatpush1.bf16.msra.mxu0 0
      %2195 = vmatprep.subr.bf16.mxu0 0
      %2196 = vmatpush1.bf16.msra.mxu0 0
      %2197 = vmatprep.subr.bf16.mxu0 0
      %2198 = vmatpush1.bf16.msra.mxu0 0
      %2199 = vmatprep.subr.bf16.mxu0 0
      %2200 = vmatpush1.bf16.msra.mxu0 0
      %2201 = vmatprep.subr.bf16.mxu0 0
      %2202 = vmatpush1.bf16.msra.mxu0 0
      %2203 = vmatprep.subr.bf16.mxu0 0
      %2204 = vmatpush1.bf16.msra.mxu0 0
      %2205 = vmatprep.subr.bf16.mxu0 0
      %2206 = vmatpush1.bf16.msra.mxu0 0
      %2207 = vmatprep.subr.bf16.mxu0 0
      %2208 = vmatpush1.bf16.msra.mxu0 0
      %2209 = vmatprep.subr.bf16.mxu0 0
      %2210 = vmatpush1.bf16.msra.mxu0 0
      %2211 = vmatprep.subr.bf16.mxu0 0
      %2212 = vmatpush1.bf16.msra.mxu0 0
      %2213 = vmatprep.subr.bf16.mxu0 0
      %2214 = vmatpush1.bf16.msra.mxu0 0
      %2215 = vmatprep.subr.bf16.mxu0 0
      %2216 = vmatpush1.bf16.msra.mxu0 0
      %2217 = vmatprep.mubr.bf16.mxu0 0
      %2218 = vmatmul.mubr.bf16.gmra.mrb[0].mxu0 %v2149
      %v2219 = vpop.f32.mrb[0].mxu0
      %v2220 = vadd.f32 0.0, %v2219
      %v2221 = vpop.f32.mrb[0].mxu0
      %v2222 = vpop.f32.mrb[0].mxu0
      %v2223 = vadd.f32 0.0, %v2222
      %v2224 = vpop.f32.mrb[0].mxu0
      %2225 = vmatprep.mubr.bf16.mxu0 0
      %2226 = vmatmul.mubr.bf16.gmra.mrb[0].mxu0 %v2151
      %v2227 = vpop.f32.mrb[0].mxu0
      %v2228 = vadd.f32 0.0, %v2227
      %v2229 = vpop.f32.mrb[0].mxu0
      %v2230 = vpop.f32.mrb[0].mxu0
      %v2231 = vadd.f32 0.0, %v2230
      %v2232 = vpop.f32.mrb[0].mxu0
      %2233 = vmatprep.mubr.bf16.mxu0 0
      %2234 = vmatmul.mubr.bf16.gmra.mrb[0].mxu0 %v2153
      %v2235 = vpop.f32.mrb[0].mxu0
      %v2236 = vadd.f32 0.0, %v2235
      %v2237 = vpop.f32.mrb[0].mxu0
      %v2238 = vpop.f32.mrb[0].mxu0
      %v2239 = vadd.f32 0.0, %v2238
      %v2240 = vpop.f32.mrb[0].mxu0
      %2241 = vmatprep.mubr.bf16.mxu0 0
      %2242 = vmatmul.mubr.bf16.gmra.mrb[0].mxu0 %v2155
      %v2243 = vpop.f32.mrb[0].mxu0
      %v2244 = vadd.f32 0.0, %v2243
      %v2245 = vpop.f32.mrb[0].mxu0
      %v2246 = vpop.f32.mrb[0].mxu0
      %v2247 = vadd.f32 0.0, %v2246
      %v2248 = vpop.f32.mrb[0].mxu0
      %2249 = vmatprep.mubr.bf16.mxu0 0
      %2250 = vmatmul.mubr.bf16.gmra.mrb[0].mxu0 %v2157
      %v2251 = vpop.f32.mrb[0].mxu0
      %v2252 = vadd.f32 0.0, %v2251
      %v2253 = vpop.f32.mrb[0].mxu0
      %v2254 = vpop.f32.mrb[0].mxu0
      %v2255 = vadd.f32 0.0, %v2254
      %v2256 = vpop.f32.mrb[0].mxu0
      %2257 = vmatprep.mubr.bf16.mxu0 0
      %2258 = vmatmul.mubr.bf16.gmra.mrb[0].mxu0 %v2159
      %v2259 = vpop.f32.mrb[0].mxu0
      %v2260 = vadd.f32 0.0, %v2259
      %v2261 = vpop.f32.mrb[0].mxu0
      %v2262 = vpop.f32.mrb[0].mxu0
      %v2263 = vadd.f32 0.0, %v2262
      %v2264 = vpop.f32.mrb[0].mxu0
      %2265 = vmatprep.mubr.bf16.mxu0 0
      %2266 = vmatmul.mubr.bf16.gmra.mrb[0].mxu0 %v2161
      %v2267 = vpop.f32.mrb[0].mxu0
      %v2268 = vadd.f32 0.0, %v2267
      %v2269 = vpop.f32.mrb[0].mxu0
      %v2270 = vpop.f32.mrb[0].mxu0
      %v2271 = vadd.f32 0.0, %v2270
      %v2272 = vpop.f32.mrb[0].mxu0
      %2273 = vmatprep.mubr.bf16.mxu0 0
      %2274 = vmatmul.mubr.bf16.gmra.mrb[0].mxu0 %v2163
      %v2275 = vpop.f32.mrb[0].mxu0
      %v2276 = vadd.f32 0.0, %v2275
      %v2277 = vpop.f32.mrb[0].mxu0
      %v2278 = vpop.f32.mrb[0].mxu0
      %v2279 = vadd.f32 0.0, %v2278
      %v2280 = vpop.f32.mrb[0].mxu0
      %2281 = vmatprep.mubr.bf16.mxu0 0
      %2282 = vmatmul.mubr.bf16.gmra.mrb[0].mxu0 %v2165
      %v2283 = vpop.f32.mrb[0].mxu0
      %v2284 = vadd.f32 0.0, %v2283
      %v2285 = vpop.f32.mrb[0].mxu0
      %v2286 = vpop.f32.mrb[0].mxu0
      %v2287 = vadd.f32 0.0, %v2286
      %v2288 = vpop.f32.mrb[0].mxu0
      %2289 = vmatprep.mubr.bf16.mxu0 0
      %2290 = vmatmul.mubr.bf16.gmra.mrb[0].mxu0 %v2167
      %v2291 = vpop.f32.mrb[0].mxu0
      %v2292 = vadd.f32 0.0, %v2291
      %v2293 = vpop.f32.mrb[0].mxu0
      %v2294 = vpop.f32.mrb[0].mxu0
      %v2295 = vadd.f32 0.0, %v2294
      %v2296 = vpop.f32.mrb[0].mxu0
      %2297 = vmatprep.mubr.bf16.mxu0 0
      %2298 = vmatmul.mubr.bf16.gmra.mrb[0].mxu0 %v2169
      %v2299 = vpop.f32.mrb[0].mxu0
      %v2300 = vadd.f32 0.0, %v2299
      %v2301 = vpop.f32.mrb[0].mxu0
      %v2302 = vpop.f32.mrb[0].mxu0
      %v2303 = vadd.f32 0.0, %v2302
      %v2304 = vpop.f32.mrb[0].mxu0
      %2305 = vmatprep.mubr.bf16.mxu0 0
      %2306 = vmatmul.mubr.bf16.gmra.mrb[0].mxu0 %v2171
      %v2307 = vpop.f32.mrb[0].mxu0
      %v2308 = vadd.f32 0.0, %v2307
      %v2309 = vpop.f32.mrb[0].mxu0
      %v2310 = vpop.f32.mrb[0].mxu0
      %v2311 = vadd.f32 0.0, %v2310
      %v2312 = vpop.f32.mrb[0].mxu0
      %2313 = vmatprep.mubr.bf16.mxu0 0
      %2314 = vmatmul.mubr.bf16.gmra.mrb[0].mxu0 %v2173
      %v2315 = vpop.f32.mrb[0].mxu0
      %v2316 = vadd.f32 0.0, %v2315
      %v2317 = vpop.f32.mrb[0].mxu0
      %v2318 = vpop.f32.mrb[0].mxu0
      %v2319 = vadd.f32 0.0, %v2318
      %v2320 = vpop.f32.mrb[0].mxu0
      %2321 = vmatprep.mubr.bf16.mxu0 0
      %2322 = vmatmul.mubr.bf16.gmra.mrb[0].mxu0 %v2175
      %v2323 = vpop.f32.mrb[0].mxu0
      %v2324 = vadd.f32 0.0, %v2323
      %v2325 = vpop.f32.mrb[0].mxu0
      %v2326 = vpop.f32.mrb[0].mxu0
      %v2327 = vadd.f32 0.0, %v2326
      %v2328 = vpop.f32.mrb[0].mxu0
      %2329 = vmatprep.mubr.bf16.mxu0 0
      %2330 = vmatmul.mubr.bf16.gmra.mrb[0].mxu0 %v2177
      %v2331 = vpop.f32.mrb[0].mxu0
      %v2332 = vadd.f32 0.0, %v2331
      %v2333 = vpop.f32.mrb[0].mxu0
      %v2334 = vpop.f32.mrb[0].mxu0
      %v2335 = vadd.f32 0.0, %v2334
      %v2336 = vpop.f32.mrb[0].mxu0
      %2337 = vmatprep.mubr.bf16.mxu0 0
      %2338 = vmatmul.mubr.bf16.gmra.mrb[0].mxu0 %v2179
      %v2339 = vpop.f32.mrb[0].mxu0
      %v2340 = vadd.f32 0.0, %v2339
      %v2341 = vpop.f32.mrb[0].mxu0
      %v2342 = vpop.f32.mrb[0].mxu0
      %v2343 = vadd.f32 0.0, %v2342
      %v2344 = vpop.f32.mrb[0].mxu0
      %2345 = vdwg.mxu0
      %v2348 = vunpack.c.l.b16 %v1594
      %v2349 = vunpack.c.l.b16 %v1595
      %v2350 = vpack.c.b16 %v2349, %v2348
      %v2351 = vsel %vm2148, %v1563, 0
      %v2353 = vsel %vm2148, %v1565, 0
      %v2355 = vsel %vm2148, %v1567, 0
      %v2357 = vsel %vm2148, %v1569, 0
      %v2359 = vsel %vm2148, %v1571, 0
      %v2361 = vsel %vm2148, %v1573, 0
      %v2363 = vsel %vm2148, %v1575, 0
      %v2365 = vsel %vm2148, %v1577, 0
      %v2367 = vsel %vm2148, %v1579, 0
      %v2369 = vsel %vm2148, %v1581, 0
      %v2371 = vsel %vm2148, %v1583, 0
      %v2373 = vsel %vm2148, %v1585, 0
      %v2375 = vsel %vm2148, %v1587, 0
      %v2377 = vsel %vm2148, %v1589, 0
      %v2379 = vsel %vm2148, %v1591, 0
      %v2381 = vsel %vm2148, %v1593, 0
      %v2384 = vsel %vm2181, %v2350, 0
      %2386 = vmatprep.subr.bf16.mxu0 0
      %2387 = vmatpush1.bf16.msra.mxu0 %v2384
      %2388 = vmatprep.subr.bf16.mxu0 0
      %2389 = vmatpush1.bf16.msra.mxu0 0
      %2390 = vmatprep.subr.bf16.mxu0 0
      %2391 = vmatpush1.bf16.msra.mxu0 0
      %2392 = vmatprep.subr.bf16.mxu0 0
      %2393 = vmatpush1.bf16.msra.mxu0 0
      %2394 = vmatprep.subr.bf16.mxu0 0
      %2395 = vmatpush1.bf16.msra.mxu0 0
      %2396 = vmatprep.subr.bf16.mxu0 0
      %2397 = vmatpush1.bf16.msra.mxu0 0
      %2398 = vmatprep.subr.bf16.mxu0 0
      %2399 = vmatpush1.bf16.msra.mxu0 0
      %2400 = vmatprep.subr.bf16.mxu0 0
      %2401 = vmatpush1.bf16.msra.mxu0 0
      %2402 = vmatprep.subr.bf16.mxu0 0
      %2403 = vmatpush1.bf16.msra.mxu0 0
      %2404 = vmatprep.subr.bf16.mxu0 0
      %2405 = vmatpush1.bf16.msra.mxu0 0
      %2406 = vmatprep.subr.bf16.mxu0 0
      %2407 = vmatpush1.bf16.msra.mxu0 0
      %2408 = vmatprep.subr.bf16.mxu0 0
      %2409 = vmatpush1.bf16.msra.mxu0 0
      %2410 = vmatprep.subr.bf16.mxu0 0
      %2411 = vmatpush1.bf16.msra.mxu0 0
      %2412 = vmatprep.subr.bf16.mxu0 0
      %2413 = vmatpush1.bf16.msra.mxu0 0
      %2414 = vmatprep.subr.bf16.mxu0 0
      %2415 = vmatpush1.bf16.msra.mxu0 0
      %2416 = vmatprep.subr.bf16.mxu0 0
      %2417 = vmatpush1.bf16.msra.mxu0 0
      %2418 = vmatprep.mubr.bf16.mxu0 0
      %2419 = vmatmul.mubr.bf16.gmra.mrb[0].mxu0 %v2351
      %v2420 = vpop.f32.mrb[0].mxu0
      %v2421 = vadd.f32 %v2220, %v2420
      %v2422 = vpop.f32.mrb[0].mxu0
      %v2423 = vpop.f32.mrb[0].mxu0
      %v2424 = vadd.f32 %v2223, %v2423
      %v2425 = vpop.f32.mrb[0].mxu0
      %2426 = vmatprep.mubr.bf16.mxu0 0
      %2427 = vmatmul.mubr.bf16.gmra.mrb[0].mxu0 %v2353
      %v2428 = vpop.f32.mrb[0].mxu0
      %v2429 = vadd.f32 %v2228, %v2428
      %v2430 = vpop.f32.mrb[0].mxu0
      %v2431 = vpop.f32.mrb[0].mxu0
      %v2432 = vadd.f32 %v2231, %v2431
      %v2433 = vpop.f32.mrb[0].mxu0
      %2434 = vmatprep.mubr.bf16.mxu0 0
      %2435 = vmatmul.mubr.bf16.gmra.mrb[0].mxu0 %v2355
      %v2436 = vpop.f32.mrb[0].mxu0
      %v2437 = vadd.f32 %v2236, %v2436
      %v2438 = vpop.f32.mrb[0].mxu0
      %v2439 = vpop.f32.mrb[0].mxu0
      %v2440 = vadd.f32 %v2239, %v2439
      %v2441 = vpop.f32.mrb[0].mxu0
      %2442 = vmatprep.mubr.bf16.mxu0 0
      %2443 = vmatmul.mubr.bf16.gmra.mrb[0].mxu0 %v2357
      %v2444 = vpop.f32.mrb[0].mxu0
      %v2445 = vadd.f32 %v2244, %v2444
      %v2446 = vpop.f32.mrb[0].mxu0
      %v2447 = vpop.f32.mrb[0].mxu0
      %v2448 = vadd.f32 %v2247, %v2447
      %v2449 = vpop.f32.mrb[0].mxu0
      %2450 = vmatprep.mubr.bf16.mxu0 0
      %2451 = vmatmul.mubr.bf16.gmra.mrb[0].mxu0 %v2359
      %v2452 = vpop.f32.mrb[0].mxu0
      %v2453 = vadd.f32 %v2252, %v2452
      %v2454 = vpop.f32.mrb[0].mxu0
      %v2455 = vpop.f32.mrb[0].mxu0
      %v2456 = vadd.f32 %v2255, %v2455
      %v2457 = vpop.f32.mrb[0].mxu0
      %2458 = vmatprep.mubr.bf16.mxu0 0
      %2459 = vmatmul.mubr.bf16.gmra.mrb[0].mxu0 %v2361
      %v2460 = vpop.f32.mrb[0].mxu0
      %v2461 = vadd.f32 %v2260, %v2460
      %v2462 = vpop.f32.mrb[0].mxu0
      %v2463 = vpop.f32.mrb[0].mxu0
      %v2464 = vadd.f32 %v2263, %v2463
      %v2465 = vpop.f32.mrb[0].mxu0
      %2466 = vmatprep.mubr.bf16.mxu0 0
      %2467 = vmatmul.mubr.bf16.gmra.mrb[0].mxu0 %v2363
      %v2468 = vpop.f32.mrb[0].mxu0
      %v2469 = vadd.f32 %v2268, %v2468
      %v2470 = vpop.f32.mrb[0].mxu0
      %v2471 = vpop.f32.mrb[0].mxu0
      %v2472 = vadd.f32 %v2271, %v2471
      %v2473 = vpop.f32.mrb[0].mxu0
      %2474 = vmatprep.mubr.bf16.mxu0 0
      %2475 = vmatmul.mubr.bf16.gmra.mrb[0].mxu0 %v2365
      %v2476 = vpop.f32.mrb[0].mxu0
      %v2477 = vadd.f32 %v2276, %v2476
      %v2478 = vpop.f32.mrb[0].mxu0
      %v2479 = vpop.f32.mrb[0].mxu0
      %v2480 = vadd.f32 %v2279, %v2479
      %v2481 = vpop.f32.mrb[0].mxu0
      %2482 = vmatprep.mubr.bf16.mxu0 0
      %2483 = vmatmul.mubr.bf16.gmra.mrb[0].mxu0 %v2367
      %v2484 = vpop.f32.mrb[0].mxu0
      %v2485 = vadd.f32 %v2284, %v2484
      %v2486 = vpop.f32.mrb[0].mxu0
      %v2487 = vpop.f32.mrb[0].mxu0
      %v2488 = vadd.f32 %v2287, %v2487
      %v2489 = vpop.f32.mrb[0].mxu0
      %2490 = vmatprep.mubr.bf16.mxu0 0
      %2491 = vmatmul.mubr.bf16.gmra.mrb[0].mxu0 %v2369
      %v2492 = vpop.f32.mrb[0].mxu0
      %v2493 = vadd.f32 %v2292, %v2492
      %v2494 = vpop.f32.mrb[0].mxu0
      %v2495 = vpop.f32.mrb[0].mxu0
      %v2496 = vadd.f32 %v2295, %v2495
      %v2497 = vpop.f32.mrb[0].mxu0
      %2498 = vmatprep.mubr.bf16.mxu0 0
      %2499 = vmatmul.mubr.bf16.gmra.mrb[0].mxu0 %v2371
      %v2500 = vpop.f32.mrb[0].mxu0
      %v2501 = vadd.f32 %v2300, %v2500
      %v2502 = vpop.f32.mrb[0].mxu0
      %v2503 = vpop.f32.mrb[0].mxu0
      %v2504 = vadd.f32 %v2303, %v2503
      %v2505 = vpop.f32.mrb[0].mxu0
      %2506 = vmatprep.mubr.bf16.mxu0 0
      %2507 = vmatmul.mubr.bf16.gmra.mrb[0].mxu0 %v2373
      %v2508 = vpop.f32.mrb[0].mxu0
      %v2509 = vadd.f32 %v2308, %v2508
      %v2510 = vpop.f32.mrb[0].mxu0
      %v2511 = vpop.f32.mrb[0].mxu0
      %v2512 = vadd.f32 %v2311, %v2511
      %v2513 = vpop.f32.mrb[0].mxu0
      %2514 = vmatprep.mubr.bf16.mxu0 0
      %2515 = vmatmul.mubr.bf16.gmra.mrb[0].mxu0 %v2375
      %v2516 = vpop.f32.mrb[0].mxu0
      %v2517 = vadd.f32 %v2316, %v2516
      %v2518 = vpop.f32.mrb[0].mxu0
      %v2519 = vpop.f32.mrb[0].mxu0
      %v2520 = vadd.f32 %v2319, %v2519
      %v2521 = vpop.f32.mrb[0].mxu0
      %2522 = vmatprep.mubr.bf16.mxu0 0
      %2523 = vmatmul.mubr.bf16.gmra.mrb[0].mxu0 %v2377
      %v2524 = vpop.f32.mrb[0].mxu0
      %v2525 = vadd.f32 %v2324, %v2524
      %v2526 = vpop.f32.mrb[0].mxu0
      %v2527 = vpop.f32.mrb[0].mxu0
      %v2528 = vadd.f32 %v2327, %v2527
      %v2529 = vpop.f32.mrb[0].mxu0
      %2530 = vmatprep.mubr.bf16.mxu0 0
      %2531 = vmatmul.mubr.bf16.gmra.mrb[0].mxu0 %v2379
      %v2532 = vpop.f32.mrb[0].mxu0
      %v2533 = vadd.f32 %v2332, %v2532
      %v2534 = vpop.f32.mrb[0].mxu0
      %v2535 = vpop.f32.mrb[0].mxu0
      %v2536 = vadd.f32 %v2335, %v2535
      %v2537 = vpop.f32.mrb[0].mxu0
      %2538 = vmatprep.mubr.bf16.mxu0 0
      %2539 = vmatmul.mubr.bf16.gmra.mrb[0].mxu0 %v2381
      %v2540 = vpop.f32.mrb[0].mxu0
      %v2541 = vadd.f32 %v2340, %v2540
      %v2542 = vpop.f32.mrb[0].mxu0
      %v2543 = vpop.f32.mrb[0].mxu0
      %v2544 = vadd.f32 %v2343, %v2543
      %v2545 = vpop.f32.mrb[0].mxu0
      %2546 = vdwg.mxu0
      %s2547 = scalar_lea.vmem [#allocation2], 24
      %v2548 = vld [vmem:[%s2547] sm:$0xf]
      %v2549 = vld [vmem:[%s2547 + $0x4] sm:$0xf]
      %v2550 = vld [vmem:[%s2547 + $0x8] sm:$0x1]
      %v2551 = vld [vmem:[%s2547 + $0xc] sm:$0xf]
      %v2552 = vld [vmem:[%s2547 + $0x10] sm:$0xf]
      %v2553 = vld [vmem:[%s2547 + $0x14] sm:$0x1]
      %v2554 = vld [vmem:[%s2547 + $0x18] sm:$0xf]
      %v2555 = vld [vmem:[%s2547 + $0x1c] sm:$0xf]
      %v2556 = vld [vmem:[%s2547 + $0x20] sm:$0x1]
      %v2557 = vld [vmem:[%s2547 + $0x24] sm:$0xf]
      %v2558 = vld [vmem:[%s2547 + $0x28] sm:$0xf]
      %v2559 = vld [vmem:[%s2547 + $0x2c] sm:$0x1]
      %v2560 = vld [vmem:[%s2547 + $0x30] sm:$0xf]
      %v2561 = vld [vmem:[%s2547 + $0x34] sm:$0xf]
      %v2562 = vld [vmem:[%s2547 + $0x38] sm:$0x1]
      %v2563 = vld [vmem:[%s2547 + $0x3c] sm:$0xf]
      %v2564 = vld [vmem:[%s2547 + $0x40] sm:$0xf]
      %v2565 = vld [vmem:[%s2547 + $0x44] sm:$0x1]
      %v2566 = vld [vmem:[%s2547 + $0x48] sm:$0xf]
      %v2567 = vld [vmem:[%s2547 + $0x4c] sm:$0xf]
      %v2568 = vld [vmem:[%s2547 + $0x50] sm:$0x1]
      %v2569 = vld [vmem:[%s2547 + $0x54] sm:$0xf]
      %v2570 = vld [vmem:[%s2547 + $0x58] sm:$0xf]
      %v2571 = vld [vmem:[%s2547 + $0x5c] sm:$0x1]
      %v2572 = vld [vmem:[%s2547 + $0x60] sm:$0xf]
      %v2573 = vld [vmem:[%s2547 + $0x64] sm:$0xf]
      %v2574 = vld [vmem:[%s2547 + $0x68] sm:$0x1]
      %v2575 = vld [vmem:[%s2547 + $0x6c] sm:$0xf]
      %v2576 = vld [vmem:[%s2547 + $0x70] sm:$0xf]
      %v2577 = vld [vmem:[%s2547 + $0x74] sm:$0x1]
      %v2578 = vld [vmem:[%s2547 + $0x78] sm:$0xf]
      %v2579 = vld [vmem:[%s2547 + $0x7c] sm:$0xf]
      %v2580 = vld [vmem:[%s2547 + $0x80] sm:$0x1]
      %v2581 = vld [vmem:[%s2547 + $0x84] sm:$0xf]
      %v2582 = vld [vmem:[%s2547 + $0x88] sm:$0xf]
      %v2583 = vld [vmem:[%s2547 + $0x8c] sm:$0x1]
      %v2584 = vld [vmem:[%s2547 + $0x90] sm:$0xf]
      %v2585 = vld [vmem:[%s2547 + $0x94] sm:$0xf]
      %v2586 = vld [vmem:[%s2547 + $0x98] sm:$0x1]
      %v2587 = vld [vmem:[%s2547 + $0x9c] sm:$0xf]
      %v2588 = vld [vmem:[%s2547 + $0xa0] sm:$0xf]
      %v2589 = vld [vmem:[%s2547 + $0xa4] sm:$0x1]
      %v2590 = vld [vmem:[%s2547 + $0xa8] sm:$0xf]
      %v2591 = vld [vmem:[%s2547 + $0xac] sm:$0xf]
      %v2592 = vld [vmem:[%s2547 + $0xb0] sm:$0x1]
      %v2593 = vld [vmem:[%s2547 + $0xb4] sm:$0xf]
      %v2594 = vld [vmem:[%s2547 + $0xb8] sm:$0xf]
      %v2595 = vld [vmem:[%s2547 + $0xbc] sm:$0x1]
      %v2628 = vunpack.c.l.b16 %v2548
      %v2629 = vunpack.c.l.b16 %v2549
      %v2630 = vunpack.c.l.b16 %v2551
      %v2631 = vunpack.c.l.b16 %v2552
      %v2632 = vunpack.c.l.b16 %v2554
      %v2633 = vunpack.c.l.b16 %v2555
      %v2634 = vunpack.c.l.b16 %v2557
      %v2635 = vunpack.c.l.b16 %v2558
      %v2636 = vunpack.c.l.b16 %v2560
      %v2637 = vunpack.c.l.b16 %v2561
      %v2638 = vunpack.c.l.b16 %v2563
      %v2639 = vunpack.c.l.b16 %v2564
      %v2640 = vunpack.c.l.b16 %v2566
      %v2641 = vunpack.c.l.b16 %v2567
      %v2642 = vunpack.c.l.b16 %v2569
      %v2643 = vunpack.c.l.b16 %v2570
      %v2644 = vunpack.c.l.b16 %v2572
      %v2645 = vunpack.c.l.b16 %v2573
      %v2646 = vunpack.c.l.b16 %v2575
      %v2647 = vunpack.c.l.b16 %v2576
      %v2648 = vunpack.c.l.b16 %v2578
      %v2649 = vunpack.c.l.b16 %v2579
      %v2650 = vunpack.c.l.b16 %v2581
      %v2651 = vunpack.c.l.b16 %v2582
      %v2652 = vunpack.c.l.b16 %v2584
      %v2653 = vunpack.c.l.b16 %v2585
      %v2654 = vunpack.c.l.b16 %v2587
      %v2655 = vunpack.c.l.b16 %v2588
      %v2656 = vunpack.c.l.b16 %v2590
      %v2657 = vunpack.c.l.b16 %v2591
      %v2658 = vunpack.c.l.b16 %v2593
      %v2659 = vunpack.c.l.b16 %v2594
      %v2660 = vpack.c.b16 %v2629, %v2628
      %v2661 = vpack.c.b16 %v2631, %v2630
      %v2662 = vpack.c.b16 %v2633, %v2632
      %v2663 = vpack.c.b16 %v2635, %v2634
      %v2664 = vpack.c.b16 %v2637, %v2636
      %v2665 = vpack.c.b16 %v2639, %v2638
      %v2666 = vpack.c.b16 %v2641, %v2640
      %v2667 = vpack.c.b16 %v2643, %v2642
      %v2668 = vpack.c.b16 %v2645, %v2644
      %v2669 = vpack.c.b16 %v2647, %v2646
      %v2670 = vpack.c.b16 %v2649, %v2648
      %v2671 = vpack.c.b16 %v2651, %v2650
      %v2672 = vpack.c.b16 %v2653, %v2652
      %v2673 = vpack.c.b16 %v2655, %v2654
      %v2674 = vpack.c.b16 %v2657, %v2656
      %v2675 = vpack.c.b16 %v2659, %v2658
      %v2692 = vunpack.c.l.b16 %v2550
      %v2693 = vunpack.c.l.b16 %v2553
      %v2694 = vunpack.c.l.b16 %v2556
      %v2695 = vunpack.c.l.b16 %v2559
      %v2696 = vunpack.c.l.b16 %v2562
      %v2697 = vunpack.c.l.b16 %v2565
      %v2698 = vunpack.c.l.b16 %v2568
      %v2699 = vunpack.c.l.b16 %v2571
      %v2700 = vunpack.c.l.b16 %v2574
      %v2701 = vunpack.c.l.b16 %v2577
      %v2702 = vunpack.c.l.b16 %v2580
      %v2703 = vunpack.c.l.b16 %v2583
      %v2704 = vunpack.c.l.b16 %v2586
      %v2705 = vunpack.c.l.b16 %v2589
      %v2706 = vunpack.c.l.b16 %v2592
      %v2707 = vunpack.c.l.b16 %v2595
      %v2708 = vpack.c.b16 %v2692, %v2692
      %v2709 = vpack.c.b16 %v2693, %v2693
      %v2710 = vpack.c.b16 %v2694, %v2694
      %v2711 = vpack.c.b16 %v2695, %v2695
      %v2712 = vpack.c.b16 %v2696, %v2696
      %v2713 = vpack.c.b16 %v2697, %v2697
      %v2714 = vpack.c.b16 %v2698, %v2698
      %v2715 = vpack.c.b16 %v2699, %v2699
      %v2716 = vpack.c.b16 %v2700, %v2700
      %v2717 = vpack.c.b16 %v2701, %v2701
      %v2718 = vpack.c.b16 %v2702, %v2702
      %v2719 = vpack.c.b16 %v2703, %v2703
      %v2720 = vpack.c.b16 %v2704, %v2704
      %v2721 = vpack.c.b16 %v2705, %v2705
      %v2722 = vpack.c.b16 %v2706, %v2706
      %v2723 = vpack.c.b16 %v2707, %v2707
      %v2725 = vshrl.u32 %v2660, 16
      %v2727 = vshll.u32 %v2660, 16
      %v2729 = vrot.slane %v2727, 1
      %v2730 = vor.u32 %v2725, %v2729
      %v2732 = vshll.u32 %v2708, 16
      %v2734 = vrot.slane %v2732, 1
      %v2735 = vsel %vm1222, %v2730, %v2734
      %v2737 = vshrl.u32 %v2661, 16
      %v2739 = vshll.u32 %v2661, 16
      %v2741 = vrot.slane %v2739, 1
      %v2742 = vor.u32 %v2737, %v2741
      %v2744 = vshll.u32 %v2709, 16
      %v2746 = vrot.slane %v2744, 1
      %v2747 = vsel %vm1222, %v2742, %v2746
      %v2749 = vshrl.u32 %v2662, 16
      %v2751 = vshll.u32 %v2662, 16
      %v2753 = vrot.slane %v2751, 1
      %v2754 = vor.u32 %v2749, %v2753
      %v2756 = vshll.u32 %v2710, 16
      %v2758 = vrot.slane %v2756, 1
      %v2759 = vsel %vm1222, %v2754, %v2758
      %v2761 = vshrl.u32 %v2663, 16
      %v2763 = vshll.u32 %v2663, 16
      %v2765 = vrot.slane %v2763, 1
      %v2766 = vor.u32 %v2761, %v2765
      %v2768 = vshll.u32 %v2711, 16
      %v2770 = vrot.slane %v2768, 1
      %v2771 = vsel %vm1222, %v2766, %v2770
      %v2773 = vshrl.u32 %v2664, 16
      %v2775 = vshll.u32 %v2664, 16
      %v2777 = vrot.slane %v2775, 1
      %v2778 = vor.u32 %v2773, %v2777
      %v2780 = vshll.u32 %v2712, 16
      %v2782 = vrot.slane %v2780, 1
      %v2783 = vsel %vm1222, %v2778, %v2782
      %v2785 = vshrl.u32 %v2665, 16
      %v2787 = vshll.u32 %v2665, 16
      %v2789 = vrot.slane %v2787, 1
      %v2790 = vor.u32 %v2785, %v2789
      %v2792 = vshll.u32 %v2713, 16
      %v2794 = vrot.slane %v2792, 1
      %v2795 = vsel %vm1222, %v2790, %v2794
      %v2797 = vshrl.u32 %v2666, 16
      %v2799 = vshll.u32 %v2666, 16
      %v2801 = vrot.slane %v2799, 1
      %v2802 = vor.u32 %v2797, %v2801
      %v2804 = vshll.u32 %v2714, 16
      %v2806 = vrot.slane %v2804, 1
      %v2807 = vsel %vm1222, %v2802, %v2806
      %v2809 = vshrl.u32 %v2667, 16
      %v2811 = vshll.u32 %v2667, 16
      %v2813 = vrot.slane %v2811, 1
      %v2814 = vor.u32 %v2809, %v2813
      %v2816 = vshll.u32 %v2715, 16
      %v2818 = vrot.slane %v2816, 1
      %v2819 = vsel %vm1222, %v2814, %v2818
      %v2821 = vshrl.u32 %v2668, 16
      %v2823 = vshll.u32 %v2668, 16
      %v2825 = vrot.slane %v2823, 1
      %v2826 = vor.u32 %v2821, %v2825
      %v2828 = vshll.u32 %v2716, 16
      %v2830 = vrot.slane %v2828, 1
      %v2831 = vsel %vm1222, %v2826, %v2830
      %v2833 = vshrl.u32 %v2669, 16
      %v2835 = vshll.u32 %v2669, 16
      %v2837 = vrot.slane %v2835, 1
      %v2838 = vor.u32 %v2833, %v2837
      %v2840 = vshll.u32 %v2717, 16
      %v2842 = vrot.slane %v2840, 1
      %v2843 = vsel %vm1222, %v2838, %v2842
      %v2845 = vshrl.u32 %v2670, 16
      %v2847 = vshll.u32 %v2670, 16
      %v2849 = vrot.slane %v2847, 1
      %v2850 = vor.u32 %v2845, %v2849
      %v2852 = vshll.u32 %v2718, 16
      %v2854 = vrot.slane %v2852, 1
      %v2855 = vsel %vm1222, %v2850, %v2854
      %v2857 = vshrl.u32 %v2671, 16
      %v2859 = vshll.u32 %v2671, 16
      %v2861 = vrot.slane %v2859, 1
      %v2862 = vor.u32 %v2857, %v2861
      %v2864 = vshll.u32 %v2719, 16
      %v2866 = vrot.slane %v2864, 1
      %v2867 = vsel %vm1222, %v2862, %v2866
      %v2869 = vshrl.u32 %v2672, 16
      %v2871 = vshll.u32 %v2672, 16
      %v2873 = vrot.slane %v2871, 1
      %v2874 = vor.u32 %v2869, %v2873
      %v2876 = vshll.u32 %v2720, 16
      %v2878 = vrot.slane %v2876, 1
      %v2879 = vsel %vm1222, %v2874, %v2878
      %v2881 = vshrl.u32 %v2673, 16
      %v2883 = vshll.u32 %v2673, 16
      %v2885 = vrot.slane %v2883, 1
      %v2886 = vor.u32 %v2881, %v2885
      %v2888 = vshll.u32 %v2721, 16
      %v2890 = vrot.slane %v2888, 1
      %v2891 = vsel %vm1222, %v2886, %v2890
      %v2893 = vshrl.u32 %v2674, 16
      %v2895 = vshll.u32 %v2674, 16
      %v2897 = vrot.slane %v2895, 1
      %v2898 = vor.u32 %v2893, %v2897
      %v2900 = vshll.u32 %v2722, 16
      %v2902 = vrot.slane %v2900, 1
      %v2903 = vsel %vm1222, %v2898, %v2902
      %v2905 = vshrl.u32 %v2675, 16
      %v2907 = vshll.u32 %v2675, 16
      %v2909 = vrot.slane %v2907, 1
      %v2910 = vor.u32 %v2905, %v2909
      %v2912 = vshll.u32 %v2723, 16
      %v2914 = vrot.slane %v2912, 1
      %v2915 = vsel %vm1222, %v2910, %v2914
      %2916 = vrot.lane.b32.xlu0 %v2735, 4
      %v2917 = vpop.permute.xlu0 %2916
      %2918 = vrot.lane.b32.xlu0 %v2747, 4
      %v2919 = vpop.permute.xlu0 %2918
      %2920 = vrot.lane.b32.xlu0 %v2759, 4
      %v2921 = vpop.permute.xlu0 %2920
      %2922 = vrot.lane.b32.xlu0 %v2771, 4
      %v2923 = vpop.permute.xlu0 %2922
      %2924 = vrot.lane.b32.xlu0 %v2783, 4
      %v2925 = vpop.permute.xlu0 %2924
      %2926 = vrot.lane.b32.xlu0 %v2795, 4
      %v2927 = vpop.permute.xlu0 %2926
      %2928 = vrot.lane.b32.xlu0 %v2807, 4
      %v2929 = vpop.permute.xlu0 %2928
      %2930 = vrot.lane.b32.xlu0 %v2819, 4
      %v2931 = vpop.permute.xlu0 %2930
      %2932 = vrot.lane.b32.xlu0 %v2831, 4
      %v2933 = vpop.permute.xlu0 %2932
      %2934 = vrot.lane.b32.xlu0 %v2843, 4
      %v2935 = vpop.permute.xlu0 %2934
      %2936 = vrot.lane.b32.xlu0 %v2855, 4
      %v2937 = vpop.permute.xlu0 %2936
      %2938 = vrot.lane.b32.xlu0 %v2867, 4
      %v2939 = vpop.permute.xlu0 %2938
      %2940 = vrot.lane.b32.xlu0 %v2879, 4
      %v2941 = vpop.permute.xlu0 %2940
      %2942 = vrot.lane.b32.xlu0 %v2891, 4
      %v2943 = vpop.permute.xlu0 %2942
      %2944 = vrot.lane.b32.xlu0 %v2903, 4
      %v2945 = vpop.permute.xlu0 %2944
      %2946 = vrot.lane.b32.xlu0 %v2915, 4
      %v2947 = vpop.permute.xlu0 %2946
      %v2948 = vrot.slane %v2660, 1
      %v2949 = vrot.slane %v2708, 1
      %v2950 = vsel %vm1447, %v2948, %v2949
      %v2951 = vrot.slane %v2661, 1
      %v2952 = vrot.slane %v2709, 1
      %v2953 = vsel %vm1447, %v2951, %v2952
      %v2954 = vrot.slane %v2662, 1
      %v2955 = vrot.slane %v2710, 1
      %v2956 = vsel %vm1447, %v2954, %v2955
      %v2957 = vrot.slane %v2663, 1
      %v2958 = vrot.slane %v2711, 1
      %v2959 = vsel %vm1447, %v2957, %v2958
      %v2960 = vrot.slane %v2664, 1
      %v2961 = vrot.slane %v2712, 1
      %v2962 = vsel %vm1447, %v2960, %v2961
      %v2963 = vrot.slane %v2665, 1
      %v2964 = vrot.slane %v2713, 1
      %v2965 = vsel %vm1447, %v2963, %v2964
      %v2966 = vrot.slane %v2666, 1
      %v2967 = vrot.slane %v2714, 1
      %v2968 = vsel %vm1447, %v2966, %v2967
      %v2969 = vrot.slane %v2667, 1
      %v2970 = vrot.slane %v2715, 1
      %v2971 = vsel %vm1447, %v2969, %v2970
      %v2972 = vrot.slane %v2668, 1
      %v2973 = vrot.slane %v2716, 1
      %v2974 = vsel %vm1447, %v2972, %v2973
      %v2975 = vrot.slane %v2669, 1
      %v2976 = vrot.slane %v2717, 1
      %v2977 = vsel %vm1447, %v2975, %v2976
      %v2978 = vrot.slane %v2670, 1
      %v2979 = vrot.slane %v2718, 1
      %v2980 = vsel %vm1447, %v2978, %v2979
      %v2981 = vrot.slane %v2671, 1
      %v2982 = vrot.slane %v2719, 1
      %v2983 = vsel %vm1447, %v2981, %v2982
      %v2984 = vrot.slane %v2672, 1
      %v2985 = vrot.slane %v2720, 1
      %v2986 = vsel %vm1447, %v2984, %v2985
      %v2987 = vrot.slane %v2673, 1
      %v2988 = vrot.slane %v2721, 1
      %v2989 = vsel %vm1447, %v2987, %v2988
      %v2990 = vrot.slane %v2674, 1
      %v2991 = vrot.slane %v2722, 1
      %v2992 = vsel %vm1447, %v2990, %v2991
      %v2993 = vrot.slane %v2675, 1
      %v2994 = vrot.slane %v2723, 1
      %v2995 = vsel %vm1447, %v2993, %v2994
      %2996 = vrot.lane.b32.xlu0 %v2950, 8
      %v2997 = vpop.permute.xlu0 %2996
      %2998 = vrot.lane.b32.xlu0 %v2953, 8
      %v2999 = vpop.permute.xlu0 %2998
      %3000 = vrot.lane.b32.xlu0 %v2956, 8
      %v3001 = vpop.permute.xlu0 %3000
      %3002 = vrot.lane.b32.xlu0 %v2959, 8
      %v3003 = vpop.permute.xlu0 %3002
      %3004 = vrot.lane.b32.xlu0 %v2962, 8
      %v3005 = vpop.permute.xlu0 %3004
      %3006 = vrot.lane.b32.xlu0 %v2965, 8
      %v3007 = vpop.permute.xlu0 %3006
      %3008 = vrot.lane.b32.xlu0 %v2968, 8
      %v3009 = vpop.permute.xlu0 %3008
      %3010 = vrot.lane.b32.xlu0 %v2971, 8
      %v3011 = vpop.permute.xlu0 %3010
      %3012 = vrot.lane.b32.xlu0 %v2974, 8
      %v3013 = vpop.permute.xlu0 %3012
      %3014 = vrot.lane.b32.xlu0 %v2977, 8
      %v3015 = vpop.permute.xlu0 %3014
      %3016 = vrot.lane.b32.xlu0 %v2980, 8
      %v3017 = vpop.permute.xlu0 %3016
      %3018 = vrot.lane.b32.xlu0 %v2983, 8
      %v3019 = vpop.permute.xlu0 %3018
      %3020 = vrot.lane.b32.xlu0 %v2986, 8
      %v3021 = vpop.permute.xlu0 %3020
      %3022 = vrot.lane.b32.xlu0 %v2989, 8
      %v3023 = vpop.permute.xlu0 %3022
      %3024 = vrot.lane.b32.xlu0 %v2992, 8
      %v3025 = vpop.permute.xlu0 %3024
      %3026 = vrot.lane.b32.xlu0 %v2995, 8
      %v3027 = vpop.permute.xlu0 %3026
      %v3029 = vsel %vm1528, %v2660, %v2917
      %v3031 = vsel %vm1528, %v2661, %v2919
      %v3033 = vsel %vm1528, %v2662, %v2921
      %v3035 = vsel %vm1528, %v2663, %v2923
      %v3037 = vsel %vm1528, %v2664, %v2925
      %v3039 = vsel %vm1528, %v2665, %v2927
      %v3041 = vsel %vm1528, %v2666, %v2929
      %v3043 = vsel %vm1528, %v2667, %v2931
      %v3045 = vsel %vm1528, %v2668, %v2933
      %v3047 = vsel %vm1528, %v2669, %v2935
      %v3049 = vsel %vm1528, %v2670, %v2937
      %v3051 = vsel %vm1528, %v2671, %v2939
      %v3053 = vsel %vm1528, %v2672, %v2941
      %v3055 = vsel %vm1528, %v2673, %v2943
      %v3057 = vsel %vm1528, %v2674, %v2945
      %v3059 = vsel %vm1528, %v2675, %v2947
      %v3061 = vsel %vm1561, %v3029, %v2997
      %v3063 = vsel %vm1561, %v3031, %v2999
      %v3065 = vsel %vm1561, %v3033, %v3001
      %v3067 = vsel %vm1561, %v3035, %v3003
      %v3069 = vsel %vm1561, %v3037, %v3005
      %v3071 = vsel %vm1561, %v3039, %v3007
      %v3073 = vsel %vm1561, %v3041, %v3009
      %v3075 = vsel %vm1561, %v3043, %v3011
      %v3077 = vsel %vm1561, %v3045, %v3013
      %v3079 = vsel %vm1561, %v3047, %v3015
      %v3081 = vsel %vm1561, %v3049, %v3017
      %v3083 = vsel %vm1561, %v3051, %v3019
      %v3085 = vsel %vm1561, %v3053, %v3021
      %v3087 = vsel %vm1561, %v3055, %v3023
      %v3089 = vsel %vm1561, %v3057, %v3025
      %v3091 = vsel %vm1561, %v3059, %v3027
      %s3092 = scalar_lea.vmem %s1, 16
      %v3093 = vld [vmem:[%s3092] sm:$0xf]
      %v3094 = vld [vmem:[%s3092 + $0x4] sm:$0x3]
      %v3097 = vunpack.c.l.b16 %v3093
      %v3098 = vunpack.c.l.b16 %v3094
      %v3099 = vpack.c.b16 %v3098, %v3097
      %v3100 = vsel %vm2148, %v3061, 0
      %v3102 = vsel %vm2148, %v3063, 0
      %v3104 = vsel %vm2148, %v3065, 0
      %v3106 = vsel %vm2148, %v3067, 0
      %v3108 = vsel %vm2148, %v3069, 0
      %v3110 = vsel %vm2148, %v3071, 0
      %v3112 = vsel %vm2148, %v3073, 0
      %v3114 = vsel %vm2148, %v3075, 0
      %v3116 = vsel %vm2148, %v3077, 0
      %v3118 = vsel %vm2148, %v3079, 0
      %v3120 = vsel %vm2148, %v3081, 0
      %v3122 = vsel %vm2148, %v3083, 0
      %v3124 = vsel %vm2148, %v3085, 0
      %v3126 = vsel %vm2148, %v3087, 0
      %v3128 = vsel %vm2148, %v3089, 0
      %v3130 = vsel %vm2148, %v3091, 0
      %v3133 = vsel %vm2181, %v3099, 0
      %3135 = vmatprep.subr.bf16.mxu0 0
      %3136 = vmatpush1.bf16.msra.mxu0 %v3133
      %3137 = vmatprep.subr.bf16.mxu0 0
      %3138 = vmatpush1.bf16.msra.mxu0 0
      %3139 = vmatprep.subr.bf16.mxu0 0
      %3140 = vmatpush1.bf16.msra.mxu0 0
      %3141 = vmatprep.subr.bf16.mxu0 0
      %3142 = vmatpush1.bf16.msra.mxu0 0
      %3143 = vmatprep.subr.bf16.mxu0 0
      %3144 = vmatpush1.bf16.msra.mxu0 0
      %3145 = vmatprep.subr.bf16.mxu0 0
      %3146 = vmatpush1.bf16.msra.mxu0 0
      %3147 = vmatprep.subr.bf16.mxu0 0
      %3148 = vmatpush1.bf16.msra.mxu0 0
      %3149 = vmatprep.subr.bf16.mxu0 0
      %3150 = vmatpush1.bf16.msra.mxu0 0
      %3151 = vmatprep.subr.bf16.mxu0 0
      %3152 = vmatpush1.bf16.msra.mxu0 0
      %3153 = vmatprep.subr.bf16.mxu0 0
      %3154 = vmatpush1.bf16.msra.mxu0 0
      %3155 = vmatprep.subr.bf16.mxu0 0
      %3156 = vmatpush1.bf16.msra.mxu0 0
      %3157 = vmatprep.subr.bf16.mxu0 0
      %3158 = vmatpush1.bf16.msra.mxu0 0
      %3159 = vmatprep.subr.bf16.mxu0 0
      %3160 = vmatpush1.bf16.msra.mxu0 0
      %3161 = vmatprep.subr.bf16.mxu0 0
      %3162 = vmatpush1.bf16.msra.mxu0 0
      %3163 = vmatprep.subr.bf16.mxu0 0
      %3164 = vmatpush1.bf16.msra.mxu0 0
      %3165 = vmatprep.subr.bf16.mxu0 0
      %3166 = vmatpush1.bf16.msra.mxu0 0
      %3167 = vmatprep.mubr.bf16.mxu0 0
      %3168 = vmatmul.mubr.bf16.gmra.mrb[0].mxu0 %v3100
      %v3169 = vpop.f32.mrb[0].mxu0
      %v3170 = vadd.f32 0.0, %v3169
      %v3171 = vpop.f32.mrb[0].mxu0
      %v3172 = vpop.f32.mrb[0].mxu0
      %v3173 = vadd.f32 0.0, %v3172
      %v3174 = vpop.f32.mrb[0].mxu0
      %3175 = vmatprep.mubr.bf16.mxu0 0
      %3176 = vmatmul.mubr.bf16.gmra.mrb[0].mxu0 %v3102
      %v3177 = vpop.f32.mrb[0].mxu0
      %v3178 = vadd.f32 0.0, %v3177
      %v3179 = vpop.f32.mrb[0].mxu0
      %v3180 = vpop.f32.mrb[0].mxu0
      %v3181 = vadd.f32 0.0, %v3180
      %v3182 = vpop.f32.mrb[0].mxu0
      %3183 = vmatprep.mubr.bf16.mxu0 0
      %3184 = vmatmul.mubr.bf16.gmra.mrb[0].mxu0 %v3104
      %v3185 = vpop.f32.mrb[0].mxu0
      %v3186 = vadd.f32 0.0, %v3185
      %v3187 = vpop.f32.mrb[0].mxu0
      %v3188 = vpop.f32.mrb[0].mxu0
      %v3189 = vadd.f32 0.0, %v3188
      %v3190 = vpop.f32.mrb[0].mxu0
      %3191 = vmatprep.mubr.bf16.mxu0 0
      %3192 = vmatmul.mubr.bf16.gmra.mrb[0].mxu0 %v3106
      %v3193 = vpop.f32.mrb[0].mxu0
      %v3194 = vadd.f32 0.0, %v3193
      %v3195 = vpop.f32.mrb[0].mxu0
      %v3196 = vpop.f32.mrb[0].mxu0
      %v3197 = vadd.f32 0.0, %v3196
      %v3198 = vpop.f32.mrb[0].mxu0
      %3199 = vmatprep.mubr.bf16.mxu0 0
      %3200 = vmatmul.mubr.bf16.gmra.mrb[0].mxu0 %v3108
      %v3201 = vpop.f32.mrb[0].mxu0
      %v3202 = vadd.f32 0.0, %v3201
      %v3203 = vpop.f32.mrb[0].mxu0
      %v3204 = vpop.f32.mrb[0].mxu0
      %v3205 = vadd.f32 0.0, %v3204
      %v3206 = vpop.f32.mrb[0].mxu0
      %3207 = vmatprep.mubr.bf16.mxu0 0
      %3208 = vmatmul.mubr.bf16.gmra.mrb[0].mxu0 %v3110
      %v3209 = vpop.f32.mrb[0].mxu0
      %v3210 = vadd.f32 0.0, %v3209
      %v3211 = vpop.f32.mrb[0].mxu0
      %v3212 = vpop.f32.mrb[0].mxu0
      %v3213 = vadd.f32 0.0, %v3212
      %v3214 = vpop.f32.mrb[0].mxu0
      %3215 = vmatprep.mubr.bf16.mxu0 0
      %3216 = vmatmul.mubr.bf16.gmra.mrb[0].mxu0 %v3112
      %v3217 = vpop.f32.mrb[0].mxu0
      %v3218 = vadd.f32 0.0, %v3217
      %v3219 = vpop.f32.mrb[0].mxu0
      %v3220 = vpop.f32.mrb[0].mxu0
      %v3221 = vadd.f32 0.0, %v3220
      %v3222 = vpop.f32.mrb[0].mxu0
      %3223 = vmatprep.mubr.bf16.mxu0 0
      %3224 = vmatmul.mubr.bf16.gmra.mrb[0].mxu0 %v3114
      %v3225 = vpop.f32.mrb[0].mxu0
      %v3226 = vadd.f32 0.0, %v3225
      %v3227 = vpop.f32.mrb[0].mxu0
      %v3228 = vpop.f32.mrb[0].mxu0
      %v3229 = vadd.f32 0.0, %v3228
      %v3230 = vpop.f32.mrb[0].mxu0
      %3231 = vmatprep.mubr.bf16.mxu0 0
      %3232 = vmatmul.mubr.bf16.gmra.mrb[0].mxu0 %v3116
      %v3233 = vpop.f32.mrb[0].mxu0
      %v3234 = vadd.f32 0.0, %v3233
      %v3235 = vpop.f32.mrb[0].mxu0
      %v3236 = vpop.f32.mrb[0].mxu0
      %v3237 = vadd.f32 0.0, %v3236
      %v3238 = vpop.f32.mrb[0].mxu0
      %3239 = vmatprep.mubr.bf16.mxu0 0
      %3240 = vmatmul.mubr.bf16.gmra.mrb[0].mxu0 %v3118
      %v3241 = vpop.f32.mrb[0].mxu0
      %v3242 = vadd.f32 0.0, %v3241
      %v3243 = vpop.f32.mrb[0].mxu0
      %v3244 = vpop.f32.mrb[0].mxu0
      %v3245 = vadd.f32 0.0, %v3244
      %v3246 = vpop.f32.mrb[0].mxu0
      %3247 = vmatprep.mubr.bf16.mxu0 0
      %3248 = vmatmul.mubr.bf16.gmra.mrb[0].mxu0 %v3120
      %v3249 = vpop.f32.mrb[0].mxu0
      %v3250 = vadd.f32 0.0, %v3249
      %v3251 = vpop.f32.mrb[0].mxu0
      %v3252 = vpop.f32.mrb[0].mxu0
      %v3253 = vadd.f32 0.0, %v3252
      %v3254 = vpop.f32.mrb[0].mxu0
      %3255 = vmatprep.mubr.bf16.mxu0 0
      %3256 = vmatmul.mubr.bf16.gmra.mrb[0].mxu0 %v3122
      %v3257 = vpop.f32.mrb[0].mxu0
      %v3258 = vadd.f32 0.0, %v3257
      %v3259 = vpop.f32.mrb[0].mxu0
      %v3260 = vpop.f32.mrb[0].mxu0
      %v3261 = vadd.f32 0.0, %v3260
      %v3262 = vpop.f32.mrb[0].mxu0
      %3263 = vmatprep.mubr.bf16.mxu0 0
      %3264 = vmatmul.mubr.bf16.gmra.mrb[0].mxu0 %v3124
      %v3265 = vpop.f32.mrb[0].mxu0
      %v3266 = vadd.f32 0.0, %v3265
      %v3267 = vpop.f32.mrb[0].mxu0
      %v3268 = vpop.f32.mrb[0].mxu0
      %v3269 = vadd.f32 0.0, %v3268
      %v3270 = vpop.f32.mrb[0].mxu0
      %3271 = vmatprep.mubr.bf16.mxu0 0
      %3272 = vmatmul.mubr.bf16.gmra.mrb[0].mxu0 %v3126
      %v3273 = vpop.f32.mrb[0].mxu0
      %v3274 = vadd.f32 0.0, %v3273
      %v3275 = vpop.f32.mrb[0].mxu0
      %v3276 = vpop.f32.mrb[0].mxu0
      %v3277 = vadd.f32 0.0, %v3276
      %v3278 = vpop.f32.mrb[0].mxu0
      %3279 = vmatprep.mubr.bf16.mxu0 0
      %3280 = vmatmul.mubr.bf16.gmra.mrb[0].mxu0 %v3128
      %v3281 = vpop.f32.mrb[0].mxu0
      %v3282 = vadd.f32 0.0, %v3281
      %v3283 = vpop.f32.mrb[0].mxu0
      %v3284 = vpop.f32.mrb[0].mxu0
      %v3285 = vadd.f32 0.0, %v3284
      %v3286 = vpop.f32.mrb[0].mxu0
      %3287 = vmatprep.mubr.bf16.mxu0 0
      %3288 = vmatmul.mubr.bf16.gmra.mrb[0].mxu0 %v3130
      %v3289 = vpop.f32.mrb[0].mxu0
      %v3290 = vadd.f32 0.0, %v3289
      %v3291 = vpop.f32.mrb[0].mxu0
      %v3292 = vpop.f32.mrb[0].mxu0
      %v3293 = vadd.f32 0.0, %v3292
      %v3294 = vpop.f32.mrb[0].mxu0
      %3295 = vdwg.mxu0
      %v3296 = vadd.f32 %v2421, %v3170
      %v3297 = vadd.f32 %v2424, %v3173
      %v3298 = vadd.f32 %v2429, %v3178
      %v3299 = vadd.f32 %v2432, %v3181
      %v3300 = vadd.f32 %v2437, %v3186
      %v3301 = vadd.f32 %v2440, %v3189
      %v3302 = vadd.f32 %v2445, %v3194
      %v3303 = vadd.f32 %v2448, %v3197
      %v3304 = vadd.f32 %v2453, %v3202
      %v3305 = vadd.f32 %v2456, %v3205
      %v3306 = vadd.f32 %v2461, %v3210
      %v3307 = vadd.f32 %v2464, %v3213
      %v3308 = vadd.f32 %v2469, %v3218
      %v3309 = vadd.f32 %v2472, %v3221
      %v3310 = vadd.f32 %v2477, %v3226
      %v3311 = vadd.f32 %v2480, %v3229
      %v3312 = vadd.f32 %v2485, %v3234
      %v3313 = vadd.f32 %v2488, %v3237
      %v3314 = vadd.f32 %v2493, %v3242
      %v3315 = vadd.f32 %v2496, %v3245
      %v3316 = vadd.f32 %v2501, %v3250
      %v3317 = vadd.f32 %v2504, %v3253
      %v3318 = vadd.f32 %v2509, %v3258
      %v3319 = vadd.f32 %v2512, %v3261
      %v3320 = vadd.f32 %v2517, %v3266
      %v3321 = vadd.f32 %v2520, %v3269
      %v3322 = vadd.f32 %v2525, %v3274
      %v3323 = vadd.f32 %v2528, %v3277
      %v3324 = vadd.f32 %v2533, %v3282
      %v3325 = vadd.f32 %v2536, %v3285
      %v3326 = vadd.f32 %v2541, %v3290
      %v3327 = vadd.f32 %v2544, %v3293
      %v3328 = vsel %vm1528, %v3296, 0.0
      %v3329 = vsel %vm1528, %v3297, 0.0
      %v3330 = vadd.f32 %v3328, %v3329
      %v3331 = vsel %vm1528, %v3298, 0.0
      %v3332 = vadd.f32 %v3330, %v3331
      %v3333 = vsel %vm1528, %v3299, 0.0
      %v3334 = vadd.f32 %v3332, %v3333
      %v3335 = vsel %vm1528, %v3300, 0.0
      %v3336 = vadd.f32 %v3334, %v3335
      %v3337 = vsel %vm1528, %v3301, 0.0
      %v3338 = vadd.f32 %v3336, %v3337
      %v3339 = vsel %vm1528, %v3302, 0.0
      %v3340 = vadd.f32 %v3338, %v3339
      %v3341 = vsel %vm1528, %v3303, 0.0
      %v3342 = vadd.f32 %v3340, %v3341
      %v3343 = vsel %vm1528, %v3304, 0.0
      %v3344 = vadd.f32 %v3342, %v3343
      %v3345 = vsel %vm1528, %v3305, 0.0
      %v3346 = vadd.f32 %v3344, %v3345
      %v3347 = vsel %vm1528, %v3306, 0.0
      %v3348 = vadd.f32 %v3346, %v3347
      %v3349 = vsel %vm1528, %v3307, 0.0
      %v3350 = vadd.f32 %v3348, %v3349
      %v3351 = vsel %vm1528, %v3308, 0.0
      %v3352 = vadd.f32 %v3350, %v3351
      %v3353 = vsel %vm1528, %v3309, 0.0
      %v3354 = vadd.f32 %v3352, %v3353
      %v3355 = vsel %vm1528, %v3310, 0.0
      %v3356 = vadd.f32 %v3354, %v3355
      %v3357 = vsel %vm1528, %v3311, 0.0
      %v3358 = vadd.f32 %v3356, %v3357
      %v3359 = vsel %vm1528, %v3312, 0.0
      %v3360 = vadd.f32 %v3358, %v3359
      %v3361 = vsel %vm1528, %v3313, 0.0
      %v3362 = vadd.f32 %v3360, %v3361
      %v3363 = vsel %vm1528, %v3314, 0.0
      %v3364 = vadd.f32 %v3362, %v3363
      %v3365 = vsel %vm1528, %v3315, 0.0
      %v3366 = vadd.f32 %v3364, %v3365
      %v3367 = vsel %vm1528, %v3316, 0.0
      %v3368 = vadd.f32 %v3366, %v3367
      %v3369 = vsel %vm1528, %v3317, 0.0
      %v3370 = vadd.f32 %v3368, %v3369
      %v3371 = vsel %vm1528, %v3318, 0.0
      %v3372 = vadd.f32 %v3370, %v3371
      %v3373 = vsel %vm1528, %v3319, 0.0
      %v3374 = vadd.f32 %v3372, %v3373
      %v3375 = vsel %vm1528, %v3320, 0.0
      %v3376 = vadd.f32 %v3374, %v3375
      %v3377 = vsel %vm1528, %v3321, 0.0
      %v3378 = vadd.f32 %v3376, %v3377
      %v3379 = vsel %vm1528, %v3322, 0.0
      %v3380 = vadd.f32 %v3378, %v3379
      %v3381 = vsel %vm1528, %v3323, 0.0
      %v3382 = vadd.f32 %v3380, %v3381
      %v3383 = vsel %vm1528, %v3324, 0.0
      %v3384 = vadd.f32 %v3382, %v3383
      %v3385 = vsel %vm1528, %v3325, 0.0
      %v3386 = vadd.f32 %v3384, %v3385
      %v3387 = vsel %vm1528, %v3326, 0.0
      %v3388 = vadd.f32 %v3386, %v3387
      %v3389 = vsel %vm1528, %v3327, 0.0
      %v3390 = vadd.f32 %v3388, %v3389
      %v3391 = vrot.slane %v3390, 4
      %v3392 = vadd.f32 %v3390, %v3391
      %v3393 = vrot.slane %v3392, 2
      %v3394 = vadd.f32 %v3392, %v3393
      %v3395 = vrot.slane %v3394, 1
      %v3396 = vadd.f32 %v3394, %v3395
      %v3397 = vmul.f32 %v3396, 0.00390625
      %v3398 = vmul.f32 %v3296, %v3296
      %v3399 = vmul.f32 %v3297, %v3297
      %v3400 = vmul.f32 %v3298, %v3298
      %v3401 = vmul.f32 %v3299, %v3299
      %v3402 = vmul.f32 %v3300, %v3300
      %v3403 = vmul.f32 %v3301, %v3301
      %v3404 = vmul.f32 %v3302, %v3302
      %v3405 = vmul.f32 %v3303, %v3303
      %v3406 = vmul.f32 %v3304, %v3304
      %v3407 = vmul.f32 %v3305, %v3305
      %v3408 = vmul.f32 %v3306, %v3306
      %v3409 = vmul.f32 %v3307, %v3307
      %v3410 = vmul.f32 %v3308, %v3308
      %v3411 = vmul.f32 %v3309, %v3309
      %v3412 = vmul.f32 %v3310, %v3310
      %v3413 = vmul.f32 %v3311, %v3311
      %v3414 = vmul.f32 %v3312, %v3312
      %v3415 = vmul.f32 %v3313, %v3313
      %v3416 = vmul.f32 %v3314, %v3314
      %v3417 = vmul.f32 %v3315, %v3315
      %v3418 = vmul.f32 %v3316, %v3316
      %v3419 = vmul.f32 %v3317, %v3317
      %v3420 = vmul.f32 %v3318, %v3318
      %v3421 = vmul.f32 %v3319, %v3319
      %v3422 = vmul.f32 %v3320, %v3320
      %v3423 = vmul.f32 %v3321, %v3321
      %v3424 = vmul.f32 %v3322, %v3322
      %v3425 = vmul.f32 %v3323, %v3323
      %v3426 = vmul.f32 %v3324, %v3324
      %v3427 = vmul.f32 %v3325, %v3325
      %v3428 = vmul.f32 %v3326, %v3326
      %v3429 = vmul.f32 %v3327, %v3327
      %v3430 = vsel %vm1528, %v3398, 0.0
      %v3431 = vsel %vm1528, %v3399, 0.0
      %v3432 = vadd.f32 %v3430, %v3431
      %v3433 = vsel %vm1528, %v3400, 0.0
      %v3434 = vadd.f32 %v3432, %v3433
      %v3435 = vsel %vm1528, %v3401, 0.0
      %v3436 = vadd.f32 %v3434, %v3435
      %v3437 = vsel %vm1528, %v3402, 0.0
      %v3438 = vadd.f32 %v3436, %v3437
      %v3439 = vsel %vm1528, %v3403, 0.0
      %v3440 = vadd.f32 %v3438, %v3439
      %v3441 = vsel %vm1528, %v3404, 0.0
      %v3442 = vadd.f32 %v3440, %v3441
      %v3443 = vsel %vm1528, %v3405, 0.0
      %v3444 = vadd.f32 %v3442, %v3443
      %v3445 = vsel %vm1528, %v3406, 0.0
      %v3446 = vadd.f32 %v3444, %v3445
      %v3447 = vsel %vm1528, %v3407, 0.0
      %v3448 = vadd.f32 %v3446, %v3447
      %v3449 = vsel %vm1528, %v3408, 0.0
      %v3450 = vadd.f32 %v3448, %v3449
      %v3451 = vsel %vm1528, %v3409, 0.0
      %v3452 = vadd.f32 %v3450, %v3451
      %v3453 = vsel %vm1528, %v3410, 0.0
      %v3454 = vadd.f32 %v3452, %v3453
      %v3455 = vsel %vm1528, %v3411, 0.0
      %v3456 = vadd.f32 %v3454, %v3455
      %v3457 = vsel %vm1528, %v3412, 0.0
      %v3458 = vadd.f32 %v3456, %v3457
      %v3459 = vsel %vm1528, %v3413, 0.0
      %v3460 = vadd.f32 %v3458, %v3459
      %v3461 = vsel %vm1528, %v3414, 0.0
      %v3462 = vadd.f32 %v3460, %v3461
      %v3463 = vsel %vm1528, %v3415, 0.0
      %v3464 = vadd.f32 %v3462, %v3463
      %v3465 = vsel %vm1528, %v3416, 0.0
      %v3466 = vadd.f32 %v3464, %v3465
      %v3467 = vsel %vm1528, %v3417, 0.0
      %v3468 = vadd.f32 %v3466, %v3467
      %v3469 = vsel %vm1528, %v3418, 0.0
      %v3470 = vadd.f32 %v3468, %v3469
      %v3471 = vsel %vm1528, %v3419, 0.0
      %v3472 = vadd.f32 %v3470, %v3471
      %v3473 = vsel %vm1528, %v3420, 0.0
      %v3474 = vadd.f32 %v3472, %v3473
      %v3475 = vsel %vm1528, %v3421, 0.0
      %v3476 = vadd.f32 %v3474, %v3475
      %v3477 = vsel %vm1528, %v3422, 0.0
      %v3478 = vadd.f32 %v3476, %v3477
      %v3479 = vsel %vm1528, %v3423, 0.0
      %v3480 = vadd.f32 %v3478, %v3479
      %v3481 = vsel %vm1528, %v3424, 0.0
      %v3482 = vadd.f32 %v3480, %v3481
      %v3483 = vsel %vm1528, %v3425, 0.0
      %v3484 = vadd.f32 %v3482, %v3483
      %v3485 = vsel %vm1528, %v3426, 0.0
      %v3486 = vadd.f32 %v3484, %v3485
      %v3487 = vsel %vm1528, %v3427, 0.0
      %v3488 = vadd.f32 %v3486, %v3487
      %v3489 = vsel %vm1528, %v3428, 0.0
      %v3490 = vadd.f32 %v3488, %v3489
      %v3491 = vsel %vm1528, %v3429, 0.0
      %v3492 = vadd.f32 %v3490, %v3491
      %v3493 = vrot.slane %v3492, 4
      %v3494 = vadd.f32 %v3492, %v3493
      %v3495 = vrot.slane %v3494, 2
      %v3496 = vadd.f32 %v3494, %v3495
      %v3497 = vrot.slane %v3496, 1
      %v3498 = vadd.f32 %v3496, %v3497
      %v3499 = vmul.f32 %v3498, 0.00390625
      %v3500 = vmul.f32 %v3397, %v3397
      %v3501 = vsub.f32 %v3499, %v3500
      %v3502 = vmax.f32 %v3501, 0.0
      %v3503 = vsub.f32 %v3296, %v3397
      %v3504 = vsub.f32 %v3297, %v3397
      %v3505 = vsub.f32 %v3298, %v3397
      %v3506 = vsub.f32 %v3299, %v3397
      %v3507 = vsub.f32 %v3300, %v3397
      %v3508 = vsub.f32 %v3301, %v3397
      %v3509 = vsub.f32 %v3302, %v3397
      %v3510 = vsub.f32 %v3303, %v3397
      %v3511 = vsub.f32 %v3304, %v3397
      %v3512 = vsub.f32 %v3305, %v3397
      %v3513 = vsub.f32 %v3306, %v3397
      %v3514 = vsub.f32 %v3307, %v3397
      %v3515 = vsub.f32 %v3308, %v3397
      %v3516 = vsub.f32 %v3309, %v3397
      %v3517 = vsub.f32 %v3310, %v3397
      %v3518 = vsub.f32 %v3311, %v3397
      %v3519 = vsub.f32 %v3312, %v3397
      %v3520 = vsub.f32 %v3313, %v3397
      %v3521 = vsub.f32 %v3314, %v3397
      %v3522 = vsub.f32 %v3315, %v3397
      %v3523 = vsub.f32 %v3316, %v3397
      %v3524 = vsub.f32 %v3317, %v3397
      %v3525 = vsub.f32 %v3318, %v3397
      %v3526 = vsub.f32 %v3319, %v3397
      %v3527 = vsub.f32 %v3320, %v3397
      %v3528 = vsub.f32 %v3321, %v3397
      %v3529 = vsub.f32 %v3322, %v3397
      %v3530 = vsub.f32 %v3323, %v3397
      %v3531 = vsub.f32 %v3324, %v3397
      %v3532 = vsub.f32 %v3325, %v3397
      %v3533 = vsub.f32 %v3326, %v3397
      %v3534 = vsub.f32 %v3327, %v3397
      %v3535 = vadd.f32 %v3502, 1e-05
      %v3536 = vrsqrt.pop %v3535
      %v3537 = vmul.f32 %v3503, %v3536
      %v3538 = vmul.f32 %v3504, %v3536
      %v3539 = vmul.f32 %v3505, %v3536
      %v3540 = vmul.f32 %v3506, %v3536
      %v3541 = vmul.f32 %v3507, %v3536
      %v3542 = vmul.f32 %v3508, %v3536
      %v3543 = vmul.f32 %v3509, %v3536
      %v3544 = vmul.f32 %v3510, %v3536
      %v3545 = vmul.f32 %v3511, %v3536
      %v3546 = vmul.f32 %v3512, %v3536
      %v3547 = vmul.f32 %v3513, %v3536
      %v3548 = vmul.f32 %v3514, %v3536
      %v3549 = vmul.f32 %v3515, %v3536
      %v3550 = vmul.f32 %v3516, %v3536
      %v3551 = vmul.f32 %v3517, %v3536
      %v3552 = vmul.f32 %v3518, %v3536
      %v3553 = vmul.f32 %v3519, %v3536
      %v3554 = vmul.f32 %v3520, %v3536
      %v3555 = vmul.f32 %v3521, %v3536
      %v3556 = vmul.f32 %v3522, %v3536
      %v3557 = vmul.f32 %v3523, %v3536
      %v3558 = vmul.f32 %v3524, %v3536
      %v3559 = vmul.f32 %v3525, %v3536
      %v3560 = vmul.f32 %v3526, %v3536
      %v3561 = vmul.f32 %v3527, %v3536
      %v3562 = vmul.f32 %v3528, %v3536
      %v3563 = vmul.f32 %v3529, %v3536
      %v3564 = vmul.f32 %v3530, %v3536
      %v3565 = vmul.f32 %v3531, %v3536
      %v3566 = vmul.f32 %v3532, %v3536
      %v3567 = vmul.f32 %v3533, %v3536
      %v3568 = vmul.f32 %v3534, %v3536
      %v3569 = vmax.f32 %v3537, 0.0
      %v3570 = vmax.f32 %v3538, 0.0
      %v3571 = vmax.f32 %v3539, 0.0
      %v3572 = vmax.f32 %v3540, 0.0
      %v3573 = vmax.f32 %v3541, 0.0
      %v3574 = vmax.f32 %v3542, 0.0
      %v3575 = vmax.f32 %v3543, 0.0
      %v3576 = vmax.f32 %v3544, 0.0
      %v3577 = vmax.f32 %v3545, 0.0
      %v3578 = vmax.f32 %v3546, 0.0
      %v3579 = vmax.f32 %v3547, 0.0
      %v3580 = vmax.f32 %v3548, 0.0
      %v3581 = vmax.f32 %v3549, 0.0
      %v3582 = vmax.f32 %v3550, 0.0
      %v3583 = vmax.f32 %v3551, 0.0
      %v3584 = vmax.f32 %v3552, 0.0
      %v3585 = vmax.f32 %v3553, 0.0
      %v3586 = vmax.f32 %v3554, 0.0
      %v3587 = vmax.f32 %v3555, 0.0
      %v3588 = vmax.f32 %v3556, 0.0
      %v3589 = vmax.f32 %v3557, 0.0
      %v3590 = vmax.f32 %v3558, 0.0
      %v3591 = vmax.f32 %v3559, 0.0
      %v3592 = vmax.f32 %v3560, 0.0
      %v3593 = vmax.f32 %v3561, 0.0
      %v3594 = vmax.f32 %v3562, 0.0
      %v3595 = vmax.f32 %v3563, 0.0
      %v3596 = vmax.f32 %v3564, 0.0
      %v3597 = vmax.f32 %v3565, 0.0
      %v3598 = vmax.f32 %v3566, 0.0
      %v3599 = vmax.f32 %v3567, 0.0
      %v3600 = vmax.f32 %v3568, 0.0
      %v3601 = vpack.c.bf16 %v3570, %v3569
      %v3602 = vpack.c.bf16 %v3572, %v3571
      %v3603 = vpack.c.bf16 %v3574, %v3573
      %v3604 = vpack.c.bf16 %v3576, %v3575
      %v3605 = vpack.c.bf16 %v3578, %v3577
      %v3606 = vpack.c.bf16 %v3580, %v3579
      %v3607 = vpack.c.bf16 %v3582, %v3581
      %v3608 = vpack.c.bf16 %v3584, %v3583
      %v3609 = vpack.c.bf16 %v3586, %v3585
      %v3610 = vpack.c.bf16 %v3588, %v3587
      %v3611 = vpack.c.bf16 %v3590, %v3589
      %v3612 = vpack.c.bf16 %v3592, %v3591
      %v3613 = vpack.c.bf16 %v3594, %v3593
      %v3614 = vpack.c.bf16 %v3596, %v3595
      %v3615 = vpack.c.bf16 %v3598, %v3597
      %v3616 = vpack.c.bf16 %v3600, %v3599
      %v3633 = vunpack.c.l.b16 %v3601
      %v3634 = vunpack.c.h.b16 %v3601
      %v3635 = vunpack.c.l.b16 %v3602
      %v3636 = vunpack.c.h.b16 %v3602
      %v3637 = vunpack.c.l.b16 %v3603
      %v3638 = vunpack.c.h.b16 %v3603
      %v3639 = vunpack.c.l.b16 %v3604
      %v3640 = vunpack.c.h.b16 %v3604
      %v3641 = vunpack.c.l.b16 %v3605
      %v3642 = vunpack.c.h.b16 %v3605
      %v3643 = vunpack.c.l.b16 %v3606
      %v3644 = vunpack.c.h.b16 %v3606
      %v3645 = vunpack.c.l.b16 %v3607
      %v3646 = vunpack.c.h.b16 %v3607
      %v3647 = vunpack.c.l.b16 %v3608
      %v3648 = vunpack.c.h.b16 %v3608
      %v3649 = vunpack.c.l.b16 %v3609
      %v3650 = vunpack.c.h.b16 %v3609
      %v3651 = vunpack.c.l.b16 %v3610
      %v3652 = vunpack.c.h.b16 %v3610
      %v3653 = vunpack.c.l.b16 %v3611
      %v3654 = vunpack.c.h.b16 %v3611
      %v3655 = vunpack.c.l.b16 %v3612
      %v3656 = vunpack.c.h.b16 %v3612
      %v3657 = vunpack.c.l.b16 %v3613
      %v3658 = vunpack.c.h.b16 %v3613
      %v3659 = vunpack.c.l.b16 %v3614
      %v3660 = vunpack.c.h.b16 %v3614
      %v3661 = vunpack.c.l.b16 %v3615
      %v3662 = vunpack.c.h.b16 %v3615
      %v3663 = vunpack.c.l.b16 %v3616
      %v3664 = vunpack.c.h.b16 %v3616
      %v3665 = vpack.c.b16 %v3633, %v3633
      %v3666 = vpack.c.b16 %v3634, %v3634
      %v3667 = vpack.c.b16 %v3635, %v3635
      %v3668 = vpack.c.b16 %v3636, %v3636
      %v3669 = vpack.c.b16 %v3637, %v3637
      %v3670 = vpack.c.b16 %v3638, %v3638
      %v3671 = vpack.c.b16 %v3639, %v3639
      %v3672 = vpack.c.b16 %v3640, %v3640
      %v3673 = vpack.c.b16 %v3641, %v3641
      %v3674 = vpack.c.b16 %v3642, %v3642
      %v3675 = vpack.c.b16 %v3643, %v3643
      %v3676 = vpack.c.b16 %v3644, %v3644
      %v3677 = vpack.c.b16 %v3645, %v3645
      %v3678 = vpack.c.b16 %v3646, %v3646
      %v3679 = vpack.c.b16 %v3647, %v3647
      %v3680 = vpack.c.b16 %v3648, %v3648
      %v3681 = vpack.c.b16 %v3649, %v3649
      %v3682 = vpack.c.b16 %v3650, %v3650
      %v3683 = vpack.c.b16 %v3651, %v3651
      %v3684 = vpack.c.b16 %v3652, %v3652
      %v3685 = vpack.c.b16 %v3653, %v3653
      %v3686 = vpack.c.b16 %v3654, %v3654
      %v3687 = vpack.c.b16 %v3655, %v3655
      %v3688 = vpack.c.b16 %v3656, %v3656
      %v3689 = vpack.c.b16 %v3657, %v3657
      %v3690 = vpack.c.b16 %v3658, %v3658
      %v3691 = vpack.c.b16 %v3659, %v3659
      %v3692 = vpack.c.b16 %v3660, %v3660
      %v3693 = vpack.c.b16 %v3661, %v3661
      %v3694 = vpack.c.b16 %v3662, %v3662
      %v3695 = vpack.c.b16 %v3663, %v3663
      %v3696 = vpack.c.b16 %v3664, %v3664
      %v3698 = vshrl.u32 %v3665, 16
      %v3700 = vrot.slane %v3698, 7
      %v3701 = vshll.u32 %v3665, 16
      %v3703 = vor.u32 %v3700, %v3701
      %v3704 = vrot.slane %v3700, 4
      %v3706 = vshrl.u32 %v3666, 16
      %v3708 = vrot.slane %v3706, 7
      %v3709 = vshll.u32 %v3666, 16
      %v3711 = vor.u32 %v3708, %v3709
      %v3712 = vsel %vm302, %v3704, %v3711
      %v3713 = vrot.slane %v3708, 4
      %v3715 = vshrl.u32 %v3667, 16
      %v3717 = vrot.slane %v3715, 7
      %v3718 = vshll.u32 %v3667, 16
      %v3720 = vor.u32 %v3717, %v3718
      %v3721 = vrot.slane %v3717, 4
      %v3723 = vshrl.u32 %v3668, 16
      %v3725 = vrot.slane %v3723, 7
      %v3726 = vshll.u32 %v3668, 16
      %v3728 = vor.u32 %v3725, %v3726
      %v3729 = vsel %vm302, %v3721, %v3728
      %v3730 = vrot.slane %v3725, 4
      %v3732 = vshrl.u32 %v3669, 16
      %v3734 = vrot.slane %v3732, 7
      %v3735 = vshll.u32 %v3669, 16
      %v3737 = vor.u32 %v3734, %v3735
      %v3738 = vrot.slane %v3734, 4
      %v3740 = vshrl.u32 %v3670, 16
      %v3742 = vrot.slane %v3740, 7
      %v3743 = vshll.u32 %v3670, 16
      %v3745 = vor.u32 %v3742, %v3743
      %v3746 = vsel %vm302, %v3738, %v3745
      %v3747 = vrot.slane %v3742, 4
      %v3749 = vshrl.u32 %v3671, 16
      %v3751 = vrot.slane %v3749, 7
      %v3752 = vshll.u32 %v3671, 16
      %v3754 = vor.u32 %v3751, %v3752
      %v3755 = vrot.slane %v3751, 4
      %v3757 = vshrl.u32 %v3672, 16
      %v3759 = vrot.slane %v3757, 7
      %v3760 = vshll.u32 %v3672, 16
      %v3762 = vor.u32 %v3759, %v3760
      %v3763 = vsel %vm302, %v3755, %v3762
      %v3764 = vrot.slane %v3759, 4
      %v3766 = vshrl.u32 %v3673, 16
      %v3768 = vrot.slane %v3766, 7
      %v3769 = vshll.u32 %v3673, 16
      %v3771 = vor.u32 %v3768, %v3769
      %v3772 = vrot.slane %v3768, 4
      %v3774 = vshrl.u32 %v3674, 16
      %v3776 = vrot.slane %v3774, 7
      %v3777 = vshll.u32 %v3674, 16
      %v3779 = vor.u32 %v3776, %v3777
      %v3780 = vsel %vm302, %v3772, %v3779
      %v3781 = vrot.slane %v3776, 4
      %v3783 = vshrl.u32 %v3675, 16
      %v3785 = vrot.slane %v3783, 7
      %v3786 = vshll.u32 %v3675, 16
      %v3788 = vor.u32 %v3785, %v3786
      %v3789 = vrot.slane %v3785, 4
      %v3791 = vshrl.u32 %v3676, 16
      %v3793 = vrot.slane %v3791, 7
      %v3794 = vshll.u32 %v3676, 16
      %v3796 = vor.u32 %v3793, %v3794
      %v3797 = vsel %vm302, %v3789, %v3796
      %v3798 = vrot.slane %v3793, 4
      %v3800 = vshrl.u32 %v3677, 16
      %v3802 = vrot.slane %v3800, 7
      %v3803 = vshll.u32 %v3677, 16
      %v3805 = vor.u32 %v3802, %v3803
      %v3806 = vrot.slane %v3802, 4
      %v3808 = vshrl.u32 %v3678, 16
      %v3810 = vrot.slane %v3808, 7
      %v3811 = vshll.u32 %v3678, 16
      %v3813 = vor.u32 %v3810, %v3811
      %v3814 = vsel %vm302, %v3806, %v3813
      %v3815 = vrot.slane %v3810, 4
      %v3817 = vshrl.u32 %v3679, 16
      %v3819 = vrot.slane %v3817, 7
      %v3820 = vshll.u32 %v3679, 16
      %v3822 = vor.u32 %v3819, %v3820
      %v3823 = vrot.slane %v3819, 4
      %v3825 = vshrl.u32 %v3680, 16
      %v3827 = vrot.slane %v3825, 7
      %v3828 = vshll.u32 %v3680, 16
      %v3830 = vor.u32 %v3827, %v3828
      %v3831 = vsel %vm302, %v3823, %v3830
      %v3832 = vrot.slane %v3827, 4
      %v3834 = vshrl.u32 %v3681, 16
      %v3836 = vrot.slane %v3834, 7
      %v3837 = vshll.u32 %v3681, 16
      %v3839 = vor.u32 %v3836, %v3837
      %v3840 = vrot.slane %v3836, 4
      %v3842 = vshrl.u32 %v3682, 16
      %v3844 = vrot.slane %v3842, 7
      %v3845 = vshll.u32 %v3682, 16
      %v3847 = vor.u32 %v3844, %v3845
      %v3848 = vsel %vm302, %v3840, %v3847
      %v3849 = vrot.slane %v3844, 4
      %v3851 = vshrl.u32 %v3683, 16
      %v3853 = vrot.slane %v3851, 7
      %v3854 = vshll.u32 %v3683, 16
      %v3856 = vor.u32 %v3853, %v3854
      %v3857 = vrot.slane %v3853, 4
      %v3859 = vshrl.u32 %v3684, 16
      %v3861 = vrot.slane %v3859, 7
      %v3862 = vshll.u32 %v3684, 16
      %v3864 = vor.u32 %v3861, %v3862
      %v3865 = vsel %vm302, %v3857, %v3864
      %v3866 = vrot.slane %v3861, 4
      %v3868 = vshrl.u32 %v3685, 16
      %v3870 = vrot.slane %v3868, 7
      %v3871 = vshll.u32 %v3685, 16
      %v3873 = vor.u32 %v3870, %v3871
      %v3874 = vrot.slane %v3870, 4
      %v3876 = vshrl.u32 %v3686, 16
      %v3878 = vrot.slane %v3876, 7
      %v3879 = vshll.u32 %v3686, 16
      %v3881 = vor.u32 %v3878, %v3879
      %v3882 = vsel %vm302, %v3874, %v3881
      %v3883 = vrot.slane %v3878, 4
      %v3885 = vshrl.u32 %v3687, 16
      %v3887 = vrot.slane %v3885, 7
      %v3888 = vshll.u32 %v3687, 16
      %v3890 = vor.u32 %v3887, %v3888
      %v3891 = vrot.slane %v3887, 4
      %v3893 = vshrl.u32 %v3688, 16
      %v3895 = vrot.slane %v3893, 7
      %v3896 = vshll.u32 %v3688, 16
      %v3898 = vor.u32 %v3895, %v3896
      %v3899 = vsel %vm302, %v3891, %v3898
      %v3900 = vrot.slane %v3895, 4
      %v3902 = vshrl.u32 %v3689, 16
      %v3904 = vrot.slane %v3902, 7
      %v3905 = vshll.u32 %v3689, 16
      %v3907 = vor.u32 %v3904, %v3905
      %v3908 = vrot.slane %v3904, 4
      %v3910 = vshrl.u32 %v3690, 16
      %v3912 = vrot.slane %v3910, 7
      %v3913 = vshll.u32 %v3690, 16
      %v3915 = vor.u32 %v3912, %v3913
      %v3916 = vsel %vm302, %v3908, %v3915
      %v3917 = vrot.slane %v3912, 4
      %v3919 = vshrl.u32 %v3691, 16
      %v3921 = vrot.slane %v3919, 7
      %v3922 = vshll.u32 %v3691, 16
      %v3924 = vor.u32 %v3921, %v3922
      %v3925 = vrot.slane %v3921, 4
      %v3927 = vshrl.u32 %v3692, 16
      %v3929 = vrot.slane %v3927, 7
      %v3930 = vshll.u32 %v3692, 16
      %v3932 = vor.u32 %v3929, %v3930
      %v3933 = vsel %vm302, %v3925, %v3932
      %v3934 = vrot.slane %v3929, 4
      %v3936 = vshrl.u32 %v3693, 16
      %v3938 = vrot.slane %v3936, 7
      %v3939 = vshll.u32 %v3693, 16
      %v3941 = vor.u32 %v3938, %v3939
      %v3942 = vrot.slane %v3938, 4
      %v3944 = vshrl.u32 %v3694, 16
      %v3946 = vrot.slane %v3944, 7
      %v3947 = vshll.u32 %v3694, 16
      %v3949 = vor.u32 %v3946, %v3947
      %v3950 = vsel %vm302, %v3942, %v3949
      %v3951 = vrot.slane %v3946, 4
      %v3953 = vshrl.u32 %v3695, 16
      %v3955 = vrot.slane %v3953, 7
      %v3956 = vshll.u32 %v3695, 16
      %v3958 = vor.u32 %v3955, %v3956
      %v3959 = vrot.slane %v3955, 4
      %v3961 = vshrl.u32 %v3696, 16
      %v3963 = vrot.slane %v3961, 7
      %v3964 = vshll.u32 %v3696, 16
      %v3966 = vor.u32 %v3963, %v3964
      %v3967 = vsel %vm302, %v3959, %v3966
      %v3968 = vrot.slane %v3963, 4
      %v4017 = vsel %vm626, %v3703, %v1596
      %4018 = vst [vmem:[%s623] sm:$0xf] %v4017
      %4019 = vst.msk [vmem:[%s623 + $0x4] sm:$0xf] %vm630, %v3712
      %v4020 = vld [vmem:[%s623 + $0x8] sm:$0x1]
      %v4021 = vsel %vm633, %v3713, %v4020
      %4022 = vst [vmem:[%s623 + $0x8] sm:$0x1] %v4021
      %v4023 = vld [vmem:[%s623 + $0xc] sm:$0xf]
      %v4024 = vsel %vm626, %v3720, %v4023
      %4025 = vst [vmem:[%s623 + $0xc] sm:$0xf] %v4024
      %4026 = vst.msk [vmem:[%s623 + $0x10] sm:$0xf] %vm630, %v3729
      %v4027 = vld [vmem:[%s623 + $0x14] sm:$0x1]
      %v4028 = vsel %vm633, %v3730, %v4027
      %4029 = vst [vmem:[%s623 + $0x14] sm:$0x1] %v4028
      %v4030 = vld [vmem:[%s623 + $0x18] sm:$0xf]
      %v4031 = vsel %vm626, %v3737, %v4030
      %4032 = vst [vmem:[%s623 + $0x18] sm:$0xf] %v4031
      %4033 = vst.msk [vmem:[%s623 + $0x1c] sm:$0xf] %vm630, %v3746
      %v4034 = vld [vmem:[%s623 + $0x20] sm:$0x1]
      %v4035 = vsel %vm633, %v3747, %v4034
      %4036 = vst [vmem:[%s623 + $0x20] sm:$0x1] %v4035
      %v4037 = vld [vmem:[%s623 + $0x24] sm:$0xf]
      %v4038 = vsel %vm626, %v3754, %v4037
      %4039 = vst [vmem:[%s623 + $0x24] sm:$0xf] %v4038
      %4040 = vst.msk [vmem:[%s623 + $0x28] sm:$0xf] %vm630, %v3763
      %v4041 = vld [vmem:[%s623 + $0x2c] sm:$0x1]
      %v4042 = vsel %vm633, %v3764, %v4041
      %4043 = vst [vmem:[%s623 + $0x2c] sm:$0x1] %v4042
      %v4044 = vld [vmem:[%s623 + $0x30] sm:$0xf]
      %v4045 = vsel %vm626, %v3771, %v4044
      %4046 = vst [vmem:[%s623 + $0x30] sm:$0xf] %v4045
      %4047 = vst.msk [vmem:[%s623 + $0x34] sm:$0xf] %vm630, %v3780
      %v4048 = vld [vmem:[%s623 + $0x38] sm:$0x1]
      %v4049 = vsel %vm633, %v3781, %v4048
      %4050 = vst [vmem:[%s623 + $0x38] sm:$0x1] %v4049
      %v4051 = vld [vmem:[%s623 + $0x3c] sm:$0xf]
      %v4052 = vsel %vm626, %v3788, %v4051
      %4053 = vst [vmem:[%s623 + $0x3c] sm:$0xf] %v4052
      %4054 = vst.msk [vmem:[%s623 + $0x40] sm:$0xf] %vm630, %v3797
      %v4055 = vld [vmem:[%s623 + $0x44] sm:$0x1]
      %v4056 = vsel %vm633, %v3798, %v4055
      %4057 = vst [vmem:[%s623 + $0x44] sm:$0x1] %v4056
      %v4058 = vld [vmem:[%s623 + $0x48] sm:$0xf]
      %v4059 = vsel %vm626, %v3805, %v4058
      %4060 = vst [vmem:[%s623 + $0x48] sm:$0xf] %v4059
      %4061 = vst.msk [vmem:[%s623 + $0x4c] sm:$0xf] %vm630, %v3814
      %v4062 = vld [vmem:[%s623 + $0x50] sm:$0x1]
      %v4063 = vsel %vm633, %v3815, %v4062
      %4064 = vst [vmem:[%s623 + $0x50] sm:$0x1] %v4063
      %v4065 = vld [vmem:[%s623 + $0x54] sm:$0xf]
      %v4066 = vsel %vm626, %v3822, %v4065
      %4067 = vst [vmem:[%s623 + $0x54] sm:$0xf] %v4066
      %4068 = vst.msk [vmem:[%s623 + $0x58] sm:$0xf] %vm630, %v3831
      %v4069 = vld [vmem:[%s623 + $0x5c] sm:$0x1]
      %v4070 = vsel %vm633, %v3832, %v4069
      %4071 = vst [vmem:[%s623 + $0x5c] sm:$0x1] %v4070
      %v4072 = vld [vmem:[%s623 + $0x60] sm:$0xf]
      %v4073 = vsel %vm626, %v3839, %v4072
      %4074 = vst [vmem:[%s623 + $0x60] sm:$0xf] %v4073
      %4075 = vst.msk [vmem:[%s623 + $0x64] sm:$0xf] %vm630, %v3848
      %v4076 = vld [vmem:[%s623 + $0x68] sm:$0x1]
      %v4077 = vsel %vm633, %v3849, %v4076
      %4078 = vst [vmem:[%s623 + $0x68] sm:$0x1] %v4077
      %v4079 = vld [vmem:[%s623 + $0x6c] sm:$0xf]
      %v4080 = vsel %vm626, %v3856, %v4079
      %4081 = vst [vmem:[%s623 + $0x6c] sm:$0xf] %v4080
      %4082 = vst.msk [vmem:[%s623 + $0x70] sm:$0xf] %vm630, %v3865
      %v4083 = vld [vmem:[%s623 + $0x74] sm:$0x1]
      %v4084 = vsel %vm633, %v3866, %v4083
      %4085 = vst [vmem:[%s623 + $0x74] sm:$0x1] %v4084
      %v4086 = vld [vmem:[%s623 + $0x78] sm:$0xf]
      %v4087 = vsel %vm626, %v3873, %v4086
      %4088 = vst [vmem:[%s623 + $0x78] sm:$0xf] %v4087
      %4089 = vst.msk [vmem:[%s623 + $0x7c] sm:$0xf] %vm630, %v3882
      %v4090 = vld [vmem:[%s623 + $0x80] sm:$0x1]
      %v4091 = vsel %vm633, %v3883, %v4090
      %4092 = vst [vmem:[%s623 + $0x80] sm:$0x1] %v4091
      %v4093 = vld [vmem:[%s623 + $0x84] sm:$0xf]
      %v4094 = vsel %vm626, %v3890, %v4093
      %4095 = vst [vmem:[%s623 + $0x84] sm:$0xf] %v4094
      %4096 = vst.msk [vmem:[%s623 + $0x88] sm:$0xf] %vm630, %v3899
      %v4097 = vld [vmem:[%s623 + $0x8c] sm:$0x1]
      %v4098 = vsel %vm633, %v3900, %v4097
      %4099 = vst [vmem:[%s623 + $0x8c] sm:$0x1] %v4098
      %v4100 = vld [vmem:[%s623 + $0x90] sm:$0xf]
      %v4101 = vsel %vm626, %v3907, %v4100
      %4102 = vst [vmem:[%s623 + $0x90] sm:$0xf] %v4101
      %4103 = vst.msk [vmem:[%s623 + $0x94] sm:$0xf] %vm630, %v3916
      %v4104 = vld [vmem:[%s623 + $0x98] sm:$0x1]
      %v4105 = vsel %vm633, %v3917, %v4104
      %4106 = vst [vmem:[%s623 + $0x98] sm:$0x1] %v4105
      %v4107 = vld [vmem:[%s623 + $0x9c] sm:$0xf]
      %v4108 = vsel %vm626, %v3924, %v4107
      %4109 = vst [vmem:[%s623 + $0x9c] sm:$0xf] %v4108
      %4110 = vst.msk [vmem:[%s623 + $0xa0] sm:$0xf] %vm630, %v3933
      %v4111 = vld [vmem:[%s623 + $0xa4] sm:$0x1]
      %v4112 = vsel %vm633, %v3934, %v4111
      %4113 = vst [vmem:[%s623 + $0xa4] sm:$0x1] %v4112
      %v4114 = vld [vmem:[%s623 + $0xa8] sm:$0xf]
      %v4115 = vsel %vm626, %v3941, %v4114
      %4116 = vst [vmem:[%s623 + $0xa8] sm:$0xf] %v4115
      %4117 = vst.msk [vmem:[%s623 + $0xac] sm:$0xf] %vm630, %v3950
      %v4118 = vld [vmem:[%s623 + $0xb0] sm:$0x1]
      %v4119 = vsel %vm633, %v3951, %v4118
      %4120 = vst [vmem:[%s623 + $0xb0] sm:$0x1] %v4119
      %v4121 = vld [vmem:[%s623 + $0xb4] sm:$0xf]
      %v4122 = vsel %vm626, %v3958, %v4121
      %4123 = vst [vmem:[%s623 + $0xb4] sm:$0xf] %v4122
      %4124 = vst.msk [vmem:[%s623 + $0xb8] sm:$0xf] %vm630, %v3967
      %v4125 = vld [vmem:[%s623 + $0xbc] sm:$0x1]
      %v4126 = vsel %vm633, %v3968, %v4125
      %4127 = vst [vmem:[%s623 + $0xbc] sm:$0x1] %v4126
      %v4128 = vld [vmem:[#allocation2] sm:$0xf]
      %v4129 = vsel %vm626, %v3720, %v4128
      %4130 = vst [vmem:[#allocation2] sm:$0xf] %v4129
      %4131 = vst.msk [vmem:[#allocation2 + $0x4] sm:$0xf] %vm630, %v3729
      %v4132 = vld [vmem:[#allocation2 + $0x8] sm:$0x1]
      %v4133 = vsel %vm633, %v3730, %v4132
      %4134 = vst [vmem:[#allocation2 + $0x8] sm:$0x1] %v4133
      %v4135 = vld [vmem:[%s749] sm:$0xf]
      %v4136 = vsel %vm626, %v3941, %v4135
      %4137 = vst [vmem:[%s749] sm:$0xf] %v4136
      %4138 = vst.msk [vmem:[%s749 + $0x4] sm:$0xf] %vm630, %v3950
      %v4139 = vld [vmem:[%s749 + $0x8] sm:$0x1]
      %v4140 = vsel %vm633, %v3951, %v4139
      %4141 = vst [vmem:[%s749 + $0x8] sm:$0x1] %v4140
      %v4142 = vld [vmem:[#allocation2] sm:$0x2]
      %v4143 = vld [vmem:[#allocation2 + $0xc] sm:$0x2]
      %v4144 = vld [vmem:[#allocation2 + $0x18] sm:$0x2]
      %v4145 = vld [vmem:[#allocation2 + $0x24] sm:$0x2]
      %v4146 = vld [vmem:[#allocation2 + $0x30] sm:$0x2]
      %v4147 = vld [vmem:[#allocation2 + $0x3c] sm:$0x2]
      %v4148 = vld [vmem:[#allocation2 + $0x48] sm:$0x2]
      %v4149 = vld [vmem:[#allocation2 + $0x54] sm:$0x2]
      %v4150 = vld [vmem:[#allocation2 + $0x60] sm:$0x2]
      %v4151 = vld [vmem:[#allocation2 + $0x6c] sm:$0x2]
      %v4152 = vld [vmem:[#allocation2 + $0x78] sm:$0x2]
      %v4153 = vld [vmem:[#allocation2 + $0x84] sm:$0x2]
      %v4154 = vld [vmem:[#allocation2 + $0x90] sm:$0x2]
      %v4155 = vld [vmem:[#allocation2 + $0x9c] sm:$0x2]
      %v4156 = vld [vmem:[#allocation2 + $0xa8] sm:$0x2]
      %v4157 = vld [vmem:[#allocation2 + $0xb4] sm:$0x2]
      %v4158 = vld [vmem:[#allocation2 + $0xc0] sm:$0x2]
      %v4159 = vld [vmem:[#allocation2 + $0xcc] sm:$0x2]
      %v4178 = vrot.slane %v4142, 5
      %v4179 = vrot.slane %v4178, 4
      %v4180 = vrot.slane %v4143, 5
      %v4181 = vrot.slane %v4180, 4
      %v4182 = vrot.slane %v4144, 5
      %v4183 = vrot.slane %v4182, 4
      %v4184 = vrot.slane %v4145, 5
      %v4185 = vrot.slane %v4184, 4
      %v4186 = vrot.slane %v4146, 5
      %v4187 = vrot.slane %v4186, 4
      %v4188 = vrot.slane %v4147, 5
      %v4189 = vrot.slane %v4188, 4
      %v4190 = vrot.slane %v4148, 5
      %v4191 = vrot.slane %v4190, 4
      %v4192 = vrot.slane %v4149, 5
      %v4193 = vrot.slane %v4192, 4
      %v4194 = vrot.slane %v4150, 5
      %v4195 = vrot.slane %v4194, 4
      %v4196 = vrot.slane %v4151, 5
      %v4197 = vrot.slane %v4196, 4
      %v4198 = vrot.slane %v4152, 5
      %v4199 = vrot.slane %v4198, 4
      %v4200 = vrot.slane %v4153, 5
      %v4201 = vrot.slane %v4200, 4
      %v4202 = vrot.slane %v4154, 5
      %v4203 = vrot.slane %v4202, 4
      %v4204 = vrot.slane %v4155, 5
      %v4205 = vrot.slane %v4204, 4
      %v4206 = vrot.slane %v4156, 5
      %v4207 = vrot.slane %v4206, 4
      %v4208 = vrot.slane %v4157, 5
      %v4209 = vrot.slane %v4208, 4
      %v4210 = vrot.slane %v4158, 5
      %v4211 = vrot.slane %v4210, 4
      %v4212 = vrot.slane %v4159, 5
      %v4213 = vrot.slane %v4212, 4
      %v4232 = vld [vmem:[#allocation2] sm:$0x1]
      %v4233 = vsel %vm633, %v4179, %v4232
      %4234 = vst [vmem:[#allocation2] sm:$0x1] %v4233
      %v4235 = vld [vmem:[#allocation2 + $0xc] sm:$0x1]
      %v4236 = vsel %vm633, %v4181, %v4235
      %4237 = vst [vmem:[#allocation2 + $0xc] sm:$0x1] %v4236
      %v4238 = vld [vmem:[#allocation2 + $0x18] sm:$0x1]
      %v4239 = vsel %vm633, %v4183, %v4238
      %4240 = vst [vmem:[#allocation2 + $0x18] sm:$0x1] %v4239
      %v4241 = vld [vmem:[#allocation2 + $0x24] sm:$0x1]
      %v4242 = vsel %vm633, %v4185, %v4241
      %4243 = vst [vmem:[#allocation2 + $0x24] sm:$0x1] %v4242
      %v4244 = vld [vmem:[#allocation2 + $0x30] sm:$0x1]
      %v4245 = vsel %vm633, %v4187, %v4244
      %4246 = vst [vmem:[#allocation2 + $0x30] sm:$0x1] %v4245
      %v4247 = vld [vmem:[#allocation2 + $0x3c] sm:$0x1]
      %v4248 = vsel %vm633, %v4189, %v4247
      %4249 = vst [vmem:[#allocation2 + $0x3c] sm:$0x1] %v4248
      %v4250 = vld [vmem:[#allocation2 + $0x48] sm:$0x1]
      %v4251 = vsel %vm633, %v4191, %v4250
      %4252 = vst [vmem:[#allocation2 + $0x48] sm:$0x1] %v4251
      %v4253 = vld [vmem:[#allocation2 + $0x54] sm:$0x1]
      %v4254 = vsel %vm633, %v4193, %v4253
      %4255 = vst [vmem:[#allocation2 + $0x54] sm:$0x1] %v4254
      %v4256 = vld [vmem:[#allocation2 + $0x60] sm:$0x1]
      %v4257 = vsel %vm633, %v4195, %v4256
      %4258 = vst [vmem:[#allocation2 + $0x60] sm:$0x1] %v4257
      %v4259 = vld [vmem:[#allocation2 + $0x6c] sm:$0x1]
      %v4260 = vsel %vm633, %v4197, %v4259
      %4261 = vst [vmem:[#allocation2 + $0x6c] sm:$0x1] %v4260
      %v4262 = vld [vmem:[#allocation2 + $0x78] sm:$0x1]
      %v4263 = vsel %vm633, %v4199, %v4262
      %4264 = vst [vmem:[#allocation2 + $0x78] sm:$0x1] %v4263
      %v4265 = vld [vmem:[#allocation2 + $0x84] sm:$0x1]
      %v4266 = vsel %vm633, %v4201, %v4265
      %4267 = vst [vmem:[#allocation2 + $0x84] sm:$0x1] %v4266
      %v4268 = vld [vmem:[#allocation2 + $0x90] sm:$0x1]
      %v4269 = vsel %vm633, %v4203, %v4268
      %4270 = vst [vmem:[#allocation2 + $0x90] sm:$0x1] %v4269
      %v4271 = vld [vmem:[#allocation2 + $0x9c] sm:$0x1]
      %v4272 = vsel %vm633, %v4205, %v4271
      %4273 = vst [vmem:[#allocation2 + $0x9c] sm:$0x1] %v4272
      %v4274 = vld [vmem:[#allocation2 + $0xa8] sm:$0x1]
      %v4275 = vsel %vm633, %v4207, %v4274
      %4276 = vst [vmem:[#allocation2 + $0xa8] sm:$0x1] %v4275
      %v4277 = vld [vmem:[#allocation2 + $0xb4] sm:$0x1]
      %v4278 = vsel %vm633, %v4209, %v4277
      %4279 = vst [vmem:[#allocation2 + $0xb4] sm:$0x1] %v4278
      %v4280 = vld [vmem:[#allocation2 + $0xc0] sm:$0x1]
      %v4281 = vsel %vm633, %v4211, %v4280
      %4282 = vst [vmem:[#allocation2 + $0xc0] sm:$0x1] %v4281
      %v4283 = vld [vmem:[#allocation2 + $0xcc] sm:$0x1]
      %v4284 = vsel %vm633, %v4213, %v4283
      %4285 = vst [vmem:[#allocation2 + $0xcc] sm:$0x1] %v4284
      %v4286 = vld [vmem:[#allocation2 + $0x4] sm:$0x8]
      %v4287 = vld [vmem:[#allocation2 + $0x10] sm:$0x8]
      %v4288 = vld [vmem:[#allocation2 + $0x1c] sm:$0x8]
      %v4289 = vld [vmem:[#allocation2 + $0x28] sm:$0x8]
      %v4290 = vld [vmem:[#allocation2 + $0x34] sm:$0x8]
      %v4291 = vld [vmem:[#allocation2 + $0x40] sm:$0x8]
      %v4292 = vld [vmem:[#allocation2 + $0x4c] sm:$0x8]
      %v4293 = vld [vmem:[#allocation2 + $0x58] sm:$0x8]
      %v4294 = vld [vmem:[#allocation2 + $0x64] sm:$0x8]
      %v4295 = vld [vmem:[#allocation2 + $0x70] sm:$0x8]
      %v4296 = vld [vmem:[#allocation2 + $0x7c] sm:$0x8]
      %v4297 = vld [vmem:[#allocation2 + $0x88] sm:$0x8]
      %v4298 = vld [vmem:[#allocation2 + $0x94] sm:$0x8]
      %v4299 = vld [vmem:[#allocation2 + $0xa0] sm:$0x8]
      %v4300 = vld [vmem:[#allocation2 + $0xac] sm:$0x8]
      %v4301 = vld [vmem:[#allocation2 + $0xb8] sm:$0x8]
      %v4302 = vld [vmem:[#allocation2 + $0xc4] sm:$0x8]
      %v4303 = vld [vmem:[#allocation2 + $0xd0] sm:$0x8]
      %v4322 = vrot.slane %v4286, 7
      %v4323 = vrot.slane %v4322, 4
      %v4324 = vrot.slane %v4287, 7
      %v4325 = vrot.slane %v4324, 4
      %v4326 = vrot.slane %v4288, 7
      %v4327 = vrot.slane %v4326, 4
      %v4328 = vrot.slane %v4289, 7
      %v4329 = vrot.slane %v4328, 4
      %v4330 = vrot.slane %v4290, 7
      %v4331 = vrot.slane %v4330, 4
      %v4332 = vrot.slane %v4291, 7
      %v4333 = vrot.slane %v4332, 4
      %v4334 = vrot.slane %v4292, 7
      %v4335 = vrot.slane %v4334, 4
      %v4336 = vrot.slane %v4293, 7
      %v4337 = vrot.slane %v4336, 4
      %v4338 = vrot.slane %v4294, 7
      %v4339 = vrot.slane %v4338, 4
      %v4340 = vrot.slane %v4295, 7
      %v4341 = vrot.slane %v4340, 4
      %v4342 = vrot.slane %v4296, 7
      %v4343 = vrot.slane %v4342, 4
      %v4344 = vrot.slane %v4297, 7
      %v4345 = vrot.slane %v4344, 4
      %v4346 = vrot.slane %v4298, 7
      %v4347 = vrot.slane %v4346, 4
      %v4348 = vrot.slane %v4299, 7
      %v4349 = vrot.slane %v4348, 4
      %v4350 = vrot.slane %v4300, 7
      %v4351 = vrot.slane %v4350, 4
      %v4352 = vrot.slane %v4301, 7
      %v4353 = vrot.slane %v4352, 4
      %v4354 = vrot.slane %v4302, 7
      %v4355 = vrot.slane %v4354, 4
      %v4356 = vrot.slane %v4303, 7
      %v4357 = vrot.slane %v4356, 4
      %v4376 = vld [vmem:[#allocation2 + $0x8] sm:$0x1]
      %v4377 = vsel %vm991, %v4323, %v4376
      %4378 = vst [vmem:[#allocation2 + $0x8] sm:$0x1] %v4377
      %v4379 = vld [vmem:[#allocation2 + $0x14] sm:$0x1]
      %v4380 = vsel %vm991, %v4325, %v4379
      %4381 = vst [vmem:[#allocation2 + $0x14] sm:$0x1] %v4380
      %v4382 = vld [vmem:[#allocation2 + $0x20] sm:$0x1]
      %v4383 = vsel %vm991, %v4327, %v4382
      %4384 = vst [vmem:[#allocation2 + $0x20] sm:$0x1] %v4383
      %v4385 = vld [vmem:[#allocation2 + $0x2c] sm:$0x1]
      %v4386 = vsel %vm991, %v4329, %v4385
      %4387 = vst [vmem:[#allocation2 + $0x2c] sm:$0x1] %v4386
      %v4388 = vld [vmem:[#allocation2 + $0x38] sm:$0x1]
      %v4389 = vsel %vm991, %v4331, %v4388
      %4390 = vst [vmem:[#allocation2 + $0x38] sm:$0x1] %v4389
      %v4391 = vld [vmem:[#allocation2 + $0x44] sm:$0x1]
      %v4392 = vsel %vm991, %v4333, %v4391
      %4393 = vst [vmem:[#allocation2 + $0x44] sm:$0x1] %v4392
      %v4394 = vld [vmem:[#allocation2 + $0x50] sm:$0x1]
      %v4395 = vsel %vm991, %v4335, %v4394
      %4396 = vst [vmem:[#allocation2 + $0x50] sm:$0x1] %v4395
      %v4397 = vld [vmem:[#allocation2 + $0x5c] sm:$0x1]
      %v4398 = vsel %vm991, %v4337, %v4397
      %4399 = vst [vmem:[#allocation2 + $0x5c] sm:$0x1] %v4398
      %v4400 = vld [vmem:[#allocation2 + $0x68] sm:$0x1]
      %v4401 = vsel %vm991, %v4339, %v4400
      %4402 = vst [vmem:[#allocation2 + $0x68] sm:$0x1] %v4401
      %v4403 = vld [vmem:[#allocation2 + $0x74] sm:$0x1]
      %v4404 = vsel %vm991, %v4341, %v4403
      %4405 = vst [vmem:[#allocation2 + $0x74] sm:$0x1] %v4404
      %v4406 = vld [vmem:[#allocation2 + $0x80] sm:$0x1]
      %v4407 = vsel %vm991, %v4343, %v4406
      %4408 = vst [vmem:[#allocation2 + $0x80] sm:$0x1] %v4407
      %v4409 = vld [vmem:[#allocation2 + $0x8c] sm:$0x1]
      %v4410 = vsel %vm991, %v4345, %v4409
      %4411 = vst [vmem:[#allocation2 + $0x8c] sm:$0x1] %v4410
      %v4412 = vld [vmem:[#allocation2 + $0x98] sm:$0x1]
      %v4413 = vsel %vm991, %v4347, %v4412
      %4414 = vst [vmem:[#allocation2 + $0x98] sm:$0x1] %v4413
      %v4415 = vld [vmem:[#allocation2 + $0xa4] sm:$0x1]
      %v4416 = vsel %vm991, %v4349, %v4415
      %4417 = vst [vmem:[#allocation2 + $0xa4] sm:$0x1] %v4416
      %v4418 = vld [vmem:[#allocation2 + $0xb0] sm:$0x1]
      %v4419 = vsel %vm991, %v4351, %v4418
      %4420 = vst [vmem:[#allocation2 + $0xb0] sm:$0x1] %v4419
      %v4421 = vld [vmem:[#allocation2 + $0xbc] sm:$0x1]
      %v4422 = vsel %vm991, %v4353, %v4421
      %4423 = vst [vmem:[#allocation2 + $0xbc] sm:$0x1] %v4422
      %v4424 = vld [vmem:[#allocation2 + $0xc8] sm:$0x1]
      %v4425 = vsel %vm991, %v4355, %v4424
      %4426 = vst [vmem:[#allocation2 + $0xc8] sm:$0x1] %v4425
      %v4427 = vld [vmem:[#allocation2 + $0xd4] sm:$0x1]
      %v4428 = vsel %vm991, %v4357, %v4427
      %4429 = vst [vmem:[#allocation2 + $0xd4] sm:$0x1] %v4428
      %v4430 = vld [vmem:[#allocation2] sm:$0xf]
      %v4431 = vld [vmem:[#allocation2 + $0x4] sm:$0xf]
      %v4432 = vld [vmem:[#allocation2 + $0x8] sm:$0x1]
      %v4433 = vld [vmem:[#allocation2 + $0xc] sm:$0xf]
      %v4434 = vld [vmem:[#allocation2 + $0x10] sm:$0xf]
      %v4435 = vld [vmem:[#allocation2 + $0x14] sm:$0x1]
      %v4436 = vld [vmem:[#allocation2 + $0x18] sm:$0xf]
      %v4437 = vld [vmem:[#allocation2 + $0x1c] sm:$0xf]
      %v4438 = vld [vmem:[#allocation2 + $0x20] sm:$0x1]
      %v4439 = vld [vmem:[#allocation2 + $0x24] sm:$0xf]
      %v4440 = vld [vmem:[#allocation2 + $0x28] sm:$0xf]
      %v4441 = vld [vmem:[#allocation2 + $0x2c] sm:$0x1]
      %v4442 = vld [vmem:[#allocation2 + $0x30] sm:$0xf]
      %v4443 = vld [vmem:[#allocation2 + $0x34] sm:$0xf]
      %v4444 = vld [vmem:[#allocation2 + $0x38] sm:$0x1]
      %v4445 = vld [vmem:[#allocation2 + $0x3c] sm:$0xf]
      %v4446 = vld [vmem:[#allocation2 + $0x40] sm:$0xf]
      %v4447 = vld [vmem:[#allocation2 + $0x44] sm:$0x1]
      %v4448 = vld [vmem:[#allocation2 + $0x48] sm:$0xf]
      %v4449 = vld [vmem:[#allocation2 + $0x4c] sm:$0xf]
      %v4450 = vld [vmem:[#allocation2 + $0x50] sm:$0x1]
      %v4451 = vld [vmem:[#allocation2 + $0x54] sm:$0xf]
      %v4452 = vld [vmem:[#allocation2 + $0x58] sm:$0xf]
      %v4453 = vld [vmem:[#allocation2 + $0x5c] sm:$0x1]
      %v4454 = vld [vmem:[#allocation2 + $0x60] sm:$0xf]
      %v4455 = vld [vmem:[#allocation2 + $0x64] sm:$0xf]
      %v4456 = vld [vmem:[#allocation2 + $0x68] sm:$0x1]
      %v4457 = vld [vmem:[#allocation2 + $0x6c] sm:$0xf]
      %v4458 = vld [vmem:[#allocation2 + $0x70] sm:$0xf]
      %v4459 = vld [vmem:[#allocation2 + $0x74] sm:$0x1]
      %v4460 = vld [vmem:[#allocation2 + $0x78] sm:$0xf]
      %v4461 = vld [vmem:[#allocation2 + $0x7c] sm:$0xf]
      %v4462 = vld [vmem:[#allocation2 + $0x80] sm:$0x1]
      %v4463 = vld [vmem:[#allocation2 + $0x84] sm:$0xf]
      %v4464 = vld [vmem:[#allocation2 + $0x88] sm:$0xf]
      %v4465 = vld [vmem:[#allocation2 + $0x8c] sm:$0x1]
      %v4466 = vld [vmem:[#allocation2 + $0x90] sm:$0xf]
      %v4467 = vld [vmem:[#allocation2 + $0x94] sm:$0xf]
      %v4468 = vld [vmem:[#allocation2 + $0x98] sm:$0x1]
      %v4469 = vld [vmem:[#allocation2 + $0x9c] sm:$0xf]
      %v4470 = vld [vmem:[#allocation2 + $0xa0] sm:$0xf]
      %v4471 = vld [vmem:[#allocation2 + $0xa4] sm:$0x1]
      %v4472 = vld [vmem:[#allocation2 + $0xa8] sm:$0xf]
      %v4473 = vld [vmem:[#allocation2 + $0xac] sm:$0xf]
      %v4474 = vld [vmem:[#allocation2 + $0xb0] sm:$0x1]
      %v4475 = vld [vmem:[#allocation2 + $0xb4] sm:$0xf]
      %v4476 = vld [vmem:[#allocation2 + $0xb8] sm:$0xf]
      %v4477 = vld [vmem:[#allocation2 + $0xbc] sm:$0x1]
      %v4510 = vunpack.c.l.b16 %v4430
      %v4511 = vunpack.c.l.b16 %v4431
      %v4512 = vunpack.c.l.b16 %v4433
      %v4513 = vunpack.c.l.b16 %v4434
      %v4514 = vunpack.c.l.b16 %v4436
      %v4515 = vunpack.c.l.b16 %v4437
      %v4516 = vunpack.c.l.b16 %v4439
      %v4517 = vunpack.c.l.b16 %v4440
      %v4518 = vunpack.c.l.b16 %v4442
      %v4519 = vunpack.c.l.b16 %v4443
      %v4520 = vunpack.c.l.b16 %v4445
      %v4521 = vunpack.c.l.b16 %v4446
      %v4522 = vunpack.c.l.b16 %v4448
      %v4523 = vunpack.c.l.b16 %v4449
      %v4524 = vunpack.c.l.b16 %v4451
      %v4525 = vunpack.c.l.b16 %v4452
      %v4526 = vunpack.c.l.b16 %v4454
      %v4527 = vunpack.c.l.b16 %v4455
      %v4528 = vunpack.c.l.b16 %v4457
      %v4529 = vunpack.c.l.b16 %v4458
      %v4530 = vunpack.c.l.b16 %v4460
      %v4531 = vunpack.c.l.b16 %v4461
      %v4532 = vunpack.c.l.b16 %v4463
      %v4533 = vunpack.c.l.b16 %v4464
      %v4534 = vunpack.c.l.b16 %v4466
      %v4535 = vunpack.c.l.b16 %v4467
      %v4536 = vunpack.c.l.b16 %v4469
      %v4537 = vunpack.c.l.b16 %v4470
      %v4538 = vunpack.c.l.b16 %v4472
      %v4539 = vunpack.c.l.b16 %v4473
      %v4540 = vunpack.c.l.b16 %v4475
      %v4541 = vunpack.c.l.b16 %v4476
      %v4542 = vpack.c.b16 %v4511, %v4510
      %v4543 = vpack.c.b16 %v4513, %v4512
      %v4544 = vpack.c.b16 %v4515, %v4514
      %v4545 = vpack.c.b16 %v4517, %v4516
      %v4546 = vpack.c.b16 %v4519, %v4518
      %v4547 = vpack.c.b16 %v4521, %v4520
      %v4548 = vpack.c.b16 %v4523, %v4522
      %v4549 = vpack.c.b16 %v4525, %v4524
      %v4550 = vpack.c.b16 %v4527, %v4526
      %v4551 = vpack.c.b16 %v4529, %v4528
      %v4552 = vpack.c.b16 %v4531, %v4530
      %v4553 = vpack.c.b16 %v4533, %v4532
      %v4554 = vpack.c.b16 %v4535, %v4534
      %v4555 = vpack.c.b16 %v4537, %v4536
      %v4556 = vpack.c.b16 %v4539, %v4538
      %v4557 = vpack.c.b16 %v4541, %v4540
      %v4574 = vunpack.c.l.b16 %v4432
      %v4575 = vunpack.c.l.b16 %v4435
      %v4576 = vunpack.c.l.b16 %v4438
      %v4577 = vunpack.c.l.b16 %v4441
      %v4578 = vunpack.c.l.b16 %v4444
      %v4579 = vunpack.c.l.b16 %v4447
      %v4580 = vunpack.c.l.b16 %v4450
      %v4581 = vunpack.c.l.b16 %v4453
      %v4582 = vunpack.c.l.b16 %v4456
      %v4583 = vunpack.c.l.b16 %v4459
      %v4584 = vunpack.c.l.b16 %v4462
      %v4585 = vunpack.c.l.b16 %v4465
      %v4586 = vunpack.c.l.b16 %v4468
      %v4587 = vunpack.c.l.b16 %v4471
      %v4588 = vunpack.c.l.b16 %v4474
      %v4589 = vunpack.c.l.b16 %v4477
      %v4590 = vpack.c.b16 %v4574, %v4574
      %v4591 = vpack.c.b16 %v4575, %v4575
      %v4592 = vpack.c.b16 %v4576, %v4576
      %v4593 = vpack.c.b16 %v4577, %v4577
      %v4594 = vpack.c.b16 %v4578, %v4578
      %v4595 = vpack.c.b16 %v4579, %v4579
      %v4596 = vpack.c.b16 %v4580, %v4580
      %v4597 = vpack.c.b16 %v4581, %v4581
      %v4598 = vpack.c.b16 %v4582, %v4582
      %v4599 = vpack.c.b16 %v4583, %v4583
      %v4600 = vpack.c.b16 %v4584, %v4584
      %v4601 = vpack.c.b16 %v4585, %v4585
      %v4602 = vpack.c.b16 %v4586, %v4586
      %v4603 = vpack.c.b16 %v4587, %v4587
      %v4604 = vpack.c.b16 %v4588, %v4588
      %v4605 = vpack.c.b16 %v4589, %v4589
      %v4607 = vshrl.u32 %v4542, 16
      %v4609 = vshll.u32 %v4542, 16
      %v4611 = vrot.slane %v4609, 1
      %v4612 = vor.u32 %v4607, %v4611
      %v4614 = vshll.u32 %v4590, 16
      %v4616 = vrot.slane %v4614, 1
      %v4617 = vsel %vm1222, %v4612, %v4616
      %v4619 = vshrl.u32 %v4543, 16
      %v4621 = vshll.u32 %v4543, 16
      %v4623 = vrot.slane %v4621, 1
      %v4624 = vor.u32 %v4619, %v4623
      %v4626 = vshll.u32 %v4591, 16
      %v4628 = vrot.slane %v4626, 1
      %v4629 = vsel %vm1222, %v4624, %v4628
      %v4631 = vshrl.u32 %v4544, 16
      %v4633 = vshll.u32 %v4544, 16
      %v4635 = vrot.slane %v4633, 1
      %v4636 = vor.u32 %v4631, %v4635
      %v4638 = vshll.u32 %v4592, 16
      %v4640 = vrot.slane %v4638, 1
      %v4641 = vsel %vm1222, %v4636, %v4640
      %v4643 = vshrl.u32 %v4545, 16
      %v4645 = vshll.u32 %v4545, 16
      %v4647 = vrot.slane %v4645, 1
      %v4648 = vor.u32 %v4643, %v4647
      %v4650 = vshll.u32 %v4593, 16
      %v4652 = vrot.slane %v4650, 1
      %v4653 = vsel %vm1222, %v4648, %v4652
      %v4655 = vshrl.u32 %v4546, 16
      %v4657 = vshll.u32 %v4546, 16
      %v4659 = vrot.slane %v4657, 1
      %v4660 = vor.u32 %v4655, %v4659
      %v4662 = vshll.u32 %v4594, 16
      %v4664 = vrot.slane %v4662, 1
      %v4665 = vsel %vm1222, %v4660, %v4664
      %v4667 = vshrl.u32 %v4547, 16
      %v4669 = vshll.u32 %v4547, 16
      %v4671 = vrot.slane %v4669, 1
      %v4672 = vor.u32 %v4667, %v4671
      %v4674 = vshll.u32 %v4595, 16
      %v4676 = vrot.slane %v4674, 1
      %v4677 = vsel %vm1222, %v4672, %v4676
      %v4679 = vshrl.u32 %v4548, 16
      %v4681 = vshll.u32 %v4548, 16
      %v4683 = vrot.slane %v4681, 1
      %v4684 = vor.u32 %v4679, %v4683
      %v4686 = vshll.u32 %v4596, 16
      %v4688 = vrot.slane %v4686, 1
      %v4689 = vsel %vm1222, %v4684, %v4688
      %v4691 = vshrl.u32 %v4549, 16
      %v4693 = vshll.u32 %v4549, 16
      %v4695 = vrot.slane %v4693, 1
      %v4696 = vor.u32 %v4691, %v4695
      %v4698 = vshll.u32 %v4597, 16
      %v4700 = vrot.slane %v4698, 1
      %v4701 = vsel %vm1222, %v4696, %v4700
      %v4703 = vshrl.u32 %v4550, 16
      %v4705 = vshll.u32 %v4550, 16
      %v4707 = vrot.slane %v4705, 1
      %v4708 = vor.u32 %v4703, %v4707
      %v4710 = vshll.u32 %v4598, 16
      %v4712 = vrot.slane %v4710, 1
      %v4713 = vsel %vm1222, %v4708, %v4712
      %v4715 = vshrl.u32 %v4551, 16
      %v4717 = vshll.u32 %v4551, 16
      %v4719 = vrot.slane %v4717, 1
      %v4720 = vor.u32 %v4715, %v4719
      %v4722 = vshll.u32 %v4599, 16
      %v4724 = vrot.slane %v4722, 1
      %v4725 = vsel %vm1222, %v4720, %v4724
      %v4727 = vshrl.u32 %v4552, 16
      %v4729 = vshll.u32 %v4552, 16
      %v4731 = vrot.slane %v4729, 1
      %v4732 = vor.u32 %v4727, %v4731
      %v4734 = vshll.u32 %v4600, 16
      %v4736 = vrot.slane %v4734, 1
      %v4737 = vsel %vm1222, %v4732, %v4736
      %v4739 = vshrl.u32 %v4553, 16
      %v4741 = vshll.u32 %v4553, 16
      %v4743 = vrot.slane %v4741, 1
      %v4744 = vor.u32 %v4739, %v4743
      %v4746 = vshll.u32 %v4601, 16
      %v4748 = vrot.slane %v4746, 1
      %v4749 = vsel %vm1222, %v4744, %v4748
      %v4751 = vshrl.u32 %v4554, 16
      %v4753 = vshll.u32 %v4554, 16
      %v4755 = vrot.slane %v4753, 1
      %v4756 = vor.u32 %v4751, %v4755
      %v4758 = vshll.u32 %v4602, 16
      %v4760 = vrot.slane %v4758, 1
      %v4761 = vsel %vm1222, %v4756, %v4760
      %v4763 = vshrl.u32 %v4555, 16
      %v4765 = vshll.u32 %v4555, 16
      %v4767 = vrot.slane %v4765, 1
      %v4768 = vor.u32 %v4763, %v4767
      %v4770 = vshll.u32 %v4603, 16
      %v4772 = vrot.slane %v4770, 1
      %v4773 = vsel %vm1222, %v4768, %v4772
      %v4775 = vshrl.u32 %v4556, 16
      %v4777 = vshll.u32 %v4556, 16
      %v4779 = vrot.slane %v4777, 1
      %v4780 = vor.u32 %v4775, %v4779
      %v4782 = vshll.u32 %v4604, 16
      %v4784 = vrot.slane %v4782, 1
      %v4785 = vsel %vm1222, %v4780, %v4784
      %v4787 = vshrl.u32 %v4557, 16
      %v4789 = vshll.u32 %v4557, 16
      %v4791 = vrot.slane %v4789, 1
      %v4792 = vor.u32 %v4787, %v4791
      %v4794 = vshll.u32 %v4605, 16
      %v4796 = vrot.slane %v4794, 1
      %v4797 = vsel %vm1222, %v4792, %v4796
      %4798 = vrot.lane.b32.xlu0 %v4617, 4
      %v4799 = vpop.permute.xlu0 %4798
      %4800 = vrot.lane.b32.xlu0 %v4629, 4
      %v4801 = vpop.permute.xlu0 %4800
      %4802 = vrot.lane.b32.xlu0 %v4641, 4
      %v4803 = vpop.permute.xlu0 %4802
      %4804 = vrot.lane.b32.xlu0 %v4653, 4
      %v4805 = vpop.permute.xlu0 %4804
      %4806 = vrot.lane.b32.xlu0 %v4665, 4
      %v4807 = vpop.permute.xlu0 %4806
      %4808 = vrot.lane.b32.xlu0 %v4677, 4
      %v4809 = vpop.permute.xlu0 %4808
      %4810 = vrot.lane.b32.xlu0 %v4689, 4
      %v4811 = vpop.permute.xlu0 %4810
      %4812 = vrot.lane.b32.xlu0 %v4701, 4
      %v4813 = vpop.permute.xlu0 %4812
      %4814 = vrot.lane.b32.xlu0 %v4713, 4
      %v4815 = vpop.permute.xlu0 %4814
      %4816 = vrot.lane.b32.xlu0 %v4725, 4
      %v4817 = vpop.permute.xlu0 %4816
      %4818 = vrot.lane.b32.xlu0 %v4737, 4
      %v4819 = vpop.permute.xlu0 %4818
      %4820 = vrot.lane.b32.xlu0 %v4749, 4
      %v4821 = vpop.permute.xlu0 %4820
      %4822 = vrot.lane.b32.xlu0 %v4761, 4
      %v4823 = vpop.permute.xlu0 %4822
      %4824 = vrot.lane.b32.xlu0 %v4773, 4
      %v4825 = vpop.permute.xlu0 %4824
      %4826 = vrot.lane.b32.xlu0 %v4785, 4
      %v4827 = vpop.permute.xlu0 %4826
      %4828 = vrot.lane.b32.xlu0 %v4797, 4
      %v4829 = vpop.permute.xlu0 %4828
      %v4830 = vrot.slane %v4542, 1
      %v4831 = vrot.slane %v4590, 1
      %v4832 = vsel %vm1447, %v4830, %v4831
      %v4833 = vrot.slane %v4543, 1
      %v4834 = vrot.slane %v4591, 1
      %v4835 = vsel %vm1447, %v4833, %v4834
      %v4836 = vrot.slane %v4544, 1
      %v4837 = vrot.slane %v4592, 1
      %v4838 = vsel %vm1447, %v4836, %v4837
      %v4839 = vrot.slane %v4545, 1
      %v4840 = vrot.slane %v4593, 1
      %v4841 = vsel %vm1447, %v4839, %v4840
      %v4842 = vrot.slane %v4546, 1
      %v4843 = vrot.slane %v4594, 1
      %v4844 = vsel %vm1447, %v4842, %v4843
      %v4845 = vrot.slane %v4547, 1
      %v4846 = vrot.slane %v4595, 1
      %v4847 = vsel %vm1447, %v4845, %v4846
      %v4848 = vrot.slane %v4548, 1
      %v4849 = vrot.slane %v4596, 1
      %v4850 = vsel %vm1447, %v4848, %v4849
      %v4851 = vrot.slane %v4549, 1
      %v4852 = vrot.slane %v4597, 1
      %v4853 = vsel %vm1447, %v4851, %v4852
      %v4854 = vrot.slane %v4550, 1
      %v4855 = vrot.slane %v4598, 1
      %v4856 = vsel %vm1447, %v4854, %v4855
      %v4857 = vrot.slane %v4551, 1
      %v4858 = vrot.slane %v4599, 1
      %v4859 = vsel %vm1447, %v4857, %v4858
      %v4860 = vrot.slane %v4552, 1
      %v4861 = vrot.slane %v4600, 1
      %v4862 = vsel %vm1447, %v4860, %v4861
      %v4863 = vrot.slane %v4553, 1
      %v4864 = vrot.slane %v4601, 1
      %v4865 = vsel %vm1447, %v4863, %v4864
      %v4866 = vrot.slane %v4554, 1
      %v4867 = vrot.slane %v4602, 1
      %v4868 = vsel %vm1447, %v4866, %v4867
      %v4869 = vrot.slane %v4555, 1
      %v4870 = vrot.slane %v4603, 1
      %v4871 = vsel %vm1447, %v4869, %v4870
      %v4872 = vrot.slane %v4556, 1
      %v4873 = vrot.slane %v4604, 1
      %v4874 = vsel %vm1447, %v4872, %v4873
      %v4875 = vrot.slane %v4557, 1
      %v4876 = vrot.slane %v4605, 1
      %v4877 = vsel %vm1447, %v4875, %v4876
      %4878 = vrot.lane.b32.xlu0 %v4832, 8
      %v4879 = vpop.permute.xlu0 %4878
      %4880 = vrot.lane.b32.xlu0 %v4835, 8
      %v4881 = vpop.permute.xlu0 %4880
      %4882 = vrot.lane.b32.xlu0 %v4838, 8
      %v4883 = vpop.permute.xlu0 %4882
      %4884 = vrot.lane.b32.xlu0 %v4841, 8
      %v4885 = vpop.permute.xlu0 %4884
      %4886 = vrot.lane.b32.xlu0 %v4844, 8
      %v4887 = vpop.permute.xlu0 %4886
      %4888 = vrot.lane.b32.xlu0 %v4847, 8
      %v4889 = vpop.permute.xlu0 %4888
      %4890 = vrot.lane.b32.xlu0 %v4850, 8
      %v4891 = vpop.permute.xlu0 %4890
      %4892 = vrot.lane.b32.xlu0 %v4853, 8
      %v4893 = vpop.permute.xlu0 %4892
      %4894 = vrot.lane.b32.xlu0 %v4856, 8
      %v4895 = vpop.permute.xlu0 %4894
      %4896 = vrot.lane.b32.xlu0 %v4859, 8
      %v4897 = vpop.permute.xlu0 %4896
      %4898 = vrot.lane.b32.xlu0 %v4862, 8
      %v4899 = vpop.permute.xlu0 %4898
      %4900 = vrot.lane.b32.xlu0 %v4865, 8
      %v4901 = vpop.permute.xlu0 %4900
      %4902 = vrot.lane.b32.xlu0 %v4868, 8
      %v4903 = vpop.permute.xlu0 %4902
      %4904 = vrot.lane.b32.xlu0 %v4871, 8
      %v4905 = vpop.permute.xlu0 %4904
      %4906 = vrot.lane.b32.xlu0 %v4874, 8
      %v4907 = vpop.permute.xlu0 %4906
      %4908 = vrot.lane.b32.xlu0 %v4877, 8
      %v4909 = vpop.permute.xlu0 %4908
      %v4911 = vsel %vm1528, %v4542, %v4799
      %v4913 = vsel %vm1528, %v4543, %v4801
      %v4915 = vsel %vm1528, %v4544, %v4803
      %v4917 = vsel %vm1528, %v4545, %v4805
      %v4919 = vsel %vm1528, %v4546, %v4807
      %v4921 = vsel %vm1528, %v4547, %v4809
      %v4923 = vsel %vm1528, %v4548, %v4811
      %v4925 = vsel %vm1528, %v4549, %v4813
      %v4927 = vsel %vm1528, %v4550, %v4815
      %v4929 = vsel %vm1528, %v4551, %v4817
      %v4931 = vsel %vm1528, %v4552, %v4819
      %v4933 = vsel %vm1528, %v4553, %v4821
      %v4935 = vsel %vm1528, %v4554, %v4823
      %v4937 = vsel %vm1528, %v4555, %v4825
      %v4939 = vsel %vm1528, %v4556, %v4827
      %v4941 = vsel %vm1528, %v4557, %v4829
      %v4943 = vsel %vm1561, %v4911, %v4879
      %v4945 = vsel %vm1561, %v4913, %v4881
      %v4947 = vsel %vm1561, %v4915, %v4883
      %v4949 = vsel %vm1561, %v4917, %v4885
      %v4951 = vsel %vm1561, %v4919, %v4887
      %v4953 = vsel %vm1561, %v4921, %v4889
      %v4955 = vsel %vm1561, %v4923, %v4891
      %v4957 = vsel %vm1561, %v4925, %v4893
      %v4959 = vsel %vm1561, %v4927, %v4895
      %v4961 = vsel %vm1561, %v4929, %v4897
      %v4963 = vsel %vm1561, %v4931, %v4899
      %v4965 = vsel %vm1561, %v4933, %v4901
      %v4967 = vsel %vm1561, %v4935, %v4903
      %v4969 = vsel %vm1561, %v4937, %v4905
      %v4971 = vsel %vm1561, %v4939, %v4907
      %v4973 = vsel %vm1561, %v4941, %v4909
      %v4974 = vld [vmem:[%s2] sm:$0xf]
      %v4975 = vld [vmem:[%s2 + $0x4] sm:$0x3]
      %v4976 = vld [vmem:[%s623] sm:$0xf]
      %v4977 = vld [vmem:[%s623 + $0x4] sm:$0xf]
      %v4978 = vld [vmem:[%s623 + $0x8] sm:$0x1]
      %v4979 = vld [vmem:[%s623 + $0xc] sm:$0xf]
      %v4980 = vld [vmem:[%s623 + $0x10] sm:$0xf]
      %v4981 = vld [vmem:[%s623 + $0x14] sm:$0x1]
      %v4982 = vld [vmem:[%s623 + $0x18] sm:$0xf]
      %v4983 = vld [vmem:[%s623 + $0x1c] sm:$0xf]
      %v4984 = vld [vmem:[%s623 + $0x20] sm:$0x1]
      %v4985 = vld [vmem:[%s623 + $0x24] sm:$0xf]
      %v4986 = vld [vmem:[%s623 + $0x28] sm:$0xf]
      %v4987 = vld [vmem:[%s623 + $0x2c] sm:$0x1]
      %v4988 = vld [vmem:[%s623 + $0x30] sm:$0xf]
      %v4989 = vld [vmem:[%s623 + $0x34] sm:$0xf]
      %v4990 = vld [vmem:[%s623 + $0x38] sm:$0x1]
      %v4991 = vld [vmem:[%s623 + $0x3c] sm:$0xf]
      %v4992 = vld [vmem:[%s623 + $0x40] sm:$0xf]
      %v4993 = vld [vmem:[%s623 + $0x44] sm:$0x1]
      %v4994 = vld [vmem:[%s623 + $0x48] sm:$0xf]
      %v4995 = vld [vmem:[%s623 + $0x4c] sm:$0xf]
      %v4996 = vld [vmem:[%s623 + $0x50] sm:$0x1]
      %v4997 = vld [vmem:[%s623 + $0x54] sm:$0xf]
      %v4998 = vld [vmem:[%s623 + $0x58] sm:$0xf]
      %v4999 = vld [vmem:[%s623 + $0x5c] sm:$0x1]
      %v5000 = vld [vmem:[%s623 + $0x60] sm:$0xf]
      %v5001 = vld [vmem:[%s623 + $0x64] sm:$0xf]
      %v5002 = vld [vmem:[%s623 + $0x68] sm:$0x1]
      %v5003 = vld [vmem:[%s623 + $0x6c] sm:$0xf]
      %v5004 = vld [vmem:[%s623 + $0x70] sm:$0xf]
      %v5005 = vld [vmem:[%s623 + $0x74] sm:$0x1]
      %v5006 = vld [vmem:[%s623 + $0x78] sm:$0xf]
      %v5007 = vld [vmem:[%s623 + $0x7c] sm:$0xf]
      %v5008 = vld [vmem:[%s623 + $0x80] sm:$0x1]
      %v5009 = vld [vmem:[%s623 + $0x84] sm:$0xf]
      %v5010 = vld [vmem:[%s623 + $0x88] sm:$0xf]
      %v5011 = vld [vmem:[%s623 + $0x8c] sm:$0x1]
      %v5012 = vld [vmem:[%s623 + $0x90] sm:$0xf]
      %v5013 = vld [vmem:[%s623 + $0x94] sm:$0xf]
      %v5014 = vld [vmem:[%s623 + $0x98] sm:$0x1]
      %v5015 = vld [vmem:[%s623 + $0x9c] sm:$0xf]
      %v5016 = vld [vmem:[%s623 + $0xa0] sm:$0xf]
      %v5017 = vld [vmem:[%s623 + $0xa4] sm:$0x1]
      %v5018 = vld [vmem:[%s623 + $0xa8] sm:$0xf]
      %v5019 = vld [vmem:[%s623 + $0xac] sm:$0xf]
      %v5020 = vld [vmem:[%s623 + $0xb0] sm:$0x1]
      %v5021 = vld [vmem:[%s623 + $0xb4] sm:$0xf]
      %v5022 = vld [vmem:[%s623 + $0xb8] sm:$0xf]
      %v5023 = vld [vmem:[%s623 + $0xbc] sm:$0x1]
      %v5056 = vunpack.c.l.b16 %v4976
      %v5057 = vunpack.c.l.b16 %v4977
      %v5058 = vunpack.c.l.b16 %v4979
      %v5059 = vunpack.c.l.b16 %v4980
      %v5060 = vunpack.c.l.b16 %v4982
      %v5061 = vunpack.c.l.b16 %v4983
      %v5062 = vunpack.c.l.b16 %v4985
      %v5063 = vunpack.c.l.b16 %v4986
      %v5064 = vunpack.c.l.b16 %v4988
      %v5065 = vunpack.c.l.b16 %v4989
      %v5066 = vunpack.c.l.b16 %v4991
      %v5067 = vunpack.c.l.b16 %v4992
      %v5068 = vunpack.c.l.b16 %v4994
      %v5069 = vunpack.c.l.b16 %v4995
      %v5070 = vunpack.c.l.b16 %v4997
      %v5071 = vunpack.c.l.b16 %v4998
      %v5072 = vunpack.c.l.b16 %v5000
      %v5073 = vunpack.c.l.b16 %v5001
      %v5074 = vunpack.c.l.b16 %v5003
      %v5075 = vunpack.c.l.b16 %v5004
      %v5076 = vunpack.c.l.b16 %v5006
      %v5077 = vunpack.c.l.b16 %v5007
      %v5078 = vunpack.c.l.b16 %v5009
      %v5079 = vunpack.c.l.b16 %v5010
      %v5080 = vunpack.c.l.b16 %v5012
      %v5081 = vunpack.c.l.b16 %v5013
      %v5082 = vunpack.c.l.b16 %v5015
      %v5083 = vunpack.c.l.b16 %v5016
      %v5084 = vunpack.c.l.b16 %v5018
      %v5085 = vunpack.c.l.b16 %v5019
      %v5086 = vunpack.c.l.b16 %v5021
      %v5087 = vunpack.c.l.b16 %v5022
      %v5088 = vpack.c.b16 %v5057, %v5056
      %v5089 = vpack.c.b16 %v5059, %v5058
      %v5090 = vpack.c.b16 %v5061, %v5060
      %v5091 = vpack.c.b16 %v5063, %v5062
      %v5092 = vpack.c.b16 %v5065, %v5064
      %v5093 = vpack.c.b16 %v5067, %v5066
      %v5094 = vpack.c.b16 %v5069, %v5068
      %v5095 = vpack.c.b16 %v5071, %v5070
      %v5096 = vpack.c.b16 %v5073, %v5072
      %v5097 = vpack.c.b16 %v5075, %v5074
      %v5098 = vpack.c.b16 %v5077, %v5076
      %v5099 = vpack.c.b16 %v5079, %v5078
      %v5100 = vpack.c.b16 %v5081, %v5080
      %v5101 = vpack.c.b16 %v5083, %v5082
      %v5102 = vpack.c.b16 %v5085, %v5084
      %v5103 = vpack.c.b16 %v5087, %v5086
      %v5120 = vunpack.c.l.b16 %v4978
      %v5121 = vunpack.c.l.b16 %v4981
      %v5122 = vunpack.c.l.b16 %v4984
      %v5123 = vunpack.c.l.b16 %v4987
      %v5124 = vunpack.c.l.b16 %v4990
      %v5125 = vunpack.c.l.b16 %v4993
      %v5126 = vunpack.c.l.b16 %v4996
      %v5127 = vunpack.c.l.b16 %v4999
      %v5128 = vunpack.c.l.b16 %v5002
      %v5129 = vunpack.c.l.b16 %v5005
      %v5130 = vunpack.c.l.b16 %v5008
      %v5131 = vunpack.c.l.b16 %v5011
      %v5132 = vunpack.c.l.b16 %v5014
      %v5133 = vunpack.c.l.b16 %v5017
      %v5134 = vunpack.c.l.b16 %v5020
      %v5135 = vunpack.c.l.b16 %v5023
      %v5136 = vpack.c.b16 %v5120, %v5120
      %v5137 = vpack.c.b16 %v5121, %v5121
      %v5138 = vpack.c.b16 %v5122, %v5122
      %v5139 = vpack.c.b16 %v5123, %v5123
      %v5140 = vpack.c.b16 %v5124, %v5124
      %v5141 = vpack.c.b16 %v5125, %v5125
      %v5142 = vpack.c.b16 %v5126, %v5126
      %v5143 = vpack.c.b16 %v5127, %v5127
      %v5144 = vpack.c.b16 %v5128, %v5128
      %v5145 = vpack.c.b16 %v5129, %v5129
      %v5146 = vpack.c.b16 %v5130, %v5130
      %v5147 = vpack.c.b16 %v5131, %v5131
      %v5148 = vpack.c.b16 %v5132, %v5132
      %v5149 = vpack.c.b16 %v5133, %v5133
      %v5150 = vpack.c.b16 %v5134, %v5134
      %v5151 = vpack.c.b16 %v5135, %v5135
      %v5153 = vshrl.u32 %v5088, 16
      %v5155 = vshll.u32 %v5088, 16
      %v5157 = vrot.slane %v5155, 1
      %v5158 = vor.u32 %v5153, %v5157
      %v5160 = vshll.u32 %v5136, 16
      %v5162 = vrot.slane %v5160, 1
      %v5163 = vsel %vm1222, %v5158, %v5162
      %v5165 = vshrl.u32 %v5089, 16
      %v5167 = vshll.u32 %v5089, 16
      %v5169 = vrot.slane %v5167, 1
      %v5170 = vor.u32 %v5165, %v5169
      %v5172 = vshll.u32 %v5137, 16
      %v5174 = vrot.slane %v5172, 1
      %v5175 = vsel %vm1222, %v5170, %v5174
      %v5177 = vshrl.u32 %v5090, 16
      %v5179 = vshll.u32 %v5090, 16
      %v5181 = vrot.slane %v5179, 1
      %v5182 = vor.u32 %v5177, %v5181
      %v5184 = vshll.u32 %v5138, 16
      %v5186 = vrot.slane %v5184, 1
      %v5187 = vsel %vm1222, %v5182, %v5186
      %v5189 = vshrl.u32 %v5091, 16
      %v5191 = vshll.u32 %v5091, 16
      %v5193 = vrot.slane %v5191, 1
      %v5194 = vor.u32 %v5189, %v5193
      %v5196 = vshll.u32 %v5139, 16
      %v5198 = vrot.slane %v5196, 1
      %v5199 = vsel %vm1222, %v5194, %v5198
      %v5201 = vshrl.u32 %v5092, 16
      %v5203 = vshll.u32 %v5092, 16
      %v5205 = vrot.slane %v5203, 1
      %v5206 = vor.u32 %v5201, %v5205
      %v5208 = vshll.u32 %v5140, 16
      %v5210 = vrot.slane %v5208, 1
      %v5211 = vsel %vm1222, %v5206, %v5210
      %v5213 = vshrl.u32 %v5093, 16
      %v5215 = vshll.u32 %v5093, 16
      %v5217 = vrot.slane %v5215, 1
      %v5218 = vor.u32 %v5213, %v5217
      %v5220 = vshll.u32 %v5141, 16
      %v5222 = vrot.slane %v5220, 1
      %v5223 = vsel %vm1222, %v5218, %v5222
      %v5225 = vshrl.u32 %v5094, 16
      %v5227 = vshll.u32 %v5094, 16
      %v5229 = vrot.slane %v5227, 1
      %v5230 = vor.u32 %v5225, %v5229
      %v5232 = vshll.u32 %v5142, 16
      %v5234 = vrot.slane %v5232, 1
      %v5235 = vsel %vm1222, %v5230, %v5234
      %v5237 = vshrl.u32 %v5095, 16
      %v5239 = vshll.u32 %v5095, 16
      %v5241 = vrot.slane %v5239, 1
      %v5242 = vor.u32 %v5237, %v5241
      %v5244 = vshll.u32 %v5143, 16
      %v5246 = vrot.slane %v5244, 1
      %v5247 = vsel %vm1222, %v5242, %v5246
      %v5249 = vshrl.u32 %v5096, 16
      %v5251 = vshll.u32 %v5096, 16
      %v5253 = vrot.slane %v5251, 1
      %v5254 = vor.u32 %v5249, %v5253
      %v5256 = vshll.u32 %v5144, 16
      %v5258 = vrot.slane %v5256, 1
      %v5259 = vsel %vm1222, %v5254, %v5258
      %v5261 = vshrl.u32 %v5097, 16
      %v5263 = vshll.u32 %v5097, 16
      %v5265 = vrot.slane %v5263, 1
      %v5266 = vor.u32 %v5261, %v5265
      %v5268 = vshll.u32 %v5145, 16
      %v5270 = vrot.slane %v5268, 1
      %v5271 = vsel %vm1222, %v5266, %v5270
      %v5273 = vshrl.u32 %v5098, 16
      %v5275 = vshll.u32 %v5098, 16
      %v5277 = vrot.slane %v5275, 1
      %v5278 = vor.u32 %v5273, %v5277
      %v5280 = vshll.u32 %v5146, 16
      %v5282 = vrot.slane %v5280, 1
      %v5283 = vsel %vm1222, %v5278, %v5282
      %v5285 = vshrl.u32 %v5099, 16
      %v5287 = vshll.u32 %v5099, 16
      %v5289 = vrot.slane %v5287, 1
      %v5290 = vor.u32 %v5285, %v5289
      %v5292 = vshll.u32 %v5147, 16
      %v5294 = vrot.slane %v5292, 1
      %v5295 = vsel %vm1222, %v5290, %v5294
      %v5297 = vshrl.u32 %v5100, 16
      %v5299 = vshll.u32 %v5100, 16
      %v5301 = vrot.slane %v5299, 1
      %v5302 = vor.u32 %v5297, %v5301
      %v5304 = vshll.u32 %v5148, 16
      %v5306 = vrot.slane %v5304, 1
      %v5307 = vsel %vm1222, %v5302, %v5306
      %v5309 = vshrl.u32 %v5101, 16
      %v5311 = vshll.u32 %v5101, 16
      %v5313 = vrot.slane %v5311, 1
      %v5314 = vor.u32 %v5309, %v5313
      %v5316 = vshll.u32 %v5149, 16
      %v5318 = vrot.slane %v5316, 1
      %v5319 = vsel %vm1222, %v5314, %v5318
      %v5321 = vshrl.u32 %v5102, 16
      %v5323 = vshll.u32 %v5102, 16
      %v5325 = vrot.slane %v5323, 1
      %v5326 = vor.u32 %v5321, %v5325
      %v5328 = vshll.u32 %v5150, 16
      %v5330 = vrot.slane %v5328, 1
      %v5331 = vsel %vm1222, %v5326, %v5330
      %v5333 = vshrl.u32 %v5103, 16
      %v5335 = vshll.u32 %v5103, 16
      %v5337 = vrot.slane %v5335, 1
      %v5338 = vor.u32 %v5333, %v5337
      %v5340 = vshll.u32 %v5151, 16
      %v5342 = vrot.slane %v5340, 1
      %v5343 = vsel %vm1222, %v5338, %v5342
      %5344 = vrot.lane.b32.xlu0 %v5163, 4
      %v5345 = vpop.permute.xlu0 %5344
      %5346 = vrot.lane.b32.xlu0 %v5175, 4
      %v5347 = vpop.permute.xlu0 %5346
      %5348 = vrot.lane.b32.xlu0 %v5187, 4
      %v5349 = vpop.permute.xlu0 %5348
      %5350 = vrot.lane.b32.xlu0 %v5199, 4
      %v5351 = vpop.permute.xlu0 %5350
      %5352 = vrot.lane.b32.xlu0 %v5211, 4
      %v5353 = vpop.permute.xlu0 %5352
      %5354 = vrot.lane.b32.xlu0 %v5223, 4
      %v5355 = vpop.permute.xlu0 %5354
      %5356 = vrot.lane.b32.xlu0 %v5235, 4
      %v5357 = vpop.permute.xlu0 %5356
      %5358 = vrot.lane.b32.xlu0 %v5247, 4
      %v5359 = vpop.permute.xlu0 %5358
      %5360 = vrot.lane.b32.xlu0 %v5259, 4
      %v5361 = vpop.permute.xlu0 %5360
      %5362 = vrot.lane.b32.xlu0 %v5271, 4
      %v5363 = vpop.permute.xlu0 %5362
      %5364 = vrot.lane.b32.xlu0 %v5283, 4
      %v5365 = vpop.permute.xlu0 %5364
      %5366 = vrot.lane.b32.xlu0 %v5295, 4
      %v5367 = vpop.permute.xlu0 %5366
      %5368 = vrot.lane.b32.xlu0 %v5307, 4
      %v5369 = vpop.permute.xlu0 %5368
      %5370 = vrot.lane.b32.xlu0 %v5319, 4
      %v5371 = vpop.permute.xlu0 %5370
      %5372 = vrot.lane.b32.xlu0 %v5331, 4
      %v5373 = vpop.permute.xlu0 %5372
      %5374 = vrot.lane.b32.xlu0 %v5343, 4
      %v5375 = vpop.permute.xlu0 %5374
      %v5376 = vrot.slane %v5088, 1
      %v5377 = vrot.slane %v5136, 1
      %v5378 = vsel %vm1447, %v5376, %v5377
      %v5379 = vrot.slane %v5089, 1
      %v5380 = vrot.slane %v5137, 1
      %v5381 = vsel %vm1447, %v5379, %v5380
      %v5382 = vrot.slane %v5090, 1
      %v5383 = vrot.slane %v5138, 1
      %v5384 = vsel %vm1447, %v5382, %v5383
      %v5385 = vrot.slane %v5091, 1
      %v5386 = vrot.slane %v5139, 1
      %v5387 = vsel %vm1447, %v5385, %v5386
      %v5388 = vrot.slane %v5092, 1
      %v5389 = vrot.slane %v5140, 1
      %v5390 = vsel %vm1447, %v5388, %v5389
      %v5391 = vrot.slane %v5093, 1
      %v5392 = vrot.slane %v5141, 1
      %v5393 = vsel %vm1447, %v5391, %v5392
      %v5394 = vrot.slane %v5094, 1
      %v5395 = vrot.slane %v5142, 1
      %v5396 = vsel %vm1447, %v5394, %v5395
      %v5397 = vrot.slane %v5095, 1
      %v5398 = vrot.slane %v5143, 1
      %v5399 = vsel %vm1447, %v5397, %v5398
      %v5400 = vrot.slane %v5096, 1
      %v5401 = vrot.slane %v5144, 1
      %v5402 = vsel %vm1447, %v5400, %v5401
      %v5403 = vrot.slane %v5097, 1
      %v5404 = vrot.slane %v5145, 1
      %v5405 = vsel %vm1447, %v5403, %v5404
      %v5406 = vrot.slane %v5098, 1
      %v5407 = vrot.slane %v5146, 1
      %v5408 = vsel %vm1447, %v5406, %v5407
      %v5409 = vrot.slane %v5099, 1
      %v5410 = vrot.slane %v5147, 1
      %v5411 = vsel %vm1447, %v5409, %v5410
      %v5412 = vrot.slane %v5100, 1
      %v5413 = vrot.slane %v5148, 1
      %v5414 = vsel %vm1447, %v5412, %v5413
      %v5415 = vrot.slane %v5101, 1
      %v5416 = vrot.slane %v5149, 1
      %v5417 = vsel %vm1447, %v5415, %v5416
      %v5418 = vrot.slane %v5102, 1
      %v5419 = vrot.slane %v5150, 1
      %v5420 = vsel %vm1447, %v5418, %v5419
      %v5421 = vrot.slane %v5103, 1
      %v5422 = vrot.slane %v5151, 1
      %v5423 = vsel %vm1447, %v5421, %v5422
      %5424 = vrot.lane.b32.xlu0 %v5378, 8
      %v5425 = vpop.permute.xlu0 %5424
      %5426 = vrot.lane.b32.xlu0 %v5381, 8
      %v5427 = vpop.permute.xlu0 %5426
      %5428 = vrot.lane.b32.xlu0 %v5384, 8
      %v5429 = vpop.permute.xlu0 %5428
      %5430 = vrot.lane.b32.xlu0 %v5387, 8
      %v5431 = vpop.permute.xlu0 %5430
      %5432 = vrot.lane.b32.xlu0 %v5390, 8
      %v5433 = vpop.permute.xlu0 %5432
      %5434 = vrot.lane.b32.xlu0 %v5393, 8
      %v5435 = vpop.permute.xlu0 %5434
      %5436 = vrot.lane.b32.xlu0 %v5396, 8
      %v5437 = vpop.permute.xlu0 %5436
      %5438 = vrot.lane.b32.xlu0 %v5399, 8
      %v5439 = vpop.permute.xlu0 %5438
      %5440 = vrot.lane.b32.xlu0 %v5402, 8
      %v5441 = vpop.permute.xlu0 %5440
      %5442 = vrot.lane.b32.xlu0 %v5405, 8
      %v5443 = vpop.permute.xlu0 %5442
      %5444 = vrot.lane.b32.xlu0 %v5408, 8
      %v5445 = vpop.permute.xlu0 %5444
      %5446 = vrot.lane.b32.xlu0 %v5411, 8
      %v5447 = vpop.permute.xlu0 %5446
      %5448 = vrot.lane.b32.xlu0 %v5414, 8
      %v5449 = vpop.permute.xlu0 %5448
      %5450 = vrot.lane.b32.xlu0 %v5417, 8
      %v5451 = vpop.permute.xlu0 %5450
      %5452 = vrot.lane.b32.xlu0 %v5420, 8
      %v5453 = vpop.permute.xlu0 %5452
      %5454 = vrot.lane.b32.xlu0 %v5423, 8
      %v5455 = vpop.permute.xlu0 %5454
      %v5457 = vsel %vm1528, %v5088, %v5345
      %v5459 = vsel %vm1528, %v5089, %v5347
      %v5461 = vsel %vm1528, %v5090, %v5349
      %v5463 = vsel %vm1528, %v5091, %v5351
      %v5465 = vsel %vm1528, %v5092, %v5353
      %v5467 = vsel %vm1528, %v5093, %v5355
      %v5469 = vsel %vm1528, %v5094, %v5357
      %v5471 = vsel %vm1528, %v5095, %v5359
      %v5473 = vsel %vm1528, %v5096, %v5361
      %v5475 = vsel %vm1528, %v5097, %v5363
      %v5477 = vsel %vm1528, %v5098, %v5365
      %v5479 = vsel %vm1528, %v5099, %v5367
      %v5481 = vsel %vm1528, %v5100, %v5369
      %v5483 = vsel %vm1528, %v5101, %v5371
      %v5485 = vsel %vm1528, %v5102, %v5373
      %v5487 = vsel %vm1528, %v5103, %v5375
      %v5489 = vsel %vm1561, %v5457, %v5425
      %v5491 = vsel %vm1561, %v5459, %v5427
      %v5493 = vsel %vm1561, %v5461, %v5429
      %v5495 = vsel %vm1561, %v5463, %v5431
      %v5497 = vsel %vm1561, %v5465, %v5433
      %v5499 = vsel %vm1561, %v5467, %v5435
      %v5501 = vsel %vm1561, %v5469, %v5437
      %v5503 = vsel %vm1561, %v5471, %v5439
      %v5505 = vsel %vm1561, %v5473, %v5441
      %v5507 = vsel %vm1561, %v5475, %v5443
      %v5509 = vsel %vm1561, %v5477, %v5445
      %v5511 = vsel %vm1561, %v5479, %v5447
      %v5513 = vsel %vm1561, %v5481, %v5449
      %v5515 = vsel %vm1561, %v5483, %v5451
      %v5517 = vsel %vm1561, %v5485, %v5453
      %v5519 = vsel %vm1561, %v5487, %v5455
      %s5520 = scalar_lea.vmem %s2, 8
      %v5521 = vld [vmem:[%s5520] sm:$0xf]
      %v5522 = vld [vmem:[%s5520 + $0x4] sm:$0x3]
      %v5525 = vunpack.c.l.b16 %v5521
      %v5526 = vunpack.c.l.b16 %v5522
      %v5527 = vpack.c.b16 %v5526, %v5525
      %v5528 = vsel %vm2148, %v5489, 0
      %v5530 = vsel %vm2148, %v5491, 0
      %v5532 = vsel %vm2148, %v5493, 0
      %v5534 = vsel %vm2148, %v5495, 0
      %v5536 = vsel %vm2148, %v5497, 0
      %v5538 = vsel %vm2148, %v5499, 0
      %v5540 = vsel %vm2148, %v5501, 0
      %v5542 = vsel %vm2148, %v5503, 0
      %v5544 = vsel %vm2148, %v5505, 0
      %v5546 = vsel %vm2148, %v5507, 0
      %v5548 = vsel %vm2148, %v5509, 0
      %v5550 = vsel %vm2148, %v5511, 0
      %v5552 = vsel %vm2148, %v5513, 0
      %v5554 = vsel %vm2148, %v5515, 0
      %v5556 = vsel %vm2148, %v5517, 0
      %v5558 = vsel %vm2148, %v5519, 0
      %v5561 = vsel %vm2181, %v5527, 0
      %5563 = vmatprep.subr.bf16.mxu0 0
      %5564 = vmatpush1.bf16.msra.mxu0 %v5561
      %5565 = vmatprep.subr.bf16.mxu0 0
      %5566 = vmatpush1.bf16.msra.mxu0 0
      %5567 = vmatprep.subr.bf16.mxu0 0
      %5568 = vmatpush1.bf16.msra.mxu0 0
      %5569 = vmatprep.subr.bf16.mxu0 0
      %5570 = vmatpush1.bf16.msra.mxu0 0
      %5571 = vmatprep.subr.bf16.mxu0 0
      %5572 = vmatpush1.bf16.msra.mxu0 0
      %5573 = vmatprep.subr.bf16.mxu0 0
      %5574 = vmatpush1.bf16.msra.mxu0 0
      %5575 = vmatprep.subr.bf16.mxu0 0
      %5576 = vmatpush1.bf16.msra.mxu0 0
      %5577 = vmatprep.subr.bf16.mxu0 0
      %5578 = vmatpush1.bf16.msra.mxu0 0
      %5579 = vmatprep.subr.bf16.mxu0 0
      %5580 = vmatpush1.bf16.msra.mxu0 0
      %5581 = vmatprep.subr.bf16.mxu0 0
      %5582 = vmatpush1.bf16.msra.mxu0 0
      %5583 = vmatprep.subr.bf16.mxu0 0
      %5584 = vmatpush1.bf16.msra.mxu0 0
      %5585 = vmatprep.subr.bf16.mxu0 0
      %5586 = vmatpush1.bf16.msra.mxu0 0
      %5587 = vmatprep.subr.bf16.mxu0 0
      %5588 = vmatpush1.bf16.msra.mxu0 0
      %5589 = vmatprep.subr.bf16.mxu0 0
      %5590 = vmatpush1.bf16.msra.mxu0 0
      %5591 = vmatprep.subr.bf16.mxu0 0
      %5592 = vmatpush1.bf16.msra.mxu0 0
      %5593 = vmatprep.subr.bf16.mxu0 0
      %5594 = vmatpush1.bf16.msra.mxu0 0
      %5595 = vmatprep.mubr.bf16.mxu0 0
      %5596 = vmatmul.mubr.bf16.gmra.mrb[0].mxu0 %v5528
      %v5597 = vpop.f32.mrb[0].mxu0
      %v5598 = vadd.f32 0.0, %v5597
      %v5599 = vpop.f32.mrb[0].mxu0
      %v5600 = vpop.f32.mrb[0].mxu0
      %v5601 = vadd.f32 0.0, %v5600
      %v5602 = vpop.f32.mrb[0].mxu0
      %5603 = vmatprep.mubr.bf16.mxu0 0
      %5604 = vmatmul.mubr.bf16.gmra.mrb[0].mxu0 %v5530
      %v5605 = vpop.f32.mrb[0].mxu0
      %v5606 = vadd.f32 0.0, %v5605
      %v5607 = vpop.f32.mrb[0].mxu0
      %v5608 = vpop.f32.mrb[0].mxu0
      %v5609 = vadd.f32 0.0, %v5608
      %v5610 = vpop.f32.mrb[0].mxu0
      %5611 = vmatprep.mubr.bf16.mxu0 0
      %5612 = vmatmul.mubr.bf16.gmra.mrb[0].mxu0 %v5532
      %v5613 = vpop.f32.mrb[0].mxu0
      %v5614 = vadd.f32 0.0, %v5613
      %v5615 = vpop.f32.mrb[0].mxu0
      %v5616 = vpop.f32.mrb[0].mxu0
      %v5617 = vadd.f32 0.0, %v5616
      %v5618 = vpop.f32.mrb[0].mxu0
      %5619 = vmatprep.mubr.bf16.mxu0 0
      %5620 = vmatmul.mubr.bf16.gmra.mrb[0].mxu0 %v5534
      %v5621 = vpop.f32.mrb[0].mxu0
      %v5622 = vadd.f32 0.0, %v5621
      %v5623 = vpop.f32.mrb[0].mxu0
      %v5624 = vpop.f32.mrb[0].mxu0
      %v5625 = vadd.f32 0.0, %v5624
      %v5626 = vpop.f32.mrb[0].mxu0
      %5627 = vmatprep.mubr.bf16.mxu0 0
      %5628 = vmatmul.mubr.bf16.gmra.mrb[0].mxu0 %v5536
      %v5629 = vpop.f32.mrb[0].mxu0
      %v5630 = vadd.f32 0.0, %v5629
      %v5631 = vpop.f32.mrb[0].mxu0
      %v5632 = vpop.f32.mrb[0].mxu0
      %v5633 = vadd.f32 0.0, %v5632
      %v5634 = vpop.f32.mrb[0].mxu0
      %5635 = vmatprep.mubr.bf16.mxu0 0
      %5636 = vmatmul.mubr.bf16.gmra.mrb[0].mxu0 %v5538
      %v5637 = vpop.f32.mrb[0].mxu0
      %v5638 = vadd.f32 0.0, %v5637
      %v5639 = vpop.f32.mrb[0].mxu0
      %v5640 = vpop.f32.mrb[0].mxu0
      %v5641 = vadd.f32 0.0, %v5640
      %v5642 = vpop.f32.mrb[0].mxu0
      %5643 = vmatprep.mubr.bf16.mxu0 0
      %5644 = vmatmul.mubr.bf16.gmra.mrb[0].mxu0 %v5540
      %v5645 = vpop.f32.mrb[0].mxu0
      %v5646 = vadd.f32 0.0, %v5645
      %v5647 = vpop.f32.mrb[0].mxu0
      %v5648 = vpop.f32.mrb[0].mxu0
      %v5649 = vadd.f32 0.0, %v5648
      %v5650 = vpop.f32.mrb[0].mxu0
      %5651 = vmatprep.mubr.bf16.mxu0 0
      %5652 = vmatmul.mubr.bf16.gmra.mrb[0].mxu0 %v5542
      %v5653 = vpop.f32.mrb[0].mxu0
      %v5654 = vadd.f32 0.0, %v5653
      %v5655 = vpop.f32.mrb[0].mxu0
      %v5656 = vpop.f32.mrb[0].mxu0
      %v5657 = vadd.f32 0.0, %v5656
      %v5658 = vpop.f32.mrb[0].mxu0
      %5659 = vmatprep.mubr.bf16.mxu0 0
      %5660 = vmatmul.mubr.bf16.gmra.mrb[0].mxu0 %v5544
      %v5661 = vpop.f32.mrb[0].mxu0
      %v5662 = vadd.f32 0.0, %v5661
      %v5663 = vpop.f32.mrb[0].mxu0
      %v5664 = vpop.f32.mrb[0].mxu0
      %v5665 = vadd.f32 0.0, %v5664
      %v5666 = vpop.f32.mrb[0].mxu0
      %5667 = vmatprep.mubr.bf16.mxu0 0
      %5668 = vmatmul.mubr.bf16.gmra.mrb[0].mxu0 %v5546
      %v5669 = vpop.f32.mrb[0].mxu0
      %v5670 = vadd.f32 0.0, %v5669
      %v5671 = vpop.f32.mrb[0].mxu0
      %v5672 = vpop.f32.mrb[0].mxu0
      %v5673 = vadd.f32 0.0, %v5672
      %v5674 = vpop.f32.mrb[0].mxu0
      %5675 = vmatprep.mubr.bf16.mxu0 0
      %5676 = vmatmul.mubr.bf16.gmra.mrb[0].mxu0 %v5548
      %v5677 = vpop.f32.mrb[0].mxu0
      %v5678 = vadd.f32 0.0, %v5677
      %v5679 = vpop.f32.mrb[0].mxu0
      %v5680 = vpop.f32.mrb[0].mxu0
      %v5681 = vadd.f32 0.0, %v5680
      %v5682 = vpop.f32.mrb[0].mxu0
      %5683 = vmatprep.mubr.bf16.mxu0 0
      %5684 = vmatmul.mubr.bf16.gmra.mrb[0].mxu0 %v5550
      %v5685 = vpop.f32.mrb[0].mxu0
      %v5686 = vadd.f32 0.0, %v5685
      %v5687 = vpop.f32.mrb[0].mxu0
      %v5688 = vpop.f32.mrb[0].mxu0
      %v5689 = vadd.f32 0.0, %v5688
      %v5690 = vpop.f32.mrb[0].mxu0
      %5691 = vmatprep.mubr.bf16.mxu0 0
      %5692 = vmatmul.mubr.bf16.gmra.mrb[0].mxu0 %v5552
      %v5693 = vpop.f32.mrb[0].mxu0
      %v5694 = vadd.f32 0.0, %v5693
      %v5695 = vpop.f32.mrb[0].mxu0
      %v5696 = vpop.f32.mrb[0].mxu0
      %v5697 = vadd.f32 0.0, %v5696
      %v5698 = vpop.f32.mrb[0].mxu0
      %5699 = vmatprep.mubr.bf16.mxu0 0
      %5700 = vmatmul.mubr.bf16.gmra.mrb[0].mxu0 %v5554
      %v5701 = vpop.f32.mrb[0].mxu0
      %v5702 = vadd.f32 0.0, %v5701
      %v5703 = vpop.f32.mrb[0].mxu0
      %v5704 = vpop.f32.mrb[0].mxu0
      %v5705 = vadd.f32 0.0, %v5704
      %v5706 = vpop.f32.mrb[0].mxu0
      %5707 = vmatprep.mubr.bf16.mxu0 0
      %5708 = vmatmul.mubr.bf16.gmra.mrb[0].mxu0 %v5556
      %v5709 = vpop.f32.mrb[0].mxu0
      %v5710 = vadd.f32 0.0, %v5709
      %v5711 = vpop.f32.mrb[0].mxu0
      %v5712 = vpop.f32.mrb[0].mxu0
      %v5713 = vadd.f32 0.0, %v5712
      %v5714 = vpop.f32.mrb[0].mxu0
      %5715 = vmatprep.mubr.bf16.mxu0 0
      %5716 = vmatmul.mubr.bf16.gmra.mrb[0].mxu0 %v5558
      %v5717 = vpop.f32.mrb[0].mxu0
      %v5718 = vadd.f32 0.0, %v5717
      %v5719 = vpop.f32.mrb[0].mxu0
      %v5720 = vpop.f32.mrb[0].mxu0
      %v5721 = vadd.f32 0.0, %v5720
      %v5722 = vpop.f32.mrb[0].mxu0
      %5723 = vdwg.mxu0
      %v5726 = vunpack.c.l.b16 %v4974
      %v5727 = vunpack.c.l.b16 %v4975
      %v5728 = vpack.c.b16 %v5727, %v5726
      %v5729 = vsel %vm2148, %v4943, 0
      %v5731 = vsel %vm2148, %v4945, 0
      %v5733 = vsel %vm2148, %v4947, 0
      %v5735 = vsel %vm2148, %v4949, 0
      %v5737 = vsel %vm2148, %v4951, 0
      %v5739 = vsel %vm2148, %v4953, 0
      %v5741 = vsel %vm2148, %v4955, 0
      %v5743 = vsel %vm2148, %v4957, 0
      %v5745 = vsel %vm2148, %v4959, 0
      %v5747 = vsel %vm2148, %v4961, 0
      %v5749 = vsel %vm2148, %v4963, 0
      %v5751 = vsel %vm2148, %v4965, 0
      %v5753 = vsel %vm2148, %v4967, 0
      %v5755 = vsel %vm2148, %v4969, 0
      %v5757 = vsel %vm2148, %v4971, 0
      %v5759 = vsel %vm2148, %v4973, 0
      %v5762 = vsel %vm2181, %v5728, 0
      %5764 = vmatprep.subr.bf16.mxu0 0
      %5765 = vmatpush1.bf16.msra.mxu0 %v5762
      %5766 = vmatprep.subr.bf16.mxu0 0
      %5767 = vmatpush1.bf16.msra.mxu0 0
      %5768 = vmatprep.subr.bf16.mxu0 0
      %5769 = vmatpush1.bf16.msra.mxu0 0
      %5770 = vmatprep.subr.bf16.mxu0 0
      %5771 = vmatpush1.bf16.msra.mxu0 0
      %5772 = vmatprep.subr.bf16.mxu0 0
      %5773 = vmatpush1.bf16.msra.mxu0 0
      %5774 = vmatprep.subr.bf16.mxu0 0
      %5775 = vmatpush1.bf16.msra.mxu0 0
      %5776 = vmatprep.subr.bf16.mxu0 0
      %5777 = vmatpush1.bf16.msra.mxu0 0
      %5778 = vmatprep.subr.bf16.mxu0 0
      %5779 = vmatpush1.bf16.msra.mxu0 0
      %5780 = vmatprep.subr.bf16.mxu0 0
      %5781 = vmatpush1.bf16.msra.mxu0 0
      %5782 = vmatprep.subr.bf16.mxu0 0
      %5783 = vmatpush1.bf16.msra.mxu0 0
      %5784 = vmatprep.subr.bf16.mxu0 0
      %5785 = vmatpush1.bf16.msra.mxu0 0
      %5786 = vmatprep.subr.bf16.mxu0 0
      %5787 = vmatpush1.bf16.msra.mxu0 0
      %5788 = vmatprep.subr.bf16.mxu0 0
      %5789 = vmatpush1.bf16.msra.mxu0 0
      %5790 = vmatprep.subr.bf16.mxu0 0
      %5791 = vmatpush1.bf16.msra.mxu0 0
      %5792 = vmatprep.subr.bf16.mxu0 0
      %5793 = vmatpush1.bf16.msra.mxu0 0
      %5794 = vmatprep.subr.bf16.mxu0 0
      %5795 = vmatpush1.bf16.msra.mxu0 0
      %5796 = vmatprep.mubr.bf16.mxu0 0
      %5797 = vmatmul.mubr.bf16.gmra.mrb[0].mxu0 %v5729
      %v5798 = vpop.f32.mrb[0].mxu0
      %v5799 = vadd.f32 %v5598, %v5798
      %v5800 = vpop.f32.mrb[0].mxu0
      %v5801 = vpop.f32.mrb[0].mxu0
      %v5802 = vadd.f32 %v5601, %v5801
      %v5803 = vpop.f32.mrb[0].mxu0
      %5804 = vmatprep.mubr.bf16.mxu0 0
      %5805 = vmatmul.mubr.bf16.gmra.mrb[0].mxu0 %v5731
      %v5806 = vpop.f32.mrb[0].mxu0
      %v5807 = vadd.f32 %v5606, %v5806
      %v5808 = vpop.f32.mrb[0].mxu0
      %v5809 = vpop.f32.mrb[0].mxu0
      %v5810 = vadd.f32 %v5609, %v5809
      %v5811 = vpop.f32.mrb[0].mxu0
      %5812 = vmatprep.mubr.bf16.mxu0 0
      %5813 = vmatmul.mubr.bf16.gmra.mrb[0].mxu0 %v5733
      %v5814 = vpop.f32.mrb[0].mxu0
      %v5815 = vadd.f32 %v5614, %v5814
      %v5816 = vpop.f32.mrb[0].mxu0
      %v5817 = vpop.f32.mrb[0].mxu0
      %v5818 = vadd.f32 %v5617, %v5817
      %v5819 = vpop.f32.mrb[0].mxu0
      %5820 = vmatprep.mubr.bf16.mxu0 0
      %5821 = vmatmul.mubr.bf16.gmra.mrb[0].mxu0 %v5735
      %v5822 = vpop.f32.mrb[0].mxu0
      %v5823 = vadd.f32 %v5622, %v5822
      %v5824 = vpop.f32.mrb[0].mxu0
      %v5825 = vpop.f32.mrb[0].mxu0
      %v5826 = vadd.f32 %v5625, %v5825
      %v5827 = vpop.f32.mrb[0].mxu0
      %5828 = vmatprep.mubr.bf16.mxu0 0
      %5829 = vmatmul.mubr.bf16.gmra.mrb[0].mxu0 %v5737
      %v5830 = vpop.f32.mrb[0].mxu0
      %v5831 = vadd.f32 %v5630, %v5830
      %v5832 = vpop.f32.mrb[0].mxu0
      %v5833 = vpop.f32.mrb[0].mxu0
      %v5834 = vadd.f32 %v5633, %v5833
      %v5835 = vpop.f32.mrb[0].mxu0
      %5836 = vmatprep.mubr.bf16.mxu0 0
      %5837 = vmatmul.mubr.bf16.gmra.mrb[0].mxu0 %v5739
      %v5838 = vpop.f32.mrb[0].mxu0
      %v5839 = vadd.f32 %v5638, %v5838
      %v5840 = vpop.f32.mrb[0].mxu0
      %v5841 = vpop.f32.mrb[0].mxu0
      %v5842 = vadd.f32 %v5641, %v5841
      %v5843 = vpop.f32.mrb[0].mxu0
      %5844 = vmatprep.mubr.bf16.mxu0 0
      %5845 = vmatmul.mubr.bf16.gmra.mrb[0].mxu0 %v5741
      %v5846 = vpop.f32.mrb[0].mxu0
      %v5847 = vadd.f32 %v5646, %v5846
      %v5848 = vpop.f32.mrb[0].mxu0
      %v5849 = vpop.f32.mrb[0].mxu0
      %v5850 = vadd.f32 %v5649, %v5849
      %v5851 = vpop.f32.mrb[0].mxu0
      %5852 = vmatprep.mubr.bf16.mxu0 0
      %5853 = vmatmul.mubr.bf16.gmra.mrb[0].mxu0 %v5743
      %v5854 = vpop.f32.mrb[0].mxu0
      %v5855 = vadd.f32 %v5654, %v5854
      %v5856 = vpop.f32.mrb[0].mxu0
      %v5857 = vpop.f32.mrb[0].mxu0
      %v5858 = vadd.f32 %v5657, %v5857
      %v5859 = vpop.f32.mrb[0].mxu0
      %5860 = vmatprep.mubr.bf16.mxu0 0
      %5861 = vmatmul.mubr.bf16.gmra.mrb[0].mxu0 %v5745
      %v5862 = vpop.f32.mrb[0].mxu0
      %v5863 = vadd.f32 %v5662, %v5862
      %v5864 = vpop.f32.mrb[0].mxu0
      %v5865 = vpop.f32.mrb[0].mxu0
      %v5866 = vadd.f32 %v5665, %v5865
      %v5867 = vpop.f32.mrb[0].mxu0
      %5868 = vmatprep.mubr.bf16.mxu0 0
      %5869 = vmatmul.mubr.bf16.gmra.mrb[0].mxu0 %v5747
      %v5870 = vpop.f32.mrb[0].mxu0
      %v5871 = vadd.f32 %v5670, %v5870
      %v5872 = vpop.f32.mrb[0].mxu0
      %v5873 = vpop.f32.mrb[0].mxu0
      %v5874 = vadd.f32 %v5673, %v5873
      %v5875 = vpop.f32.mrb[0].mxu0
      %5876 = vmatprep.mubr.bf16.mxu0 0
      %5877 = vmatmul.mubr.bf16.gmra.mrb[0].mxu0 %v5749
      %v5878 = vpop.f32.mrb[0].mxu0
      %v5879 = vadd.f32 %v5678, %v5878
      %v5880 = vpop.f32.mrb[0].mxu0
      %v5881 = vpop.f32.mrb[0].mxu0
      %v5882 = vadd.f32 %v5681, %v5881
      %v5883 = vpop.f32.mrb[0].mxu0
      %5884 = vmatprep.mubr.bf16.mxu0 0
      %5885 = vmatmul.mubr.bf16.gmra.mrb[0].mxu0 %v5751
      %v5886 = vpop.f32.mrb[0].mxu0
      %v5887 = vadd.f32 %v5686, %v5886
      %v5888 = vpop.f32.mrb[0].mxu0
      %v5889 = vpop.f32.mrb[0].mxu0
      %v5890 = vadd.f32 %v5689, %v5889
      %v5891 = vpop.f32.mrb[0].mxu0
      %5892 = vmatprep.mubr.bf16.mxu0 0
      %5893 = vmatmul.mubr.bf16.gmra.mrb[0].mxu0 %v5753
      %v5894 = vpop.f32.mrb[0].mxu0
      %v5895 = vadd.f32 %v5694, %v5894
      %v5896 = vpop.f32.mrb[0].mxu0
      %v5897 = vpop.f32.mrb[0].mxu0
      %v5898 = vadd.f32 %v5697, %v5897
      %v5899 = vpop.f32.mrb[0].mxu0
      %5900 = vmatprep.mubr.bf16.mxu0 0
      %5901 = vmatmul.mubr.bf16.gmra.mrb[0].mxu0 %v5755
      %v5902 = vpop.f32.mrb[0].mxu0
      %v5903 = vadd.f32 %v5702, %v5902
      %v5904 = vpop.f32.mrb[0].mxu0
      %v5905 = vpop.f32.mrb[0].mxu0
      %v5906 = vadd.f32 %v5705, %v5905
      %v5907 = vpop.f32.mrb[0].mxu0
      %5908 = vmatprep.mubr.bf16.mxu0 0
      %5909 = vmatmul.mubr.bf16.gmra.mrb[0].mxu0 %v5757
      %v5910 = vpop.f32.mrb[0].mxu0
      %v5911 = vadd.f32 %v5710, %v5910
      %v5912 = vpop.f32.mrb[0].mxu0
      %v5913 = vpop.f32.mrb[0].mxu0
      %v5914 = vadd.f32 %v5713, %v5913
      %v5915 = vpop.f32.mrb[0].mxu0
      %5916 = vmatprep.mubr.bf16.mxu0 0
      %5917 = vmatmul.mubr.bf16.gmra.mrb[0].mxu0 %v5759
      %v5918 = vpop.f32.mrb[0].mxu0
      %v5919 = vadd.f32 %v5718, %v5918
      %v5920 = vpop.f32.mrb[0].mxu0
      %v5921 = vpop.f32.mrb[0].mxu0
      %v5922 = vadd.f32 %v5721, %v5921
      %v5923 = vpop.f32.mrb[0].mxu0
      %5924 = vdwg.mxu0
      %v5925 = vld [vmem:[%s2547] sm:$0xf]
      %v5926 = vld [vmem:[%s2547 + $0x4] sm:$0xf]
      %v5927 = vld [vmem:[%s2547 + $0x8] sm:$0x1]
      %v5928 = vld [vmem:[%s2547 + $0xc] sm:$0xf]
      %v5929 = vld [vmem:[%s2547 + $0x10] sm:$0xf]
      %v5930 = vld [vmem:[%s2547 + $0x14] sm:$0x1]
      %v5931 = vld [vmem:[%s2547 + $0x18] sm:$0xf]
      %v5932 = vld [vmem:[%s2547 + $0x1c] sm:$0xf]
      %v5933 = vld [vmem:[%s2547 + $0x20] sm:$0x1]
      %v5934 = vld [vmem:[%s2547 + $0x24] sm:$0xf]
      %v5935 = vld [vmem:[%s2547 + $0x28] sm:$0xf]
      %v5936 = vld [vmem:[%s2547 + $0x2c] sm:$0x1]
      %v5937 = vld [vmem:[%s2547 + $0x30] sm:$0xf]
      %v5938 = vld [vmem:[%s2547 + $0x34] sm:$0xf]
      %v5939 = vld [vmem:[%s2547 + $0x38] sm:$0x1]
      %v5940 = vld [vmem:[%s2547 + $0x3c] sm:$0xf]
      %v5941 = vld [vmem:[%s2547 + $0x40] sm:$0xf]
      %v5942 = vld [vmem:[%s2547 + $0x44] sm:$0x1]
      %v5943 = vld [vmem:[%s2547 + $0x48] sm:$0xf]
      %v5944 = vld [vmem:[%s2547 + $0x4c] sm:$0xf]
      %v5945 = vld [vmem:[%s2547 + $0x50] sm:$0x1]
      %v5946 = vld [vmem:[%s2547 + $0x54] sm:$0xf]
      %v5947 = vld [vmem:[%s2547 + $0x58] sm:$0xf]
      %v5948 = vld [vmem:[%s2547 + $0x5c] sm:$0x1]
      %v5949 = vld [vmem:[%s2547 + $0x60] sm:$0xf]
      %v5950 = vld [vmem:[%s2547 + $0x64] sm:$0xf]
      %v5951 = vld [vmem:[%s2547 + $0x68] sm:$0x1]
      %v5952 = vld [vmem:[%s2547 + $0x6c] sm:$0xf]
      %v5953 = vld [vmem:[%s2547 + $0x70] sm:$0xf]
      %v5954 = vld [vmem:[%s2547 + $0x74] sm:$0x1]
      %v5955 = vld [vmem:[%s2547 + $0x78] sm:$0xf]
      %v5956 = vld [vmem:[%s2547 + $0x7c] sm:$0xf]
      %v5957 = vld [vmem:[%s2547 + $0x80] sm:$0x1]
      %v5958 = vld [vmem:[%s2547 + $0x84] sm:$0xf]
      %v5959 = vld [vmem:[%s2547 + $0x88] sm:$0xf]
      %v5960 = vld [vmem:[%s2547 + $0x8c] sm:$0x1]
      %v5961 = vld [vmem:[%s2547 + $0x90] sm:$0xf]
      %v5962 = vld [vmem:[%s2547 + $0x94] sm:$0xf]
      %v5963 = vld [vmem:[%s2547 + $0x98] sm:$0x1]
      %v5964 = vld [vmem:[%s2547 + $0x9c] sm:$0xf]
      %v5965 = vld [vmem:[%s2547 + $0xa0] sm:$0xf]
      %v5966 = vld [vmem:[%s2547 + $0xa4] sm:$0x1]
      %v5967 = vld [vmem:[%s2547 + $0xa8] sm:$0xf]
      %v5968 = vld [vmem:[%s2547 + $0xac] sm:$0xf]
      %v5969 = vld [vmem:[%s2547 + $0xb0] sm:$0x1]
      %v5970 = vld [vmem:[%s2547 + $0xb4] sm:$0xf]
      %v5971 = vld [vmem:[%s2547 + $0xb8] sm:$0xf]
      %v5972 = vld [vmem:[%s2547 + $0xbc] sm:$0x1]
      %v6005 = vunpack.c.l.b16 %v5925
      %v6006 = vunpack.c.l.b16 %v5926
      %v6007 = vunpack.c.l.b16 %v5928
      %v6008 = vunpack.c.l.b16 %v5929
      %v6009 = vunpack.c.l.b16 %v5931
      %v6010 = vunpack.c.l.b16 %v5932
      %v6011 = vunpack.c.l.b16 %v5934
      %v6012 = vunpack.c.l.b16 %v5935
      %v6013 = vunpack.c.l.b16 %v5937
      %v6014 = vunpack.c.l.b16 %v5938
      %v6015 = vunpack.c.l.b16 %v5940
      %v6016 = vunpack.c.l.b16 %v5941
      %v6017 = vunpack.c.l.b16 %v5943
      %v6018 = vunpack.c.l.b16 %v5944
      %v6019 = vunpack.c.l.b16 %v5946
      %v6020 = vunpack.c.l.b16 %v5947
      %v6021 = vunpack.c.l.b16 %v5949
      %v6022 = vunpack.c.l.b16 %v5950
      %v6023 = vunpack.c.l.b16 %v5952
      %v6024 = vunpack.c.l.b16 %v5953
      %v6025 = vunpack.c.l.b16 %v5955
      %v6026 = vunpack.c.l.b16 %v5956
      %v6027 = vunpack.c.l.b16 %v5958
      %v6028 = vunpack.c.l.b16 %v5959
      %v6029 = vunpack.c.l.b16 %v5961
      %v6030 = vunpack.c.l.b16 %v5962
      %v6031 = vunpack.c.l.b16 %v5964
      %v6032 = vunpack.c.l.b16 %v5965
      %v6033 = vunpack.c.l.b16 %v5967
      %v6034 = vunpack.c.l.b16 %v5968
      %v6035 = vunpack.c.l.b16 %v5970
      %v6036 = vunpack.c.l.b16 %v5971
      %v6037 = vpack.c.b16 %v6006, %v6005
      %v6038 = vpack.c.b16 %v6008, %v6007
      %v6039 = vpack.c.b16 %v6010, %v6009
      %v6040 = vpack.c.b16 %v6012, %v6011
      %v6041 = vpack.c.b16 %v6014, %v6013
      %v6042 = vpack.c.b16 %v6016, %v6015
      %v6043 = vpack.c.b16 %v6018, %v6017
      %v6044 = vpack.c.b16 %v6020, %v6019
      %v6045 = vpack.c.b16 %v6022, %v6021
      %v6046 = vpack.c.b16 %v6024, %v6023
      %v6047 = vpack.c.b16 %v6026, %v6025
      %v6048 = vpack.c.b16 %v6028, %v6027
      %v6049 = vpack.c.b16 %v6030, %v6029
      %v6050 = vpack.c.b16 %v6032, %v6031
      %v6051 = vpack.c.b16 %v6034, %v6033
      %v6052 = vpack.c.b16 %v6036, %v6035
      %v6069 = vunpack.c.l.b16 %v5927
      %v6070 = vunpack.c.l.b16 %v5930
      %v6071 = vunpack.c.l.b16 %v5933
      %v6072 = vunpack.c.l.b16 %v5936
      %v6073 = vunpack.c.l.b16 %v5939
      %v6074 = vunpack.c.l.b16 %v5942
      %v6075 = vunpack.c.l.b16 %v5945
      %v6076 = vunpack.c.l.b16 %v5948
      %v6077 = vunpack.c.l.b16 %v5951
      %v6078 = vunpack.c.l.b16 %v5954
      %v6079 = vunpack.c.l.b16 %v5957
      %v6080 = vunpack.c.l.b16 %v5960
      %v6081 = vunpack.c.l.b16 %v5963
      %v6082 = vunpack.c.l.b16 %v5966
      %v6083 = vunpack.c.l.b16 %v5969
      %v6084 = vunpack.c.l.b16 %v5972
      %v6085 = vpack.c.b16 %v6069, %v6069
      %v6086 = vpack.c.b16 %v6070, %v6070
      %v6087 = vpack.c.b16 %v6071, %v6071
      %v6088 = vpack.c.b16 %v6072, %v6072
      %v6089 = vpack.c.b16 %v6073, %v6073
      %v6090 = vpack.c.b16 %v6074, %v6074
      %v6091 = vpack.c.b16 %v6075, %v6075
      %v6092 = vpack.c.b16 %v6076, %v6076
      %v6093 = vpack.c.b16 %v6077, %v6077
      %v6094 = vpack.c.b16 %v6078, %v6078
      %v6095 = vpack.c.b16 %v6079, %v6079
      %v6096 = vpack.c.b16 %v6080, %v6080
      %v6097 = vpack.c.b16 %v6081, %v6081
      %v6098 = vpack.c.b16 %v6082, %v6082
      %v6099 = vpack.c.b16 %v6083, %v6083
      %v6100 = vpack.c.b16 %v6084, %v6084
      %v6102 = vshrl.u32 %v6037, 16
      %v6104 = vshll.u32 %v6037, 16
      %v6106 = vrot.slane %v6104, 1
      %v6107 = vor.u32 %v6102, %v6106
      %v6109 = vshll.u32 %v6085, 16
      %v6111 = vrot.slane %v6109, 1
      %v6112 = vsel %vm1222, %v6107, %v6111
      %v6114 = vshrl.u32 %v6038, 16
      %v6116 = vshll.u32 %v6038, 16
      %v6118 = vrot.slane %v6116, 1
      %v6119 = vor.u32 %v6114, %v6118
      %v6121 = vshll.u32 %v6086, 16
      %v6123 = vrot.slane %v6121, 1
      %v6124 = vsel %vm1222, %v6119, %v6123
      %v6126 = vshrl.u32 %v6039, 16
      %v6128 = vshll.u32 %v6039, 16
      %v6130 = vrot.slane %v6128, 1
      %v6131 = vor.u32 %v6126, %v6130
      %v6133 = vshll.u32 %v6087, 16
      %v6135 = vrot.slane %v6133, 1
      %v6136 = vsel %vm1222, %v6131, %v6135
      %v6138 = vshrl.u32 %v6040, 16
      %v6140 = vshll.u32 %v6040, 16
      %v6142 = vrot.slane %v6140, 1
      %v6143 = vor.u32 %v6138, %v6142
      %v6145 = vshll.u32 %v6088, 16
      %v6147 = vrot.slane %v6145, 1
      %v6148 = vsel %vm1222, %v6143, %v6147
      %v6150 = vshrl.u32 %v6041, 16
      %v6152 = vshll.u32 %v6041, 16
      %v6154 = vrot.slane %v6152, 1
      %v6155 = vor.u32 %v6150, %v6154
      %v6157 = vshll.u32 %v6089, 16
      %v6159 = vrot.slane %v6157, 1
      %v6160 = vsel %vm1222, %v6155, %v6159
      %v6162 = vshrl.u32 %v6042, 16
      %v6164 = vshll.u32 %v6042, 16
      %v6166 = vrot.slane %v6164, 1
      %v6167 = vor.u32 %v6162, %v6166
      %v6169 = vshll.u32 %v6090, 16
      %v6171 = vrot.slane %v6169, 1
      %v6172 = vsel %vm1222, %v6167, %v6171
      %v6174 = vshrl.u32 %v6043, 16
      %v6176 = vshll.u32 %v6043, 16
      %v6178 = vrot.slane %v6176, 1
      %v6179 = vor.u32 %v6174, %v6178
      %v6181 = vshll.u32 %v6091, 16
      %v6183 = vrot.slane %v6181, 1
      %v6184 = vsel %vm1222, %v6179, %v6183
      %v6186 = vshrl.u32 %v6044, 16
      %v6188 = vshll.u32 %v6044, 16
      %v6190 = vrot.slane %v6188, 1
      %v6191 = vor.u32 %v6186, %v6190
      %v6193 = vshll.u32 %v6092, 16
      %v6195 = vrot.slane %v6193, 1
      %v6196 = vsel %vm1222, %v6191, %v6195
      %v6198 = vshrl.u32 %v6045, 16
      %v6200 = vshll.u32 %v6045, 16
      %v6202 = vrot.slane %v6200, 1
      %v6203 = vor.u32 %v6198, %v6202
      %v6205 = vshll.u32 %v6093, 16
      %v6207 = vrot.slane %v6205, 1
      %v6208 = vsel %vm1222, %v6203, %v6207
      %v6210 = vshrl.u32 %v6046, 16
      %v6212 = vshll.u32 %v6046, 16
      %v6214 = vrot.slane %v6212, 1
      %v6215 = vor.u32 %v6210, %v6214
      %v6217 = vshll.u32 %v6094, 16
      %v6219 = vrot.slane %v6217, 1
      %v6220 = vsel %vm1222, %v6215, %v6219
      %v6222 = vshrl.u32 %v6047, 16
      %v6224 = vshll.u32 %v6047, 16
      %v6226 = vrot.slane %v6224, 1
      %v6227 = vor.u32 %v6222, %v6226
      %v6229 = vshll.u32 %v6095, 16
      %v6231 = vrot.slane %v6229, 1
      %v6232 = vsel %vm1222, %v6227, %v6231
      %v6234 = vshrl.u32 %v6048, 16
      %v6236 = vshll.u32 %v6048, 16
      %v6238 = vrot.slane %v6236, 1
      %v6239 = vor.u32 %v6234, %v6238
      %v6241 = vshll.u32 %v6096, 16
      %v6243 = vrot.slane %v6241, 1
      %v6244 = vsel %vm1222, %v6239, %v6243
      %v6246 = vshrl.u32 %v6049, 16
      %v6248 = vshll.u32 %v6049, 16
      %v6250 = vrot.slane %v6248, 1
      %v6251 = vor.u32 %v6246, %v6250
      %v6253 = vshll.u32 %v6097, 16
      %v6255 = vrot.slane %v6253, 1
      %v6256 = vsel %vm1222, %v6251, %v6255
      %v6258 = vshrl.u32 %v6050, 16
      %v6260 = vshll.u32 %v6050, 16
      %v6262 = vrot.slane %v6260, 1
      %v6263 = vor.u32 %v6258, %v6262
      %v6265 = vshll.u32 %v6098, 16
      %v6267 = vrot.slane %v6265, 1
      %v6268 = vsel %vm1222, %v6263, %v6267
      %v6270 = vshrl.u32 %v6051, 16
      %v6272 = vshll.u32 %v6051, 16
      %v6274 = vrot.slane %v6272, 1
      %v6275 = vor.u32 %v6270, %v6274
      %v6277 = vshll.u32 %v6099, 16
      %v6279 = vrot.slane %v6277, 1
      %v6280 = vsel %vm1222, %v6275, %v6279
      %v6282 = vshrl.u32 %v6052, 16
      %v6284 = vshll.u32 %v6052, 16
      %v6286 = vrot.slane %v6284, 1
      %v6287 = vor.u32 %v6282, %v6286
      %v6289 = vshll.u32 %v6100, 16
      %v6291 = vrot.slane %v6289, 1
      %v6292 = vsel %vm1222, %v6287, %v6291
      %6293 = vrot.lane.b32.xlu0 %v6112, 4
      %v6294 = vpop.permute.xlu0 %6293
      %6295 = vrot.lane.b32.xlu0 %v6124, 4
      %v6296 = vpop.permute.xlu0 %6295
      %6297 = vrot.lane.b32.xlu0 %v6136, 4
      %v6298 = vpop.permute.xlu0 %6297
      %6299 = vrot.lane.b32.xlu0 %v6148, 4
      %v6300 = vpop.permute.xlu0 %6299
      %6301 = vrot.lane.b32.xlu0 %v6160, 4
      %v6302 = vpop.permute.xlu0 %6301
      %6303 = vrot.lane.b32.xlu0 %v6172, 4
      %v6304 = vpop.permute.xlu0 %6303
      %6305 = vrot.lane.b32.xlu0 %v6184, 4
      %v6306 = vpop.permute.xlu0 %6305
      %6307 = vrot.lane.b32.xlu0 %v6196, 4
      %v6308 = vpop.permute.xlu0 %6307
      %6309 = vrot.lane.b32.xlu0 %v6208, 4
      %v6310 = vpop.permute.xlu0 %6309
      %6311 = vrot.lane.b32.xlu0 %v6220, 4
      %v6312 = vpop.permute.xlu0 %6311
      %6313 = vrot.lane.b32.xlu0 %v6232, 4
      %v6314 = vpop.permute.xlu0 %6313
      %6315 = vrot.lane.b32.xlu0 %v6244, 4
      %v6316 = vpop.permute.xlu0 %6315
      %6317 = vrot.lane.b32.xlu0 %v6256, 4
      %v6318 = vpop.permute.xlu0 %6317
      %6319 = vrot.lane.b32.xlu0 %v6268, 4
      %v6320 = vpop.permute.xlu0 %6319
      %6321 = vrot.lane.b32.xlu0 %v6280, 4
      %v6322 = vpop.permute.xlu0 %6321
      %6323 = vrot.lane.b32.xlu0 %v6292, 4
      %v6324 = vpop.permute.xlu0 %6323
      %v6325 = vrot.slane %v6037, 1
      %v6326 = vrot.slane %v6085, 1
      %v6327 = vsel %vm1447, %v6325, %v6326
      %v6328 = vrot.slane %v6038, 1
      %v6329 = vrot.slane %v6086, 1
      %v6330 = vsel %vm1447, %v6328, %v6329
      %v6331 = vrot.slane %v6039, 1
      %v6332 = vrot.slane %v6087, 1
      %v6333 = vsel %vm1447, %v6331, %v6332
      %v6334 = vrot.slane %v6040, 1
      %v6335 = vrot.slane %v6088, 1
      %v6336 = vsel %vm1447, %v6334, %v6335
      %v6337 = vrot.slane %v6041, 1
      %v6338 = vrot.slane %v6089, 1
      %v6339 = vsel %vm1447, %v6337, %v6338
      %v6340 = vrot.slane %v6042, 1
      %v6341 = vrot.slane %v6090, 1
      %v6342 = vsel %vm1447, %v6340, %v6341
      %v6343 = vrot.slane %v6043, 1
      %v6344 = vrot.slane %v6091, 1
      %v6345 = vsel %vm1447, %v6343, %v6344
      %v6346 = vrot.slane %v6044, 1
      %v6347 = vrot.slane %v6092, 1
      %v6348 = vsel %vm1447, %v6346, %v6347
      %v6349 = vrot.slane %v6045, 1
      %v6350 = vrot.slane %v6093, 1
      %v6351 = vsel %vm1447, %v6349, %v6350
      %v6352 = vrot.slane %v6046, 1
      %v6353 = vrot.slane %v6094, 1
      %v6354 = vsel %vm1447, %v6352, %v6353
      %v6355 = vrot.slane %v6047, 1
      %v6356 = vrot.slane %v6095, 1
      %v6357 = vsel %vm1447, %v6355, %v6356
      %v6358 = vrot.slane %v6048, 1
      %v6359 = vrot.slane %v6096, 1
      %v6360 = vsel %vm1447, %v6358, %v6359
      %v6361 = vrot.slane %v6049, 1
      %v6362 = vrot.slane %v6097, 1
      %v6363 = vsel %vm1447, %v6361, %v6362
      %v6364 = vrot.slane %v6050, 1
      %v6365 = vrot.slane %v6098, 1
      %v6366 = vsel %vm1447, %v6364, %v6365
      %v6367 = vrot.slane %v6051, 1
      %v6368 = vrot.slane %v6099, 1
      %v6369 = vsel %vm1447, %v6367, %v6368
      %v6370 = vrot.slane %v6052, 1
      %v6371 = vrot.slane %v6100, 1
      %v6372 = vsel %vm1447, %v6370, %v6371
      %6373 = vrot.lane.b32.xlu0 %v6327, 8
      %v6374 = vpop.permute.xlu0 %6373
      %6375 = vrot.lane.b32.xlu0 %v6330, 8
      %v6376 = vpop.permute.xlu0 %6375
      %6377 = vrot.lane.b32.xlu0 %v6333, 8
      %v6378 = vpop.permute.xlu0 %6377
      %6379 = vrot.lane.b32.xlu0 %v6336, 8
      %v6380 = vpop.permute.xlu0 %6379
      %6381 = vrot.lane.b32.xlu0 %v6339, 8
      %v6382 = vpop.permute.xlu0 %6381
      %6383 = vrot.lane.b32.xlu0 %v6342, 8
      %v6384 = vpop.permute.xlu0 %6383
      %6385 = vrot.lane.b32.xlu0 %v6345, 8
      %v6386 = vpop.permute.xlu0 %6385
      %6387 = vrot.lane.b32.xlu0 %v6348, 8
      %v6388 = vpop.permute.xlu0 %6387
      %6389 = vrot.lane.b32.xlu0 %v6351, 8
      %v6390 = vpop.permute.xlu0 %6389
      %6391 = vrot.lane.b32.xlu0 %v6354, 8
      %v6392 = vpop.permute.xlu0 %6391
      %6393 = vrot.lane.b32.xlu0 %v6357, 8
      %v6394 = vpop.permute.xlu0 %6393
      %6395 = vrot.lane.b32.xlu0 %v6360, 8
      %v6396 = vpop.permute.xlu0 %6395
      %6397 = vrot.lane.b32.xlu0 %v6363, 8
      %v6398 = vpop.permute.xlu0 %6397
      %6399 = vrot.lane.b32.xlu0 %v6366, 8
      %v6400 = vpop.permute.xlu0 %6399
      %6401 = vrot.lane.b32.xlu0 %v6369, 8
      %v6402 = vpop.permute.xlu0 %6401
      %6403 = vrot.lane.b32.xlu0 %v6372, 8
      %v6404 = vpop.permute.xlu0 %6403
      %v6406 = vsel %vm1528, %v6037, %v6294
      %v6408 = vsel %vm1528, %v6038, %v6296
      %v6410 = vsel %vm1528, %v6039, %v6298
      %v6412 = vsel %vm1528, %v6040, %v6300
      %v6414 = vsel %vm1528, %v6041, %v6302
      %v6416 = vsel %vm1528, %v6042, %v6304
      %v6418 = vsel %vm1528, %v6043, %v6306
      %v6420 = vsel %vm1528, %v6044, %v6308
      %v6422 = vsel %vm1528, %v6045, %v6310
      %v6424 = vsel %vm1528, %v6046, %v6312
      %v6426 = vsel %vm1528, %v6047, %v6314
      %v6428 = vsel %vm1528, %v6048, %v6316
      %v6430 = vsel %vm1528, %v6049, %v6318
      %v6432 = vsel %vm1528, %v6050, %v6320
      %v6434 = vsel %vm1528, %v6051, %v6322
      %v6436 = vsel %vm1528, %v6052, %v6324
      %v6438 = vsel %vm1561, %v6406, %v6374
      %v6440 = vsel %vm1561, %v6408, %v6376
      %v6442 = vsel %vm1561, %v6410, %v6378
      %v6444 = vsel %vm1561, %v6412, %v6380
      %v6446 = vsel %vm1561, %v6414, %v6382
      %v6448 = vsel %vm1561, %v6416, %v6384
      %v6450 = vsel %vm1561, %v6418, %v6386
      %v6452 = vsel %vm1561, %v6420, %v6388
      %v6454 = vsel %vm1561, %v6422, %v6390
      %v6456 = vsel %vm1561, %v6424, %v6392
      %v6458 = vsel %vm1561, %v6426, %v6394
      %v6460 = vsel %vm1561, %v6428, %v6396
      %v6462 = vsel %vm1561, %v6430, %v6398
      %v6464 = vsel %vm1561, %v6432, %v6400
      %v6466 = vsel %vm1561, %v6434, %v6402
      %v6468 = vsel %vm1561, %v6436, %v6404
      %s6469 = scalar_lea.vmem %s2, 16
      %v6470 = vld [vmem:[%s6469] sm:$0xf]
      %v6471 = vld [vmem:[%s6469 + $0x4] sm:$0x3]
      %v6474 = vunpack.c.l.b16 %v6470
      %v6475 = vunpack.c.l.b16 %v6471
      %v6476 = vpack.c.b16 %v6475, %v6474
      %v6477 = vsel %vm2148, %v6438, 0
      %v6479 = vsel %vm2148, %v6440, 0
      %v6481 = vsel %vm2148, %v6442, 0
      %v6483 = vsel %vm2148, %v6444, 0
      %v6485 = vsel %vm2148, %v6446, 0
      %v6487 = vsel %vm2148, %v6448, 0
      %v6489 = vsel %vm2148, %v6450, 0
      %v6491 = vsel %vm2148, %v6452, 0
      %v6493 = vsel %vm2148, %v6454, 0
      %v6495 = vsel %vm2148, %v6456, 0
      %v6497 = vsel %vm2148, %v6458, 0
      %v6499 = vsel %vm2148, %v6460, 0
      %v6501 = vsel %vm2148, %v6462, 0
      %v6503 = vsel %vm2148, %v6464, 0
      %v6505 = vsel %vm2148, %v6466, 0
      %v6507 = vsel %vm2148, %v6468, 0
      %v6510 = vsel %vm2181, %v6476, 0
      %6512 = vmatprep.subr.bf16.mxu0 0
      %6513 = vmatpush1.bf16.msra.mxu0 %v6510
      %6514 = vmatprep.subr.bf16.mxu0 0
      %6515 = vmatpush1.bf16.msra.mxu0 0
      %6516 = vmatprep.subr.bf16.mxu0 0
      %6517 = vmatpush1.bf16.msra.mxu0 0
      %6518 = vmatprep.subr.bf16.mxu0 0
      %6519 = vmatpush1.bf16.msra.mxu0 0
      %6520 = vmatprep.subr.bf16.mxu0 0
      %6521 = vmatpush1.bf16.msra.mxu0 0
      %6522 = vmatprep.subr.bf16.mxu0 0
      %6523 = vmatpush1.bf16.msra.mxu0 0
      %6524 = vmatprep.subr.bf16.mxu0 0
      %6525 = vmatpush1.bf16.msra.mxu0 0
      %6526 = vmatprep.subr.bf16.mxu0 0
      %6527 = vmatpush1.bf16.msra.mxu0 0
      %6528 = vmatprep.subr.bf16.mxu0 0
      %6529 = vmatpush1.bf16.msra.mxu0 0
      %6530 = vmatprep.subr.bf16.mxu0 0
      %6531 = vmatpush1.bf16.msra.mxu0 0
      %6532 = vmatprep.subr.bf16.mxu0 0
      %6533 = vmatpush1.bf16.msra.mxu0 0
      %6534 = vmatprep.subr.bf16.mxu0 0
      %6535 = vmatpush1.bf16.msra.mxu0 0
      %6536 = vmatprep.subr.bf16.mxu0 0
      %6537 = vmatpush1.bf16.msra.mxu0 0
      %6538 = vmatprep.subr.bf16.mxu0 0
      %6539 = vmatpush1.bf16.msra.mxu0 0
      %6540 = vmatprep.subr.bf16.mxu0 0
      %6541 = vmatpush1.bf16.msra.mxu0 0
      %6542 = vmatprep.subr.bf16.mxu0 0
      %6543 = vmatpush1.bf16.msra.mxu0 0
      %6544 = vmatprep.mubr.bf16.mxu0 0
      %6545 = vmatmul.mubr.bf16.gmra.mrb[0].mxu0 %v6477
      %v6546 = vpop.f32.mrb[0].mxu0
      %v6547 = vadd.f32 0.0, %v6546
      %v6548 = vpop.f32.mrb[0].mxu0
      %v6549 = vpop.f32.mrb[0].mxu0
      %v6550 = vadd.f32 0.0, %v6549
      %v6551 = vpop.f32.mrb[0].mxu0
      %6552 = vmatprep.mubr.bf16.mxu0 0
      %6553 = vmatmul.mubr.bf16.gmra.mrb[0].mxu0 %v6479
      %v6554 = vpop.f32.mrb[0].mxu0
      %v6555 = vadd.f32 0.0, %v6554
      %v6556 = vpop.f32.mrb[0].mxu0
      %v6557 = vpop.f32.mrb[0].mxu0
      %v6558 = vadd.f32 0.0, %v6557
      %v6559 = vpop.f32.mrb[0].mxu0
      %6560 = vmatprep.mubr.bf16.mxu0 0
      %6561 = vmatmul.mubr.bf16.gmra.mrb[0].mxu0 %v6481
      %v6562 = vpop.f32.mrb[0].mxu0
      %v6563 = vadd.f32 0.0, %v6562
      %v6564 = vpop.f32.mrb[0].mxu0
      %v6565 = vpop.f32.mrb[0].mxu0
      %v6566 = vadd.f32 0.0, %v6565
      %v6567 = vpop.f32.mrb[0].mxu0
      %6568 = vmatprep.mubr.bf16.mxu0 0
      %6569 = vmatmul.mubr.bf16.gmra.mrb[0].mxu0 %v6483
      %v6570 = vpop.f32.mrb[0].mxu0
      %v6571 = vadd.f32 0.0, %v6570
      %v6572 = vpop.f32.mrb[0].mxu0
      %v6573 = vpop.f32.mrb[0].mxu0
      %v6574 = vadd.f32 0.0, %v6573
      %v6575 = vpop.f32.mrb[0].mxu0
      %6576 = vmatprep.mubr.bf16.mxu0 0
      %6577 = vmatmul.mubr.bf16.gmra.mrb[0].mxu0 %v6485
      %v6578 = vpop.f32.mrb[0].mxu0
      %v6579 = vadd.f32 0.0, %v6578
      %v6580 = vpop.f32.mrb[0].mxu0
      %v6581 = vpop.f32.mrb[0].mxu0
      %v6582 = vadd.f32 0.0, %v6581
      %v6583 = vpop.f32.mrb[0].mxu0
      %6584 = vmatprep.mubr.bf16.mxu0 0
      %6585 = vmatmul.mubr.bf16.gmra.mrb[0].mxu0 %v6487
      %v6586 = vpop.f32.mrb[0].mxu0
      %v6587 = vadd.f32 0.0, %v6586
      %v6588 = vpop.f32.mrb[0].mxu0
      %v6589 = vpop.f32.mrb[0].mxu0
      %v6590 = vadd.f32 0.0, %v6589
      %v6591 = vpop.f32.mrb[0].mxu0
      %6592 = vmatprep.mubr.bf16.mxu0 0
      %6593 = vmatmul.mubr.bf16.gmra.mrb[0].mxu0 %v6489
      %v6594 = vpop.f32.mrb[0].mxu0
      %v6595 = vadd.f32 0.0, %v6594
      %v6596 = vpop.f32.mrb[0].mxu0
      %v6597 = vpop.f32.mrb[0].mxu0
      %v6598 = vadd.f32 0.0, %v6597
      %v6599 = vpop.f32.mrb[0].mxu0
      %6600 = vmatprep.mubr.bf16.mxu0 0
      %6601 = vmatmul.mubr.bf16.gmra.mrb[0].mxu0 %v6491
      %v6602 = vpop.f32.mrb[0].mxu0
      %v6603 = vadd.f32 0.0, %v6602
      %v6604 = vpop.f32.mrb[0].mxu0
      %v6605 = vpop.f32.mrb[0].mxu0
      %v6606 = vadd.f32 0.0, %v6605
      %v6607 = vpop.f32.mrb[0].mxu0
      %6608 = vmatprep.mubr.bf16.mxu0 0
      %6609 = vmatmul.mubr.bf16.gmra.mrb[0].mxu0 %v6493
      %v6610 = vpop.f32.mrb[0].mxu0
      %v6611 = vadd.f32 0.0, %v6610
      %v6612 = vpop.f32.mrb[0].mxu0
      %v6613 = vpop.f32.mrb[0].mxu0
      %v6614 = vadd.f32 0.0, %v6613
      %v6615 = vpop.f32.mrb[0].mxu0
      %6616 = vmatprep.mubr.bf16.mxu0 0
      %6617 = vmatmul.mubr.bf16.gmra.mrb[0].mxu0 %v6495
      %v6618 = vpop.f32.mrb[0].mxu0
      %v6619 = vadd.f32 0.0, %v6618
      %v6620 = vpop.f32.mrb[0].mxu0
      %v6621 = vpop.f32.mrb[0].mxu0
      %v6622 = vadd.f32 0.0, %v6621
      %v6623 = vpop.f32.mrb[0].mxu0
      %6624 = vmatprep.mubr.bf16.mxu0 0
      %6625 = vmatmul.mubr.bf16.gmra.mrb[0].mxu0 %v6497
      %v6626 = vpop.f32.mrb[0].mxu0
      %v6627 = vadd.f32 0.0, %v6626
      %v6628 = vpop.f32.mrb[0].mxu0
      %v6629 = vpop.f32.mrb[0].mxu0
      %v6630 = vadd.f32 0.0, %v6629
      %v6631 = vpop.f32.mrb[0].mxu0
      %6632 = vmatprep.mubr.bf16.mxu0 0
      %6633 = vmatmul.mubr.bf16.gmra.mrb[0].mxu0 %v6499
      %v6634 = vpop.f32.mrb[0].mxu0
      %v6635 = vadd.f32 0.0, %v6634
      %v6636 = vpop.f32.mrb[0].mxu0
      %v6637 = vpop.f32.mrb[0].mxu0
      %v6638 = vadd.f32 0.0, %v6637
      %v6639 = vpop.f32.mrb[0].mxu0
      %6640 = vmatprep.mubr.bf16.mxu0 0
      %6641 = vmatmul.mubr.bf16.gmra.mrb[0].mxu0 %v6501
      %v6642 = vpop.f32.mrb[0].mxu0
      %v6643 = vadd.f32 0.0, %v6642
      %v6644 = vpop.f32.mrb[0].mxu0
      %v6645 = vpop.f32.mrb[0].mxu0
      %v6646 = vadd.f32 0.0, %v6645
      %v6647 = vpop.f32.mrb[0].mxu0
      %6648 = vmatprep.mubr.bf16.mxu0 0
      %6649 = vmatmul.mubr.bf16.gmra.mrb[0].mxu0 %v6503
      %v6650 = vpop.f32.mrb[0].mxu0
      %v6651 = vadd.f32 0.0, %v6650
      %v6652 = vpop.f32.mrb[0].mxu0
      %v6653 = vpop.f32.mrb[0].mxu0
      %v6654 = vadd.f32 0.0, %v6653
      %v6655 = vpop.f32.mrb[0].mxu0
      %6656 = vmatprep.mubr.bf16.mxu0 0
      %6657 = vmatmul.mubr.bf16.gmra.mrb[0].mxu0 %v6505
      %v6658 = vpop.f32.mrb[0].mxu0
      %v6659 = vadd.f32 0.0, %v6658
      %v6660 = vpop.f32.mrb[0].mxu0
      %v6661 = vpop.f32.mrb[0].mxu0
      %v6662 = vadd.f32 0.0, %v6661
      %v6663 = vpop.f32.mrb[0].mxu0
      %6664 = vmatprep.mubr.bf16.mxu0 0
      %6665 = vmatmul.mubr.bf16.gmra.mrb[0].mxu0 %v6507
      %v6666 = vpop.f32.mrb[0].mxu0
      %v6667 = vadd.f32 0.0, %v6666
      %v6668 = vpop.f32.mrb[0].mxu0
      %v6669 = vpop.f32.mrb[0].mxu0
      %v6670 = vadd.f32 0.0, %v6669
      %v6671 = vpop.f32.mrb[0].mxu0
      %6672 = vdwg.mxu0
      %v6673 = vadd.f32 %v5799, %v6547
      %v6674 = vadd.f32 %v5802, %v6550
      %v6675 = vadd.f32 %v5807, %v6555
      %v6676 = vadd.f32 %v5810, %v6558
      %v6677 = vadd.f32 %v5815, %v6563
      %v6678 = vadd.f32 %v5818, %v6566
      %v6679 = vadd.f32 %v5823, %v6571
      %v6680 = vadd.f32 %v5826, %v6574
      %v6681 = vadd.f32 %v5831, %v6579
      %v6682 = vadd.f32 %v5834, %v6582
      %v6683 = vadd.f32 %v5839, %v6587
      %v6684 = vadd.f32 %v5842, %v6590
      %v6685 = vadd.f32 %v5847, %v6595
      %v6686 = vadd.f32 %v5850, %v6598
      %v6687 = vadd.f32 %v5855, %v6603
      %v6688 = vadd.f32 %v5858, %v6606
      %v6689 = vadd.f32 %v5863, %v6611
      %v6690 = vadd.f32 %v5866, %v6614
      %v6691 = vadd.f32 %v5871, %v6619
      %v6692 = vadd.f32 %v5874, %v6622
      %v6693 = vadd.f32 %v5879, %v6627
      %v6694 = vadd.f32 %v5882, %v6630
      %v6695 = vadd.f32 %v5887, %v6635
      %v6696 = vadd.f32 %v5890, %v6638
      %v6697 = vadd.f32 %v5895, %v6643
      %v6698 = vadd.f32 %v5898, %v6646
      %v6699 = vadd.f32 %v5903, %v6651
      %v6700 = vadd.f32 %v5906, %v6654
      %v6701 = vadd.f32 %v5911, %v6659
      %v6702 = vadd.f32 %v5914, %v6662
      %v6703 = vadd.f32 %v5919, %v6667
      %v6704 = vadd.f32 %v5922, %v6670
      %v6705 = vsel %vm1528, %v6673, 0.0
      %v6706 = vsel %vm1528, %v6674, 0.0
      %v6707 = vadd.f32 %v6705, %v6706
      %v6708 = vsel %vm1528, %v6675, 0.0
      %v6709 = vadd.f32 %v6707, %v6708
      %v6710 = vsel %vm1528, %v6676, 0.0
      %v6711 = vadd.f32 %v6709, %v6710
      %v6712 = vsel %vm1528, %v6677, 0.0
      %v6713 = vadd.f32 %v6711, %v6712
      %v6714 = vsel %vm1528, %v6678, 0.0
      %v6715 = vadd.f32 %v6713, %v6714
      %v6716 = vsel %vm1528, %v6679, 0.0
      %v6717 = vadd.f32 %v6715, %v6716
      %v6718 = vsel %vm1528, %v6680, 0.0
      %v6719 = vadd.f32 %v6717, %v6718
      %v6720 = vsel %vm1528, %v6681, 0.0
      %v6721 = vadd.f32 %v6719, %v6720
      %v6722 = vsel %vm1528, %v6682, 0.0
      %v6723 = vadd.f32 %v6721, %v6722
      %v6724 = vsel %vm1528, %v6683, 0.0
      %v6725 = vadd.f32 %v6723, %v6724
      %v6726 = vsel %vm1528, %v6684, 0.0
      %v6727 = vadd.f32 %v6725, %v6726
      %v6728 = vsel %vm1528, %v6685, 0.0
      %v6729 = vadd.f32 %v6727, %v6728
      %v6730 = vsel %vm1528, %v6686, 0.0
      %v6731 = vadd.f32 %v6729, %v6730
      %v6732 = vsel %vm1528, %v6687, 0.0
      %v6733 = vadd.f32 %v6731, %v6732
      %v6734 = vsel %vm1528, %v6688, 0.0
      %v6735 = vadd.f32 %v6733, %v6734
      %v6736 = vsel %vm1528, %v6689, 0.0
      %v6737 = vadd.f32 %v6735, %v6736
      %v6738 = vsel %vm1528, %v6690, 0.0
      %v6739 = vadd.f32 %v6737, %v6738
      %v6740 = vsel %vm1528, %v6691, 0.0
      %v6741 = vadd.f32 %v6739, %v6740
      %v6742 = vsel %vm1528, %v6692, 0.0
      %v6743 = vadd.f32 %v6741, %v6742
      %v6744 = vsel %vm1528, %v6693, 0.0
      %v6745 = vadd.f32 %v6743, %v6744
      %v6746 = vsel %vm1528, %v6694, 0.0
      %v6747 = vadd.f32 %v6745, %v6746
      %v6748 = vsel %vm1528, %v6695, 0.0
      %v6749 = vadd.f32 %v6747, %v6748
      %v6750 = vsel %vm1528, %v6696, 0.0
      %v6751 = vadd.f32 %v6749, %v6750
      %v6752 = vsel %vm1528, %v6697, 0.0
      %v6753 = vadd.f32 %v6751, %v6752
      %v6754 = vsel %vm1528, %v6698, 0.0
      %v6755 = vadd.f32 %v6753, %v6754
      %v6756 = vsel %vm1528, %v6699, 0.0
      %v6757 = vadd.f32 %v6755, %v6756
      %v6758 = vsel %vm1528, %v6700, 0.0
      %v6759 = vadd.f32 %v6757, %v6758
      %v6760 = vsel %vm1528, %v6701, 0.0
      %v6761 = vadd.f32 %v6759, %v6760
      %v6762 = vsel %vm1528, %v6702, 0.0
      %v6763 = vadd.f32 %v6761, %v6762
      %v6764 = vsel %vm1528, %v6703, 0.0
      %v6765 = vadd.f32 %v6763, %v6764
      %v6766 = vsel %vm1528, %v6704, 0.0
      %v6767 = vadd.f32 %v6765, %v6766
      %v6768 = vrot.slane %v6767, 4
      %v6769 = vadd.f32 %v6767, %v6768
      %v6770 = vrot.slane %v6769, 2
      %v6771 = vadd.f32 %v6769, %v6770
      %v6772 = vrot.slane %v6771, 1
      %v6773 = vadd.f32 %v6771, %v6772
      %v6774 = vmul.f32 %v6773, 0.00390625
      %v6775 = vmul.f32 %v6673, %v6673
      %v6776 = vmul.f32 %v6674, %v6674
      %v6777 = vmul.f32 %v6675, %v6675
      %v6778 = vmul.f32 %v6676, %v6676
      %v6779 = vmul.f32 %v6677, %v6677
      %v6780 = vmul.f32 %v6678, %v6678
      %v6781 = vmul.f32 %v6679, %v6679
      %v6782 = vmul.f32 %v6680, %v6680
      %v6783 = vmul.f32 %v6681, %v6681
      %v6784 = vmul.f32 %v6682, %v6682
      %v6785 = vmul.f32 %v6683, %v6683
      %v6786 = vmul.f32 %v6684, %v6684
      %v6787 = vmul.f32 %v6685, %v6685
      %v6788 = vmul.f32 %v6686, %v6686
      %v6789 = vmul.f32 %v6687, %v6687
      %v6790 = vmul.f32 %v6688, %v6688
      %v6791 = vmul.f32 %v6689, %v6689
      %v6792 = vmul.f32 %v6690, %v6690
      %v6793 = vmul.f32 %v6691, %v6691
      %v6794 = vmul.f32 %v6692, %v6692
      %v6795 = vmul.f32 %v6693, %v6693
      %v6796 = vmul.f32 %v6694, %v6694
      %v6797 = vmul.f32 %v6695, %v6695
      %v6798 = vmul.f32 %v6696, %v6696
      %v6799 = vmul.f32 %v6697, %v6697
      %v6800 = vmul.f32 %v6698, %v6698
      %v6801 = vmul.f32 %v6699, %v6699
      %v6802 = vmul.f32 %v6700, %v6700
      %v6803 = vmul.f32 %v6701, %v6701
      %v6804 = vmul.f32 %v6702, %v6702
      %v6805 = vmul.f32 %v6703, %v6703
      %v6806 = vmul.f32 %v6704, %v6704
      %v6807 = vsel %vm1528, %v6775, 0.0
      %v6808 = vsel %vm1528, %v6776, 0.0
      %v6809 = vadd.f32 %v6807, %v6808
      %v6810 = vsel %vm1528, %v6777, 0.0
      %v6811 = vadd.f32 %v6809, %v6810
      %v6812 = vsel %vm1528, %v6778, 0.0
      %v6813 = vadd.f32 %v6811, %v6812
      %v6814 = vsel %vm1528, %v6779, 0.0
      %v6815 = vadd.f32 %v6813, %v6814
      %v6816 = vsel %vm1528, %v6780, 0.0
      %v6817 = vadd.f32 %v6815, %v6816
      %v6818 = vsel %vm1528, %v6781, 0.0
      %v6819 = vadd.f32 %v6817, %v6818
      %v6820 = vsel %vm1528, %v6782, 0.0
      %v6821 = vadd.f32 %v6819, %v6820
      %v6822 = vsel %vm1528, %v6783, 0.0
      %v6823 = vadd.f32 %v6821, %v6822
      %v6824 = vsel %vm1528, %v6784, 0.0
      %v6825 = vadd.f32 %v6823, %v6824
      %v6826 = vsel %vm1528, %v6785, 0.0
      %v6827 = vadd.f32 %v6825, %v6826
      %v6828 = vsel %vm1528, %v6786, 0.0
      %v6829 = vadd.f32 %v6827, %v6828
      %v6830 = vsel %vm1528, %v6787, 0.0
      %v6831 = vadd.f32 %v6829, %v6830
      %v6832 = vsel %vm1528, %v6788, 0.0
      %v6833 = vadd.f32 %v6831, %v6832
      %v6834 = vsel %vm1528, %v6789, 0.0
      %v6835 = vadd.f32 %v6833, %v6834
      %v6836 = vsel %vm1528, %v6790, 0.0
      %v6837 = vadd.f32 %v6835, %v6836
      %v6838 = vsel %vm1528, %v6791, 0.0
      %v6839 = vadd.f32 %v6837, %v6838
      %v6840 = vsel %vm1528, %v6792, 0.0
      %v6841 = vadd.f32 %v6839, %v6840
      %v6842 = vsel %vm1528, %v6793, 0.0
      %v6843 = vadd.f32 %v6841, %v6842
      %v6844 = vsel %vm1528, %v6794, 0.0
      %v6845 = vadd.f32 %v6843, %v6844
      %v6846 = vsel %vm1528, %v6795, 0.0
      %v6847 = vadd.f32 %v6845, %v6846
      %v6848 = vsel %vm1528, %v6796, 0.0
      %v6849 = vadd.f32 %v6847, %v6848
      %v6850 = vsel %vm1528, %v6797, 0.0
      %v6851 = vadd.f32 %v6849, %v6850
      %v6852 = vsel %vm1528, %v6798, 0.0
      %v6853 = vadd.f32 %v6851, %v6852
      %v6854 = vsel %vm1528, %v6799, 0.0
      %v6855 = vadd.f32 %v6853, %v6854
      %v6856 = vsel %vm1528, %v6800, 0.0
      %v6857 = vadd.f32 %v6855, %v6856
      %v6858 = vsel %vm1528, %v6801, 0.0
      %v6859 = vadd.f32 %v6857, %v6858
      %v6860 = vsel %vm1528, %v6802, 0.0
      %v6861 = vadd.f32 %v6859, %v6860
      %v6862 = vsel %vm1528, %v6803, 0.0
      %v6863 = vadd.f32 %v6861, %v6862
      %v6864 = vsel %vm1528, %v6804, 0.0
      %v6865 = vadd.f32 %v6863, %v6864
      %v6866 = vsel %vm1528, %v6805, 0.0
      %v6867 = vadd.f32 %v6865, %v6866
      %v6868 = vsel %vm1528, %v6806, 0.0
      %v6869 = vadd.f32 %v6867, %v6868
      %v6870 = vrot.slane %v6869, 4
      %v6871 = vadd.f32 %v6869, %v6870
      %v6872 = vrot.slane %v6871, 2
      %v6873 = vadd.f32 %v6871, %v6872
      %v6874 = vrot.slane %v6873, 1
      %v6875 = vadd.f32 %v6873, %v6874
      %v6876 = vmul.f32 %v6875, 0.00390625
      %v6877 = vmul.f32 %v6774, %v6774
      %v6878 = vsub.f32 %v6876, %v6877
      %v6879 = vmax.f32 %v6878, 0.0
      %v6880 = vsub.f32 %v6673, %v6774
      %v6881 = vsub.f32 %v6674, %v6774
      %v6882 = vsub.f32 %v6675, %v6774
      %v6883 = vsub.f32 %v6676, %v6774
      %v6884 = vsub.f32 %v6677, %v6774
      %v6885 = vsub.f32 %v6678, %v6774
      %v6886 = vsub.f32 %v6679, %v6774
      %v6887 = vsub.f32 %v6680, %v6774
      %v6888 = vsub.f32 %v6681, %v6774
      %v6889 = vsub.f32 %v6682, %v6774
      %v6890 = vsub.f32 %v6683, %v6774
      %v6891 = vsub.f32 %v6684, %v6774
      %v6892 = vsub.f32 %v6685, %v6774
      %v6893 = vsub.f32 %v6686, %v6774
      %v6894 = vsub.f32 %v6687, %v6774
      %v6895 = vsub.f32 %v6688, %v6774
      %v6896 = vsub.f32 %v6689, %v6774
      %v6897 = vsub.f32 %v6690, %v6774
      %v6898 = vsub.f32 %v6691, %v6774
      %v6899 = vsub.f32 %v6692, %v6774
      %v6900 = vsub.f32 %v6693, %v6774
      %v6901 = vsub.f32 %v6694, %v6774
      %v6902 = vsub.f32 %v6695, %v6774
      %v6903 = vsub.f32 %v6696, %v6774
      %v6904 = vsub.f32 %v6697, %v6774
      %v6905 = vsub.f32 %v6698, %v6774
      %v6906 = vsub.f32 %v6699, %v6774
      %v6907 = vsub.f32 %v6700, %v6774
      %v6908 = vsub.f32 %v6701, %v6774
      %v6909 = vsub.f32 %v6702, %v6774
      %v6910 = vsub.f32 %v6703, %v6774
      %v6911 = vsub.f32 %v6704, %v6774
      %v6912 = vadd.f32 %v6879, 1e-05
      %v6913 = vrsqrt.pop %v6912
      %v6914 = vmul.f32 %v6880, %v6913
      %v6915 = vmul.f32 %v6881, %v6913
      %v6916 = vmul.f32 %v6882, %v6913
      %v6917 = vmul.f32 %v6883, %v6913
      %v6918 = vmul.f32 %v6884, %v6913
      %v6919 = vmul.f32 %v6885, %v6913
      %v6920 = vmul.f32 %v6886, %v6913
      %v6921 = vmul.f32 %v6887, %v6913
      %v6922 = vmul.f32 %v6888, %v6913
      %v6923 = vmul.f32 %v6889, %v6913
      %v6924 = vmul.f32 %v6890, %v6913
      %v6925 = vmul.f32 %v6891, %v6913
      %v6926 = vmul.f32 %v6892, %v6913
      %v6927 = vmul.f32 %v6893, %v6913
      %v6928 = vmul.f32 %v6894, %v6913
      %v6929 = vmul.f32 %v6895, %v6913
      %v6930 = vmul.f32 %v6896, %v6913
      %v6931 = vmul.f32 %v6897, %v6913
      %v6932 = vmul.f32 %v6898, %v6913
      %v6933 = vmul.f32 %v6899, %v6913
      %v6934 = vmul.f32 %v6900, %v6913
      %v6935 = vmul.f32 %v6901, %v6913
      %v6936 = vmul.f32 %v6902, %v6913
      %v6937 = vmul.f32 %v6903, %v6913
      %v6938 = vmul.f32 %v6904, %v6913
      %v6939 = vmul.f32 %v6905, %v6913
      %v6940 = vmul.f32 %v6906, %v6913
      %v6941 = vmul.f32 %v6907, %v6913
      %v6942 = vmul.f32 %v6908, %v6913
      %v6943 = vmul.f32 %v6909, %v6913
      %v6944 = vmul.f32 %v6910, %v6913
      %v6945 = vmul.f32 %v6911, %v6913
      %v6946 = vld [vmem:[%s165] sm:$0xff]
      %v6947 = vld [vmem:[%s165 + $0x8] sm:$0xff]
      %v6948 = vld [vmem:[%s165 + $0x10] sm:$0xff]
      %v6949 = vld [vmem:[%s165 + $0x18] sm:$0xff]
      %v6950 = vld [vmem:[%s165 + $0x20] sm:$0xff]
      %v6951 = vld [vmem:[%s165 + $0x28] sm:$0xff]
      %v6952 = vld [vmem:[%s165 + $0x30] sm:$0xff]
      %v6953 = vld [vmem:[%s165 + $0x38] sm:$0xff]
      %v6954 = vld [vmem:[%s165 + $0x40] sm:$0xff]
      %v6955 = vld [vmem:[%s165 + $0x48] sm:$0xff]
      %v6956 = vld [vmem:[%s165 + $0x50] sm:$0xff]
      %v6957 = vld [vmem:[%s165 + $0x58] sm:$0xff]
      %v6958 = vld [vmem:[%s165 + $0x60] sm:$0xff]
      %v6959 = vld [vmem:[%s165 + $0x68] sm:$0xff]
      %v6960 = vld [vmem:[%s165 + $0x70] sm:$0xff]
      %v6961 = vld [vmem:[%s165 + $0x78] sm:$0xff]
      %v6962 = vld [vmem:[%s165 + $0x80] sm:$0xff]
      %v6963 = vld [vmem:[%s165 + $0x88] sm:$0xff]
      %v6964 = vld [vmem:[%s165 + $0x90] sm:$0xff]
      %v6965 = vld [vmem:[%s165 + $0x98] sm:$0xff]
      %v6966 = vld [vmem:[%s165 + $0xa0] sm:$0xff]
      %v6967 = vld [vmem:[%s165 + $0xa8] sm:$0xff]
      %v6968 = vld [vmem:[%s165 + $0xb0] sm:$0xff]
      %v6969 = vld [vmem:[%s165 + $0xb8] sm:$0xff]
      %v6970 = vld [vmem:[%s165 + $0xc0] sm:$0xff]
      %v6971 = vld [vmem:[%s165 + $0xc8] sm:$0xff]
      %v6972 = vld [vmem:[%s165 + $0xd0] sm:$0xff]
      %v6973 = vld [vmem:[%s165 + $0xd8] sm:$0xff]
      %v6974 = vld [vmem:[%s165 + $0xe0] sm:$0xff]
      %v6975 = vld [vmem:[%s165 + $0xe8] sm:$0xff]
      %v6976 = vld [vmem:[%s165 + $0xf0] sm:$0xff]
      %v6977 = vld [vmem:[%s165 + $0xf8] sm:$0xff]
      %v6978 = vadd.f32 %v6914, %v6946
      %v6979 = vadd.f32 %v6915, %v6947
      %v6980 = vadd.f32 %v6916, %v6948
      %v6981 = vadd.f32 %v6917, %v6949
      %v6982 = vadd.f32 %v6918, %v6950
      %v6983 = vadd.f32 %v6919, %v6951
      %v6984 = vadd.f32 %v6920, %v6952
      %v6985 = vadd.f32 %v6921, %v6953
      %v6986 = vadd.f32 %v6922, %v6954
      %v6987 = vadd.f32 %v6923, %v6955
      %v6988 = vadd.f32 %v6924, %v6956
      %v6989 = vadd.f32 %v6925, %v6957
      %v6990 = vadd.f32 %v6926, %v6958
      %v6991 = vadd.f32 %v6927, %v6959
      %v6992 = vadd.f32 %v6928, %v6960
      %v6993 = vadd.f32 %v6929, %v6961
      %v6994 = vadd.f32 %v6930, %v6962
      %v6995 = vadd.f32 %v6931, %v6963
      %v6996 = vadd.f32 %v6932, %v6964
      %v6997 = vadd.f32 %v6933, %v6965
      %v6998 = vadd.f32 %v6934, %v6966
      %v6999 = vadd.f32 %v6935, %v6967
      %v7000 = vadd.f32 %v6936, %v6968
      %v7001 = vadd.f32 %v6937, %v6969
      %v7002 = vadd.f32 %v6938, %v6970
      %v7003 = vadd.f32 %v6939, %v6971
      %v7004 = vadd.f32 %v6940, %v6972
      %v7005 = vadd.f32 %v6941, %v6973
      %v7006 = vadd.f32 %v6942, %v6974
      %v7007 = vadd.f32 %v6943, %v6975
      %v7008 = vadd.f32 %v6944, %v6976
      %v7009 = vadd.f32 %v6945, %v6977
      %7010 = vst.msk [vmem:[%s170] sm:$0xff] %vm1528, %v6978
      %7011 = vst.msk [vmem:[%s170 + $0x8] sm:$0xff] %vm1528, %v6979
      %7012 = vst.msk [vmem:[%s170 + $0x10] sm:$0xff] %vm1528, %v6980
      %7013 = vst.msk [vmem:[%s170 + $0x18] sm:$0xff] %vm1528, %v6981
      %7014 = vst.msk [vmem:[%s170 + $0x20] sm:$0xff] %vm1528, %v6982
      %7015 = vst.msk [vmem:[%s170 + $0x28] sm:$0xff] %vm1528, %v6983
      %7016 = vst.msk [vmem:[%s170 + $0x30] sm:$0xff] %vm1528, %v6984
      %7017 = vst.msk [vmem:[%s170 + $0x38] sm:$0xff] %vm1528, %v6985
      %7018 = vst.msk [vmem:[%s170 + $0x40] sm:$0xff] %vm1528, %v6986
      %7019 = vst.msk [vmem:[%s170 + $0x48] sm:$0xff] %vm1528, %v6987
      %7020 = vst.msk [vmem:[%s170 + $0x50] sm:$0xff] %vm1528, %v6988
      %7021 = vst.msk [vmem:[%s170 + $0x58] sm:$0xff] %vm1528, %v6989
      %7022 = vst.msk [vmem:[%s170 + $0x60] sm:$0xff] %vm1528, %v6990
      %7023 = vst.msk [vmem:[%s170 + $0x68] sm:$0xff] %vm1528, %v6991
      %7024 = vst.msk [vmem:[%s170 + $0x70] sm:$0xff] %vm1528, %v6992
      %7025 = vst.msk [vmem:[%s170 + $0x78] sm:$0xff] %vm1528, %v6993
      %7026 = vst.msk [vmem:[%s170 + $0x80] sm:$0xff] %vm1528, %v6994
      %7027 = vst.msk [vmem:[%s170 + $0x88] sm:$0xff] %vm1528, %v6995
      %7028 = vst.msk [vmem:[%s170 + $0x90] sm:$0xff] %vm1528, %v6996
      %7029 = vst.msk [vmem:[%s170 + $0x98] sm:$0xff] %vm1528, %v6997
      %7030 = vst.msk [vmem:[%s170 + $0xa0] sm:$0xff] %vm1528, %v6998
      %7031 = vst.msk [vmem:[%s170 + $0xa8] sm:$0xff] %vm1528, %v6999
      %7032 = vst.msk [vmem:[%s170 + $0xb0] sm:$0xff] %vm1528, %v7000
      %7033 = vst.msk [vmem:[%s170 + $0xb8] sm:$0xff] %vm1528, %v7001
      %7034 = vst.msk [vmem:[%s170 + $0xc0] sm:$0xff] %vm1528, %v7002
      %7035 = vst.msk [vmem:[%s170 + $0xc8] sm:$0xff] %vm1528, %v7003
      %7036 = vst.msk [vmem:[%s170 + $0xd0] sm:$0xff] %vm1528, %v7004
      %7037 = vst.msk [vmem:[%s170 + $0xd8] sm:$0xff] %vm1528, %v7005
      %7038 = vst.msk [vmem:[%s170 + $0xe0] sm:$0xff] %vm1528, %v7006
      %7039 = vst.msk [vmem:[%s170 + $0xe8] sm:$0xff] %vm1528, %v7007
      %7040 = vst.msk [vmem:[%s170 + $0xf0] sm:$0xff] %vm1528, %v7008
      %7041 = vst.msk [vmem:[%s170 + $0xf8] sm:$0xff] %vm1528, %v7009
      %p7042 = scmp.lt.s32.totalorder %s14, 1
      %s7043 = scalar_select %p7042, %s14, 1
      %s7044 = smul.addr %s7043, 32
      %s7045 = smul.addr %s7044, 8
      %s7046 = scalar_lea.vmem %s3, %s7045
      // Predicated region
      $region33: #{tpu_custom_call.1} parent=31 // pred_check
        %p7047 = pneg %p100
      $region34: #{tpu_custom_call.1} parent=31 // pred_check_branch
        %7049 = sbr.rel (%p7047) target = $region36
      $region35: #{tpu_custom_call.1} parent=31 // pred_region
        _
      $region36: #{tpu_custom_call.1} parent=31 // pred_fallthru
        _
    $region32: #{tpu_custom_call.1} parent=5 // pred_fallthru
      _
    %p7050 = scmp.le.s32.totalorder 2, %s9
    // Predicated region
    $region37: #{tpu_custom_call.1} parent=5 // pred_check
      %p7051 = pneg %p7050
    $region38: #{tpu_custom_call.1} parent=5 // pred_check_branch
      %7053 = sbr.rel (%p7051) target = $region40
    $region39: #{tpu_custom_call.1} parent=5 // pred_region
      %s7054 = ssub.s32 %s9, 2
      // Predicated region
      $region41: #{tpu_custom_call.1} parent=39 // pred_check
        %p7055 = pneg %p106
      $region42: #{tpu_custom_call.1} parent=39 // pred_check_branch
        %7057 = sbr.rel (%p7055) target = $region44
      $region43: #{tpu_custom_call.1} parent=39 // pred_region
        %p7058 = scmp.lt.s32.totalorder %s15, 1
        %s7059 = scalar_select %p7058, %s15, 1
        %s7060 = smul.addr %s7059, 32
        %s7061 = smul.addr %s7060, 8
        %s7062 = scalar_lea.vmem %s3, %s7061
      $region44: #{tpu_custom_call.1} parent=39 // pred_fallthru
        _
    $region40: #{tpu_custom_call.1} parent=5 // pred_fallthru
      _
  $region6: #{tpu_custom_call.1} parent=0 // loop_footer
    %s13 = sadd.s32 1, %s9
  $region7: #{tpu_custom_call.1} parent=0 // loop_footer_branch
    %8 = sbr.rel target = $region3
  $region8: #{tpu_custom_call.1} parent=0 // loop_exit
    _

</llo_original>
